<compile_context>
chip_gen: v6e
topology: v6e:2x2x1
jax: 0.10.0
libtpu: 0.0.40
codegen_flags: <defaults>
</compile_context>

<pallas_src>
import jax
import jax.numpy as jnp
from jax.experimental import pallas as pl
from jax.experimental.pallas import tpu as pltpu

# ---- model hyper-parameters (small, synthetic) ------------------------------
D_MODEL = 32
N_HEADS = 4
HEAD_DIM = D_MODEL // N_HEADS
D_FFN = 64
N_LAYERS = 2
VOCAB = 100
MAX_POS = 16
TYPE_VOCAB = 2
LN_EPS = 1e-12  # BERT LayerNorm eps


# ---- fused encoder kernel (one sequence per grid step, all layers inside) ----
def _encoder_kernel(x_emb_ref, mask_ref, embln_ref,
                    wqkv_ref, bqkv_ref, wo_ref, vecs_ref,
                    w1_ref, b1_ref, w2_ref,
                    o_ref):
    f32, bf16 = jnp.float32, jnp.bfloat16

    def layer_norm(y, g, b):
        mu = jnp.mean(y, axis=-1, keepdims=True)
        var = jnp.mean((y - mu) ** 2, axis=-1, keepdims=True)
        return (y - mu) * jax.lax.rsqrt(var + LN_EPS) * g + b

    # Additive key-padding bias built in-kernel from the (1, S) mask block:
    # 0 for valid keys, -1e9 for padding.  Broadcasts (1, S) -> (H, S_q, S_k).
    bias = (mask_ref[...] - 1.0) * 1e9                       # (1, S)

    # Embedding LayerNorm straight into a local value (no o_ref round trip).
    embln = embln_ref[...]                                   # (2, D): gamma, beta
    x = layer_norm(x_emb_ref[...].astype(f32),
                   embln[0:1, :], embln[1:2, :])             # (S, D)

    scale = 1.0 / float(HEAD_DIM) ** 0.5

    for l in range(N_LAYERS):
        wqkv = wqkv_ref[l, :, :, :]      # (H, D, 3*Dh) bf16, per-head fused QKV
        bqkv = bqkv_ref[l, :, :, :]      # (H, 1, 3*Dh) f32
        wo = wo_ref[l, :, :, :]          # (H, Dh, D)  bf16
        vecs = vecs_ref[l, :, :]         # (6, D) f32: bo, ln1_g, ln1_b, b2, ln2_g, ln2_b
        w1 = w1_ref[l, :, :]             # (D, F) bf16
        b1 = b1_ref[l, :, :]             # (1, F) f32
        w2 = w2_ref[l, :, :]             # (F, D) bf16

        # ---- head-batched self-attention (no per-head loop / lane extracts) --
        xb = x.astype(bf16)                                          # (S, D)
        xh = jnp.broadcast_to(xb[None], (N_HEADS,) + xb.shape)       # (H, S, D)
        qkv = jnp.einsum('hsd,hde->hse', xh, wqkv,
                         preferred_element_type=f32) + bqkv          # (H, S, 3Dh)
        q = qkv[..., 0 * HEAD_DIM:1 * HEAD_DIM].astype(bf16)         # (H, S, Dh)
        k = qkv[..., 1 * HEAD_DIM:2 * HEAD_DIM].astype(bf16)
        v = qkv[..., 2 * HEAD_DIM:3 * HEAD_DIM].astype(bf16)

        s = jnp.einsum('hqd,hkd->hqk', q, k,
                       preferred_element_type=f32) * scale + bias    # (H, S, S)
        m = jnp.max(s, axis=-1, keepdims=True)
        p = jnp.exp(s - m)
        p = p * pl.reciprocal(jnp.sum(p, axis=-1, keepdims=True), approx=True)
        ctx = jnp.einsum('hqk,hkd->hqd', p.astype(bf16), v,
                         preferred_element_type=f32)                 # (H, S, Dh)
        attn = jnp.sum(
            jnp.einsum('hqd,hdo->hqo', ctx.astype(bf16), wo,
                       preferred_element_type=f32),
            axis=0)                                                  # (S, D)
        x = layer_norm(attn + vecs[0:1, :] + x, vecs[1:2, :], vecs[2:3, :])

        # ---- feed-forward -----------------------------------------------------
        hdn = jnp.dot(x.astype(bf16), w1, preferred_element_type=f32) + b1
        # tanh-approx GELU (EUP tanh); see TODO about erf GELU above.
        hdn = 0.5 * hdn * (1.0 + jnp.tanh(0.7978845608028654 *
                                          (hdn + 0.044715 * hdn * hdn * hdn)))
        ffn = jnp.dot(hdn.astype(bf16), w2, preferred_element_type=f32)
        x = layer_norm(ffn + vecs[3:4, :] + x, vecs[4:5, :], vecs[5:6, :])

    o_ref[...] = x.astype(o_ref.dtype)


def encoder_stack(x_emb, key_mask, params):
    B, S, D = x_emb.shape
    L, H = params["wqkv"].shape[0], params["wqkv"].shape[1]
    Dh3 = params["wqkv"].shape[-1]
    Dh = params["wo"].shape[2]
    F = params["w1"].shape[-1]

    def const(shape):
        n = len(shape)
        return pl.BlockSpec(shape, lambda b, n=n: (0,) * n)

    return pl.pallas_call(
        _encoder_kernel,
        out_shape=jax.ShapeDtypeStruct((B, S, D), jnp.float32),
        grid=(B,),
        in_specs=[
            pl.BlockSpec((None, S, D), lambda b: (b, 0, 0)),   # x_emb  (per sequence)
            pl.BlockSpec((None, 1, S), lambda b: (b, 0, 0)),   # key mask (per sequence)
            const((2, D)),                                     # embedding LN gamma/beta
            const((L, H, D, Dh3)),                             # per-head fused QKV weights
            const((L, H, 1, Dh3)),                             # per-head fused QKV bias
            const((L, H, Dh, D)),                              # per-head output proj
            const((L, 6, D)),                                  # packed per-layer vectors
            const((L, D, F)),                                  # FFN w1
            const((L, 1, F)),                                  # FFN b1
            const((L, F, D)),                                  # FFN w2
        ],
        out_specs=pl.BlockSpec((None, S, D), lambda b: (b, 0, 0)),
        compiler_params=pltpu.CompilerParams(
            dimension_semantics=("parallel",)),
    )(x_emb, key_mask, params["emb_ln"],
      params["wqkv"], params["bqkv"], params["wo"], params["vecs"],
      params["w1"], params["b1"], params["w2"])


# ---- parameter construction (deterministic) ---------------------------------
def init_params(key):
    f32 = jnp.float32

    def dense(k, din, dout):
        return 0.02 * jax.random.normal(k, (din, dout), f32)

    def per_head_cols(w):  # (D, D) -> (H, D, Dh): w[:, h*Dh:(h+1)*Dh]
        return jnp.transpose(w.reshape(D_MODEL, N_HEADS, HEAD_DIM), (1, 0, 2))

    keys = jax.random.split(key, 3 + N_LAYERS)
    wqkv_l, wo_l, w1_l, w2_l = [], [], [], []
    for li in range(N_LAYERS):
        lk = jax.random.split(keys[3 + li], 6)
        wq = dense(lk[0], D_MODEL, D_MODEL)
        wk = dense(lk[1], D_MODEL, D_MODEL)
        wv = dense(lk[2], D_MODEL, D_MODEL)
        wqkv_l.append(jnp.concatenate(
            [per_head_cols(wq), per_head_cols(wk), per_head_cols(wv)],
            axis=-1))                                                  # (H, D, 3Dh)
        wo_l.append(dense(lk[3], D_MODEL, D_MODEL)
                    .reshape(N_HEADS, HEAD_DIM, D_MODEL))              # (H, Dh, D)
        w1_l.append(dense(lk[4], D_MODEL, D_FFN))
        w2_l.append(dense(lk[5], D_FFN, D_MODEL))

    # Packed per-layer epilogue vectors: [bo, ln1_g, ln1_b, b2, ln2_g, ln2_b]
    vec_rows = jnp.stack([
        jnp.zeros(D_MODEL, f32), jnp.ones(D_MODEL, f32), jnp.zeros(D_MODEL, f32),
        jnp.zeros(D_MODEL, f32), jnp.ones(D_MODEL, f32), jnp.zeros(D_MODEL, f32)])
    vecs = jnp.stack([vec_rows for _ in range(N_LAYERS)])              # (L, 6, D)

    return {
        "word_emb": 0.02 * jax.random.normal(keys[0], (VOCAB, D_MODEL), f32),
        "pos_emb": 0.02 * jax.random.normal(keys[1], (MAX_POS, D_MODEL), f32),
        "type_emb": 0.02 * jax.random.normal(keys[2], (TYPE_VOCAB, D_MODEL), f32),
        "emb_ln": jnp.stack([jnp.ones(D_MODEL, f32),
                             jnp.zeros(D_MODEL, f32)]),                # (2, D)
        # matmul operands stored bf16; biases / LN params stay f32
        "wqkv": jnp.stack(wqkv_l).astype(jnp.bfloat16),                # (L, H, D, 3Dh)
        "bqkv": jnp.zeros((N_LAYERS, N_HEADS, 1, 3 * HEAD_DIM), f32),  # (L, H, 1, 3Dh)
        "wo": jnp.stack(wo_l).astype(jnp.bfloat16),                    # (L, H, Dh, D)
        "vecs": vecs,                                                  # (L, 6, D)
        "w1": jnp.stack(w1_l).astype(jnp.bfloat16),                    # (L, D, F)
        "b1": jnp.zeros((N_LAYERS, 1, D_FFN), f32),                    # (L, 1, F)
        "w2": jnp.stack(w2_l).astype(jnp.bfloat16),                    # (L, F, D)
    }


# ---- forward pass (embedding gathers are JAX glue; everything else fused) ----
@jax.jit
def transformer_encoder_forward(params, input_ids, attention_mask, token_type_ids):
    B, S = input_ids.shape
    we = jnp.take(params["word_emb"], input_ids, axis=0)           # (B, S, D)
    pe = params["pos_emb"][:S][None, :, :]                         # (1, S, D)
    te = jnp.take(params["type_emb"], token_type_ids, axis=0)      # (B, S, D)
    x_emb = we + pe + te                                           # (B, S, D)

    key_mask = attention_mask.astype(jnp.float32)[:, None, :]      # (B, 1, S)
    return encoder_stack(x_emb, key_mask, params)                  # last hidden states


if __name__ == "__main__":
    key = jax.random.PRNGKey(0)
    pkey, ikey = jax.random.split(key)
    params = init_params(pkey)

    B, S = 2, 8
    input_ids = jax.random.randint(ikey, (B, S), 0, VOCAB, dtype=jnp.int32)
    # second sequence has 2 padding positions
    attention_mask = jnp.array(
        [[1, 1, 1, 1, 1, 1, 1, 1],
         [1, 1, 1, 1, 1, 1, 0, 0]], dtype=jnp.int32)
    token_type_ids = jnp.zeros((B, S), dtype=jnp.int32)

    out = transformer_encoder_forward(params, input_ids, attention_mask, token_type_ids)
    out = jax.block_until_ready(out)
    assert out.shape == (B, S, D_MODEL)
    assert jnp.all(jnp.isfinite(out))
    print("KERNEL_OK")
</pallas_src>

<mosaic_0001>
module attributes {stable_mosaic.version = 11 : i64} {
  func.func @_encoder_kernel(%arg0: i32, %arg1: memref<1x8x32xf32, #tpu.memory_space<vmem>>, %arg2: memref<1x1x8xf32, #tpu.memory_space<vmem>>, %arg3: memref<2x32xf32, #tpu.memory_space<vmem>>, %arg4: memref<2x4x32x24xbf16, #tpu.memory_space<vmem>>, %arg5: memref<2x4x1x24xf32, #tpu.memory_space<vmem>>, %arg6: memref<2x4x8x32xbf16, #tpu.memory_space<vmem>>, %arg7: memref<2x6x32xf32, #tpu.memory_space<vmem>>, %arg8: memref<2x32x64xbf16, #tpu.memory_space<vmem>>, %arg9: memref<2x1x64xf32, #tpu.memory_space<vmem>>, %arg10: memref<2x64x32xbf16, #tpu.memory_space<vmem>>, %arg11: memref<1x8x32xf32, #tpu.memory_space<vmem>>) attributes {dimension_semantics = [#tpu.dimension_semantics<parallel>], iteration_bounds = array<i64: 2>, scalar_prefetch = 0 : i64, scratch_operands = 0 : i64, tpu.core_type = #tpu.core_type<tc>, window_params = [{transform_indices = @transform_0, window_bounds = array<i64: 1, 8, 32>}, {transform_indices = @transform_1, window_bounds = array<i64: 1, 1, 8>}, {pipeline_mode = #tpu.pipeline_mode<synchronous>, transform_indices = @transform_2, window_bounds = array<i64: 2, 32>}, {pipeline_mode = #tpu.pipeline_mode<synchronous>, transform_indices = @transform_3, window_bounds = array<i64: 2, 4, 32, 24>}, {pipeline_mode = #tpu.pipeline_mode<synchronous>, transform_indices = @transform_4, window_bounds = array<i64: 2, 4, 1, 24>}, {pipeline_mode = #tpu.pipeline_mode<synchronous>, transform_indices = @transform_5, window_bounds = array<i64: 2, 4, 8, 32>}, {pipeline_mode = #tpu.pipeline_mode<synchronous>, transform_indices = @transform_6, window_bounds = array<i64: 2, 6, 32>}, {pipeline_mode = #tpu.pipeline_mode<synchronous>, transform_indices = @transform_7, window_bounds = array<i64: 2, 32, 64>}, {pipeline_mode = #tpu.pipeline_mode<synchronous>, transform_indices = @transform_8, window_bounds = array<i64: 2, 1, 64>}, {pipeline_mode = #tpu.pipeline_mode<synchronous>, transform_indices = @transform_9, window_bounds = array<i64: 2, 64, 32>}, {transform_indices = @transform_10, window_bounds = array<i64: 1, 8, 32>}]} {
    %c0 = arith.constant 0 : index
    %c0_0 = arith.constant 0 : index
    %c0_1 = arith.constant 0 : index
    %0 = vector.load %arg2[%c0, %c0_0, %c0_1] : memref<1x1x8xf32, #tpu.memory_space<vmem>>, vector<1x1x8xf32>
    %1 = vector.shape_cast %0 : vector<1x1x8xf32> to vector<1x8xf32>
    %cst = arith.constant 1.000000e+00 : f32
    %2 = vector.broadcast %cst : f32 to vector<1x8xf32>
    %3 = arith.subf %1, %2 : vector<1x8xf32>
    %cst_2 = arith.constant 1.000000e+09 : f32
    %4 = vector.broadcast %cst_2 : f32 to vector<1x8xf32>
    %5 = arith.mulf %3, %4 : vector<1x8xf32>
    %c0_3 = arith.constant 0 : index
    %c0_4 = arith.constant 0 : index
    %6 = vector.load %arg3[%c0_3, %c0_4] : memref<2x32xf32, #tpu.memory_space<vmem>>, vector<2x32xf32>
    %c0_5 = arith.constant 0 : index
    %c0_6 = arith.constant 0 : index
    %c0_7 = arith.constant 0 : index
    %7 = vector.load %arg1[%c0_5, %c0_6, %c0_7] : memref<1x8x32xf32, #tpu.memory_space<vmem>>, vector<1x8x32xf32>
    %8 = vector.shape_cast %7 : vector<1x8x32xf32> to vector<8x32xf32>
    %9 = vector.extract_strided_slice %6 {offsets = [0, 0], sizes = [1, 32], strides = [1, 1]} : vector<2x32xf32> to vector<1x32xf32>
    %10 = vector.extract_strided_slice %6 {offsets = [1, 0], sizes = [1, 32], strides = [1, 1]} : vector<2x32xf32> to vector<1x32xf32>
    %cst_8 = arith.constant dense<0.000000e+00> : vector<8xf32>
    %11 = vector.multi_reduction <add>, %8, %cst_8 [1] : vector<8x32xf32> to vector<8xf32>
    %12 = vector.shape_cast %11 : vector<8xf32> to vector<8x1xf32>
    %cst_9 = arith.constant 3.200000e+01 : f32
    %13 = vector.broadcast %cst_9 : f32 to vector<8x1xf32>
    %14 = arith.divf %12, %13 : vector<8x1xf32>
    %15 = vector.broadcast %14 : vector<8x1xf32> to vector<8x32xf32>
    %16 = arith.subf %8, %15 : vector<8x32xf32>
    %17 = arith.mulf %16, %16 : vector<8x32xf32>
    %cst_10 = arith.constant dense<0.000000e+00> : vector<8xf32>
    %18 = vector.multi_reduction <add>, %17, %cst_10 [1] : vector<8x32xf32> to vector<8xf32>
    %19 = vector.shape_cast %18 : vector<8xf32> to vector<8x1xf32>
    %cst_11 = arith.constant 3.200000e+01 : f32
    %20 = vector.broadcast %cst_11 : f32 to vector<8x1xf32>
    %21 = arith.divf %19, %20 : vector<8x1xf32>
    %22 = vector.broadcast %14 : vector<8x1xf32> to vector<8x32xf32>
    %23 = arith.subf %8, %22 : vector<8x32xf32>
    %cst_12 = arith.constant 9.99999996E-13 : f32
    %24 = vector.broadcast %cst_12 : f32 to vector<8x1xf32>
    %25 = arith.addf %21, %24 : vector<8x1xf32>
    %26 = math.rsqrt %25 : vector<8x1xf32>
    %27 = vector.broadcast %26 : vector<8x1xf32> to vector<8x32xf32>
    %28 = arith.mulf %23, %27 : vector<8x32xf32>
    %29 = vector.broadcast %9 : vector<1x32xf32> to vector<8x32xf32>
    %30 = arith.mulf %28, %29 : vector<8x32xf32>
    %31 = vector.broadcast %10 : vector<1x32xf32> to vector<8x32xf32>
    %32 = arith.addf %30, %31 : vector<8x32xf32>
    %c0_13 = arith.constant 0 : index
    %c0_14 = arith.constant 0 : index
    %c0_15 = arith.constant 0 : index
    %c0_16 = arith.constant 0 : index
    %33 = vector.load %arg4[%c0_13, %c0_14, %c0_15, %c0_16] : memref<2x4x32x24xbf16, #tpu.memory_space<vmem>>, vector<1x4x32x24xbf16>
    %34 = vector.shape_cast %33 : vector<1x4x32x24xbf16> to vector<4x32x24xbf16>
    %c0_17 = arith.constant 0 : index
    %c0_18 = arith.constant 0 : index
    %c0_19 = arith.constant 0 : index
    %c0_20 = arith.constant 0 : index
    %35 = vector.load %arg5[%c0_17, %c0_18, %c0_19, %c0_20] : memref<2x4x1x24xf32, #tpu.memory_space<vmem>>, vector<1x4x1x24xf32>
    %36 = vector.shape_cast %35 : vector<1x4x1x24xf32> to vector<4x1x24xf32>
    %c0_21 = arith.constant 0 : index
    %c0_22 = arith.constant 0 : index
    %c0_23 = arith.constant 0 : index
    %c0_24 = arith.constant 0 : index
    %37 = vector.load %arg6[%c0_21, %c0_22, %c0_23, %c0_24] : memref<2x4x8x32xbf16, #tpu.memory_space<vmem>>, vector<1x4x8x32xbf16>
    %38 = vector.shape_cast %37 : vector<1x4x8x32xbf16> to vector<4x8x32xbf16>
    %c0_25 = arith.constant 0 : index
    %c0_26 = arith.constant 0 : index
    %c0_27 = arith.constant 0 : index
    %39 = vector.load %arg7[%c0_25, %c0_26, %c0_27] : memref<2x6x32xf32, #tpu.memory_space<vmem>>, vector<1x6x32xf32>
    %40 = vector.shape_cast %39 : vector<1x6x32xf32> to vector<6x32xf32>
    %c0_28 = arith.constant 0 : index
    %c0_29 = arith.constant 0 : index
    %c0_30 = arith.constant 0 : index
    %41 = vector.load %arg8[%c0_28, %c0_29, %c0_30] : memref<2x32x64xbf16, #tpu.memory_space<vmem>>, vector<1x32x64xbf16>
    %42 = vector.shape_cast %41 : vector<1x32x64xbf16> to vector<32x64xbf16>
    %c0_31 = arith.constant 0 : index
    %c0_32 = arith.constant 0 : index
    %c0_33 = arith.constant 0 : index
    %43 = vector.load %arg9[%c0_31, %c0_32, %c0_33] : memref<2x1x64xf32, #tpu.memory_space<vmem>>, vector<1x1x64xf32>
    %44 = vector.shape_cast %43 : vector<1x1x64xf32> to vector<1x64xf32>
    %c0_34 = arith.constant 0 : index
    %c0_35 = arith.constant 0 : index
    %c0_36 = arith.constant 0 : index
    %45 = vector.load %arg10[%c0_34, %c0_35, %c0_36] : memref<2x64x32xbf16, #tpu.memory_space<vmem>>, vector<1x64x32xbf16>
    %46 = vector.shape_cast %45 : vector<1x64x32xbf16> to vector<64x32xbf16>
    %47 = arith.truncf %32 : vector<8x32xf32> to vector<8x32xbf16>
    %48 = vector.shape_cast %47 : vector<8x32xbf16> to vector<1x8x32xbf16>
    %49 = vector.shape_cast %48 : vector<1x8x32xbf16> to vector<1x8x32xbf16>
    %50 = vector.broadcast %49 : vector<1x8x32xbf16> to vector<4x8x32xbf16>
    "tpu.trace_start"() <{level = 10 : i32, message = "hsd,hde->hse"}> : () -> ()
    %cst_37 = arith.constant dense<0.000000e+00> : vector<4x8x24xf32>
    %51 = tpu.matmul %50, %34, %cst_37 {dimension_numbers = #tpu.dot_dimension_numbers<[2], [1], [1], [2], [0, 0, 0, 1, 1, 2], [0], [0]>} : vector<4x8x32xbf16>, vector<4x32x24xbf16>, vector<4x8x24xf32> -> vector<4x8x24xf32>
    "tpu.trace_stop"() : () -> ()
    %52 = vector.broadcast %36 : vector<4x1x24xf32> to vector<4x8x24xf32>
    %53 = arith.addf %51, %52 : vector<4x8x24xf32>
    %54 = vector.extract_strided_slice %53 {offsets = [0, 0, 0], sizes = [4, 8, 8], strides = [1, 1, 1]} : vector<4x8x24xf32> to vector<4x8x8xf32>
    %55 = arith.truncf %54 : vector<4x8x8xf32> to vector<4x8x8xbf16>
    %56 = vector.extract_strided_slice %53 {offsets = [0, 0, 8], sizes = [4, 8, 8], strides = [1, 1, 1]} : vector<4x8x24xf32> to vector<4x8x8xf32>
    %57 = arith.truncf %56 : vector<4x8x8xf32> to vector<4x8x8xbf16>
    %58 = vector.extract_strided_slice %53 {offsets = [0, 0, 16], sizes = [4, 8, 8], strides = [1, 1, 1]} : vector<4x8x24xf32> to vector<4x8x8xf32>
    %59 = arith.truncf %58 : vector<4x8x8xf32> to vector<4x8x8xbf16>
    "tpu.trace_start"() <{level = 10 : i32, message = "hqd,hkd->hqk"}> : () -> ()
    %cst_38 = arith.constant dense<0.000000e+00> : vector<4x8x8xf32>
    %60 = tpu.matmul %55, %57, %cst_38 {dimension_numbers = #tpu.dot_dimension_numbers<[2], [2], [1], [1], [0, 0, 0, 1, 1, 1], [0], [0]>} : vector<4x8x8xbf16>, vector<4x8x8xbf16>, vector<4x8x8xf32> -> vector<4x8x8xf32>
    "tpu.trace_stop"() : () -> ()
    %cst_39 = arith.constant 0.353553385 : f32
    %61 = vector.broadcast %cst_39 : f32 to vector<4x8x8xf32>
    %62 = arith.mulf %60, %61 : vector<4x8x8xf32>
    %63 = vector.shape_cast %5 : vector<1x8xf32> to vector<1x1x8xf32>
    %64 = vector.broadcast %63 : vector<1x1x8xf32> to vector<4x8x8xf32>
    %65 = arith.addf %62, %64 : vector<4x8x8xf32>
    %cst_40 = arith.constant dense<0xFF800000> : vector<4x8xf32>
    %66 = vector.multi_reduction <maximumf>, %65, %cst_40 [2] : vector<4x8x8xf32> to vector<4x8xf32>
    %67 = vector.shape_cast %66 : vector<4x8xf32> to vector<4x8x1xf32>
    %68 = vector.broadcast %67 : vector<4x8x1xf32> to vector<4x8x8xf32>
    %69 = arith.subf %65, %68 : vector<4x8x8xf32>
    %70 = math.exp %69 : vector<4x8x8xf32>
    %cst_41 = arith.constant dense<0.000000e+00> : vector<4x8xf32>
    %71 = vector.multi_reduction <add>, %70, %cst_41 [2] : vector<4x8x8xf32> to vector<4x8xf32>
    %72 = vector.shape_cast %71 : vector<4x8xf32> to vector<4x8x1xf32>
    %73 = tpu.reciprocal %72 {approx = true} : vector<4x8x1xf32> -> vector<4x8x1xf32>
    %74 = vector.broadcast %73 : vector<4x8x1xf32> to vector<4x8x8xf32>
    %75 = arith.mulf %70, %74 : vector<4x8x8xf32>
    %76 = arith.truncf %75 : vector<4x8x8xf32> to vector<4x8x8xbf16>
    "tpu.trace_start"() <{level = 10 : i32, message = "hqk,hkd->hqd"}> : () -> ()
    %cst_42 = arith.constant dense<0.000000e+00> : vector<4x8x8xf32>
    %77 = tpu.matmul %76, %59, %cst_42 {dimension_numbers = #tpu.dot_dimension_numbers<[2], [1], [1], [2], [0, 0, 0, 1, 1, 2], [0], [0]>} : vector<4x8x8xbf16>, vector<4x8x8xbf16>, vector<4x8x8xf32> -> vector<4x8x8xf32>
    "tpu.trace_stop"() : () -> ()
    %78 = arith.truncf %77 : vector<4x8x8xf32> to vector<4x8x8xbf16>
    "tpu.trace_start"() <{level = 10 : i32, message = "hqd,hdo->hqo"}> : () -> ()
    %cst_43 = arith.constant dense<0.000000e+00> : vector<4x8x32xf32>
    %79 = tpu.matmul %78, %38, %cst_43 {dimension_numbers = #tpu.dot_dimension_numbers<[2], [1], [1], [2], [0, 0, 0, 1, 1, 2], [0], [0]>} : vector<4x8x8xbf16>, vector<4x8x32xbf16>, vector<4x8x32xf32> -> vector<4x8x32xf32>
    "tpu.trace_stop"() : () -> ()
    %cst_44 = arith.constant dense<0.000000e+00> : vector<8x32xf32>
    %80 = vector.multi_reduction <add>, %79, %cst_44 [0] : vector<4x8x32xf32> to vector<8x32xf32>
    %81 = vector.extract_strided_slice %40 {offsets = [0, 0], sizes = [1, 32], strides = [1, 1]} : vector<6x32xf32> to vector<1x32xf32>
    %82 = vector.broadcast %81 : vector<1x32xf32> to vector<8x32xf32>
    %83 = arith.addf %80, %82 : vector<8x32xf32>
    %84 = arith.addf %83, %32 : vector<8x32xf32>
    %85 = vector.extract_strided_slice %40 {offsets = [1, 0], sizes = [1, 32], strides = [1, 1]} : vector<6x32xf32> to vector<1x32xf32>
    %86 = vector.extract_strided_slice %40 {offsets = [2, 0], sizes = [1, 32], strides = [1, 1]} : vector<6x32xf32> to vector<1x32xf32>
    %cst_45 = arith.constant dense<0.000000e+00> : vector<8xf32>
    %87 = vector.multi_reduction <add>, %84, %cst_45 [1] : vector<8x32xf32> to vector<8xf32>
    %88 = vector.shape_cast %87 : vector<8xf32> to vector<8x1xf32>
    %cst_46 = arith.constant 3.200000e+01 : f32
    %89 = vector.broadcast %cst_46 : f32 to vector<8x1xf32>
    %90 = arith.divf %88, %89 : vector<8x1xf32>
    %91 = vector.broadcast %90 : vector<8x1xf32> to vector<8x32xf32>
    %92 = arith.subf %84, %91 : vector<8x32xf32>
    %93 = arith.mulf %92, %92 : vector<8x32xf32>
    %cst_47 = arith.constant dense<0.000000e+00> : vector<8xf32>
    %94 = vector.multi_reduction <add>, %93, %cst_47 [1] : vector<8x32xf32> to vector<8xf32>
    %95 = vector.shape_cast %94 : vector<8xf32> to vector<8x1xf32>
    %cst_48 = arith.constant 3.200000e+01 : f32
    %96 = vector.broadcast %cst_48 : f32 to vector<8x1xf32>
    %97 = arith.divf %95, %96 : vector<8x1xf32>
    %98 = vector.broadcast %90 : vector<8x1xf32> to vector<8x32xf32>
    %99 = arith.subf %84, %98 : vector<8x32xf32>
    %cst_49 = arith.constant 9.99999996E-13 : f32
    %100 = vector.broadcast %cst_49 : f32 to vector<8x1xf32>
    %101 = arith.addf %97, %100 : vector<8x1xf32>
    %102 = math.rsqrt %101 : vector<8x1xf32>
    %103 = vector.broadcast %102 : vector<8x1xf32> to vector<8x32xf32>
    %104 = arith.mulf %99, %103 : vector<8x32xf32>
    %105 = vector.broadcast %85 : vector<1x32xf32> to vector<8x32xf32>
    %106 = arith.mulf %104, %105 : vector<8x32xf32>
    %107 = vector.broadcast %86 : vector<1x32xf32> to vector<8x32xf32>
    %108 = arith.addf %106, %107 : vector<8x32xf32>
    %109 = arith.truncf %108 : vector<8x32xf32> to vector<8x32xbf16>
    %cst_50 = arith.constant dense<0.000000e+00> : vector<8x64xf32>
    %110 = tpu.matmul %109, %42, %cst_50 {dimension_numbers = #tpu.dot_dimension_numbers<[1], [0], [0], [1], [0, 0, 1, 1], [], []>} : vector<8x32xbf16>, vector<32x64xbf16>, vector<8x64xf32> -> vector<8x64xf32>
    %111 = vector.broadcast %44 : vector<1x64xf32> to vector<8x64xf32>
    %112 = arith.addf %110, %111 : vector<8x64xf32>
    %cst_51 = arith.constant 5.000000e-01 : f32
    %113 = vector.broadcast %cst_51 : f32 to vector<8x64xf32>
    %114 = arith.mulf %113, %112 : vector<8x64xf32>
    %cst_52 = arith.constant 4.471500e-02 : f32
    %115 = vector.broadcast %cst_52 : f32 to vector<8x64xf32>
    %116 = arith.mulf %115, %112 : vector<8x64xf32>
    %117 = arith.mulf %116, %112 : vector<8x64xf32>
    %118 = arith.mulf %117, %112 : vector<8x64xf32>
    %119 = arith.addf %112, %118 : vector<8x64xf32>
    %cst_53 = arith.constant 0.797884583 : f32
    %120 = vector.broadcast %cst_53 : f32 to vector<8x64xf32>
    %121 = arith.mulf %120, %119 : vector<8x64xf32>
    %122 = math.tanh %121 : vector<8x64xf32>
    %cst_54 = arith.constant 1.000000e+00 : f32
    %123 = vector.broadcast %cst_54 : f32 to vector<8x64xf32>
    %124 = arith.addf %123, %122 : vector<8x64xf32>
    %125 = arith.mulf %114, %124 : vector<8x64xf32>
    %126 = arith.truncf %125 : vector<8x64xf32> to vector<8x64xbf16>
    %cst_55 = arith.constant dense<0.000000e+00> : vector<8x32xf32>
    %127 = tpu.matmul %126, %46, %cst_55 {dimension_numbers = #tpu.dot_dimension_numbers<[1], [0], [0], [1], [0, 0, 1, 1], [], []>} : vector<8x64xbf16>, vector<64x32xbf16>, vector<8x32xf32> -> vector<8x32xf32>
    %128 = vector.extract_strided_slice %40 {offsets = [3, 0], sizes = [1, 32], strides = [1, 1]} : vector<6x32xf32> to vector<1x32xf32>
    %129 = vector.broadcast %128 : vector<1x32xf32> to vector<8x32xf32>
    %130 = arith.addf %127, %129 : vector<8x32xf32>
    %131 = arith.addf %130, %108 : vector<8x32xf32>
    %132 = vector.extract_strided_slice %40 {offsets = [4, 0], sizes = [1, 32], strides = [1, 1]} : vector<6x32xf32> to vector<1x32xf32>
    %133 = vector.extract_strided_slice %40 {offsets = [5, 0], sizes = [1, 32], strides = [1, 1]} : vector<6x32xf32> to vector<1x32xf32>
    %cst_56 = arith.constant dense<0.000000e+00> : vector<8xf32>
    %134 = vector.multi_reduction <add>, %131, %cst_56 [1] : vector<8x32xf32> to vector<8xf32>
    %135 = vector.shape_cast %134 : vector<8xf32> to vector<8x1xf32>
    %cst_57 = arith.constant 3.200000e+01 : f32
    %136 = vector.broadcast %cst_57 : f32 to vector<8x1xf32>
    %137 = arith.divf %135, %136 : vector<8x1xf32>
    %138 = vector.broadcast %137 : vector<8x1xf32> to vector<8x32xf32>
    %139 = arith.subf %131, %138 : vector<8x32xf32>
    %140 = arith.mulf %139, %139 : vector<8x32xf32>
    %cst_58 = arith.constant dense<0.000000e+00> : vector<8xf32>
    %141 = vector.multi_reduction <add>, %140, %cst_58 [1] : vector<8x32xf32> to vector<8xf32>
    %142 = vector.shape_cast %141 : vector<8xf32> to vector<8x1xf32>
    %cst_59 = arith.constant 3.200000e+01 : f32
    %143 = vector.broadcast %cst_59 : f32 to vector<8x1xf32>
    %144 = arith.divf %142, %143 : vector<8x1xf32>
    %145 = vector.broadcast %137 : vector<8x1xf32> to vector<8x32xf32>
    %146 = arith.subf %131, %145 : vector<8x32xf32>
    %cst_60 = arith.constant 9.99999996E-13 : f32
    %147 = vector.broadcast %cst_60 : f32 to vector<8x1xf32>
    %148 = arith.addf %144, %147 : vector<8x1xf32>
    %149 = math.rsqrt %148 : vector<8x1xf32>
    %150 = vector.broadcast %149 : vector<8x1xf32> to vector<8x32xf32>
    %151 = arith.mulf %146, %150 : vector<8x32xf32>
    %152 = vector.broadcast %132 : vector<1x32xf32> to vector<8x32xf32>
    %153 = arith.mulf %151, %152 : vector<8x32xf32>
    %154 = vector.broadcast %133 : vector<1x32xf32> to vector<8x32xf32>
    %155 = arith.addf %153, %154 : vector<8x32xf32>
    %c1 = arith.constant 1 : index
    %c0_61 = arith.constant 0 : index
    %c0_62 = arith.constant 0 : index
    %c0_63 = arith.constant 0 : index
    %156 = vector.load %arg4[%c1, %c0_61, %c0_62, %c0_63] : memref<2x4x32x24xbf16, #tpu.memory_space<vmem>>, vector<1x4x32x24xbf16>
    %157 = vector.shape_cast %156 : vector<1x4x32x24xbf16> to vector<4x32x24xbf16>
    %c1_64 = arith.constant 1 : index
    %c0_65 = arith.constant 0 : index
    %c0_66 = arith.constant 0 : index
    %c0_67 = arith.constant 0 : index
    %158 = vector.load %arg5[%c1_64, %c0_65, %c0_66, %c0_67] : memref<2x4x1x24xf32, #tpu.memory_space<vmem>>, vector<1x4x1x24xf32>
    %159 = vector.shape_cast %158 : vector<1x4x1x24xf32> to vector<4x1x24xf32>
    %c1_68 = arith.constant 1 : index
    %c0_69 = arith.constant 0 : index
    %c0_70 = arith.constant 0 : index
    %c0_71 = arith.constant 0 : index
    %160 = vector.load %arg6[%c1_68, %c0_69, %c0_70, %c0_71] : memref<2x4x8x32xbf16, #tpu.memory_space<vmem>>, vector<1x4x8x32xbf16>
    %161 = vector.shape_cast %160 : vector<1x4x8x32xbf16> to vector<4x8x32xbf16>
    %c1_72 = arith.constant 1 : index
    %c0_73 = arith.constant 0 : index
    %c0_74 = arith.constant 0 : index
    %162 = vector.load %arg7[%c1_72, %c0_73, %c0_74] : memref<2x6x32xf32, #tpu.memory_space<vmem>>, vector<1x6x32xf32>
    %163 = vector.shape_cast %162 : vector<1x6x32xf32> to vector<6x32xf32>
    %c1_75 = arith.constant 1 : index
    %c0_76 = arith.constant 0 : index
    %c0_77 = arith.constant 0 : index
    %164 = vector.load %arg8[%c1_75, %c0_76, %c0_77] : memref<2x32x64xbf16, #tpu.memory_space<vmem>>, vector<1x32x64xbf16>
    %165 = vector.shape_cast %164 : vector<1x32x64xbf16> to vector<32x64xbf16>
    %c1_78 = arith.constant 1 : index
    %c0_79 = arith.constant 0 : index
    %c0_80 = arith.constant 0 : index
    %166 = vector.load %arg9[%c1_78, %c0_79, %c0_80] : memref<2x1x64xf32, #tpu.memory_space<vmem>>, vector<1x1x64xf32>
    %167 = vector.shape_cast %166 : vector<1x1x64xf32> to vector<1x64xf32>
    %c1_81 = arith.constant 1 : index
    %c0_82 = arith.constant 0 : index
    %c0_83 = arith.constant 0 : index
    %168 = vector.load %arg10[%c1_81, %c0_82, %c0_83] : memref<2x64x32xbf16, #tpu.memory_space<vmem>>, vector<1x64x32xbf16>
    %169 = vector.shape_cast %168 : vector<1x64x32xbf16> to vector<64x32xbf16>
    %170 = arith.truncf %155 : vector<8x32xf32> to vector<8x32xbf16>
    %171 = vector.shape_cast %170 : vector<8x32xbf16> to vector<1x8x32xbf16>
    %172 = vector.shape_cast %171 : vector<1x8x32xbf16> to vector<1x8x32xbf16>
    %173 = vector.broadcast %172 : vector<1x8x32xbf16> to vector<4x8x32xbf16>
    "tpu.trace_start"() <{level = 10 : i32, message = "hsd,hde->hse"}> : () -> ()
    %cst_84 = arith.constant dense<0.000000e+00> : vector<4x8x24xf32>
    %174 = tpu.matmul %173, %157, %cst_84 {dimension_numbers = #tpu.dot_dimension_numbers<[2], [1], [1], [2], [0, 0, 0, 1, 1, 2], [0], [0]>} : vector<4x8x32xbf16>, vector<4x32x24xbf16>, vector<4x8x24xf32> -> vector<4x8x24xf32>
    "tpu.trace_stop"() : () -> ()
    %175 = vector.broadcast %159 : vector<4x1x24xf32> to vector<4x8x24xf32>
    %176 = arith.addf %174, %175 : vector<4x8x24xf32>
    %177 = vector.extract_strided_slice %176 {offsets = [0, 0, 0], sizes = [4, 8, 8], strides = [1, 1, 1]} : vector<4x8x24xf32> to vector<4x8x8xf32>
    %178 = arith.truncf %177 : vector<4x8x8xf32> to vector<4x8x8xbf16>
    %179 = vector.extract_strided_slice %176 {offsets = [0, 0, 8], sizes = [4, 8, 8], strides = [1, 1, 1]} : vector<4x8x24xf32> to vector<4x8x8xf32>
    %180 = arith.truncf %179 : vector<4x8x8xf32> to vector<4x8x8xbf16>
    %181 = vector.extract_strided_slice %176 {offsets = [0, 0, 16], sizes = [4, 8, 8], strides = [1, 1, 1]} : vector<4x8x24xf32> to vector<4x8x8xf32>
    %182 = arith.truncf %181 : vector<4x8x8xf32> to vector<4x8x8xbf16>
    "tpu.trace_start"() <{level = 10 : i32, message = "hqd,hkd->hqk"}> : () -> ()
    %cst_85 = arith.constant dense<0.000000e+00> : vector<4x8x8xf32>
    %183 = tpu.matmul %178, %180, %cst_85 {dimension_numbers = #tpu.dot_dimension_numbers<[2], [2], [1], [1], [0, 0, 0, 1, 1, 1], [0], [0]>} : vector<4x8x8xbf16>, vector<4x8x8xbf16>, vector<4x8x8xf32> -> vector<4x8x8xf32>
    "tpu.trace_stop"() : () -> ()
    %cst_86 = arith.constant 0.353553385 : f32
    %184 = vector.broadcast %cst_86 : f32 to vector<4x8x8xf32>
    %185 = arith.mulf %183, %184 : vector<4x8x8xf32>
    %186 = vector.shape_cast %5 : vector<1x8xf32> to vector<1x1x8xf32>
    %187 = vector.broadcast %186 : vector<1x1x8xf32> to vector<4x8x8xf32>
    %188 = arith.addf %185, %187 : vector<4x8x8xf32>
    %cst_87 = arith.constant dense<0xFF800000> : vector<4x8xf32>
    %189 = vector.multi_reduction <maximumf>, %188, %cst_87 [2] : vector<4x8x8xf32> to vector<4x8xf32>
    %190 = vector.shape_cast %189 : vector<4x8xf32> to vector<4x8x1xf32>
    %191 = vector.broadcast %190 : vector<4x8x1xf32> to vector<4x8x8xf32>
    %192 = arith.subf %188, %191 : vector<4x8x8xf32>
    %193 = math.exp %192 : vector<4x8x8xf32>
    %cst_88 = arith.constant dense<0.000000e+00> : vector<4x8xf32>
    %194 = vector.multi_reduction <add>, %193, %cst_88 [2] : vector<4x8x8xf32> to vector<4x8xf32>
    %195 = vector.shape_cast %194 : vector<4x8xf32> to vector<4x8x1xf32>
    %196 = tpu.reciprocal %195 {approx = true} : vector<4x8x1xf32> -> vector<4x8x1xf32>
    %197 = vector.broadcast %196 : vector<4x8x1xf32> to vector<4x8x8xf32>
    %198 = arith.mulf %193, %197 : vector<4x8x8xf32>
    %199 = arith.truncf %198 : vector<4x8x8xf32> to vector<4x8x8xbf16>
    "tpu.trace_start"() <{level = 10 : i32, message = "hqk,hkd->hqd"}> : () -> ()
    %cst_89 = arith.constant dense<0.000000e+00> : vector<4x8x8xf32>
    %200 = tpu.matmul %199, %182, %cst_89 {dimension_numbers = #tpu.dot_dimension_numbers<[2], [1], [1], [2], [0, 0, 0, 1, 1, 2], [0], [0]>} : vector<4x8x8xbf16>, vector<4x8x8xbf16>, vector<4x8x8xf32> -> vector<4x8x8xf32>
    "tpu.trace_stop"() : () -> ()
    %201 = arith.truncf %200 : vector<4x8x8xf32> to vector<4x8x8xbf16>
    "tpu.trace_start"() <{level = 10 : i32, message = "hqd,hdo->hqo"}> : () -> ()
    %cst_90 = arith.constant dense<0.000000e+00> : vector<4x8x32xf32>
    %202 = tpu.matmul %201, %161, %cst_90 {dimension_numbers = #tpu.dot_dimension_numbers<[2], [1], [1], [2], [0, 0, 0, 1, 1, 2], [0], [0]>} : vector<4x8x8xbf16>, vector<4x8x32xbf16>, vector<4x8x32xf32> -> vector<4x8x32xf32>
    "tpu.trace_stop"() : () -> ()
    %cst_91 = arith.constant dense<0.000000e+00> : vector<8x32xf32>
    %203 = vector.multi_reduction <add>, %202, %cst_91 [0] : vector<4x8x32xf32> to vector<8x32xf32>
    %204 = vector.extract_strided_slice %163 {offsets = [0, 0], sizes = [1, 32], strides = [1, 1]} : vector<6x32xf32> to vector<1x32xf32>
    %205 = vector.broadcast %204 : vector<1x32xf32> to vector<8x32xf32>
    %206 = arith.addf %203, %205 : vector<8x32xf32>
    %207 = arith.addf %206, %155 : vector<8x32xf32>
    %208 = vector.extract_strided_slice %163 {offsets = [1, 0], sizes = [1, 32], strides = [1, 1]} : vector<6x32xf32> to vector<1x32xf32>
    %209 = vector.extract_strided_slice %163 {offsets = [2, 0], sizes = [1, 32], strides = [1, 1]} : vector<6x32xf32> to vector<1x32xf32>
    %cst_92 = arith.constant dense<0.000000e+00> : vector<8xf32>
    %210 = vector.multi_reduction <add>, %207, %cst_92 [1] : vector<8x32xf32> to vector<8xf32>
    %211 = vector.shape_cast %210 : vector<8xf32> to vector<8x1xf32>
    %cst_93 = arith.constant 3.200000e+01 : f32
    %212 = vector.broadcast %cst_93 : f32 to vector<8x1xf32>
    %213 = arith.divf %211, %212 : vector<8x1xf32>
    %214 = vector.broadcast %213 : vector<8x1xf32> to vector<8x32xf32>
    %215 = arith.subf %207, %214 : vector<8x32xf32>
    %216 = arith.mulf %215, %215 : vector<8x32xf32>
    %cst_94 = arith.constant dense<0.000000e+00> : vector<8xf32>
    %217 = vector.multi_reduction <add>, %216, %cst_94 [1] : vector<8x32xf32> to vector<8xf32>
    %218 = vector.shape_cast %217 : vector<8xf32> to vector<8x1xf32>
    %cst_95 = arith.constant 3.200000e+01 : f32
    %219 = vector.broadcast %cst_95 : f32 to vector<8x1xf32>
    %220 = arith.divf %218, %219 : vector<8x1xf32>
    %221 = vector.broadcast %213 : vector<8x1xf32> to vector<8x32xf32>
    %222 = arith.subf %207, %221 : vector<8x32xf32>
    %cst_96 = arith.constant 9.99999996E-13 : f32
    %223 = vector.broadcast %cst_96 : f32 to vector<8x1xf32>
    %224 = arith.addf %220, %223 : vector<8x1xf32>
    %225 = math.rsqrt %224 : vector<8x1xf32>
    %226 = vector.broadcast %225 : vector<8x1xf32> to vector<8x32xf32>
    %227 = arith.mulf %222, %226 : vector<8x32xf32>
    %228 = vector.broadcast %208 : vector<1x32xf32> to vector<8x32xf32>
    %229 = arith.mulf %227, %228 : vector<8x32xf32>
    %230 = vector.broadcast %209 : vector<1x32xf32> to vector<8x32xf32>
    %231 = arith.addf %229, %230 : vector<8x32xf32>
    %232 = arith.truncf %231 : vector<8x32xf32> to vector<8x32xbf16>
    %cst_97 = arith.constant dense<0.000000e+00> : vector<8x64xf32>
    %233 = tpu.matmul %232, %165, %cst_97 {dimension_numbers = #tpu.dot_dimension_numbers<[1], [0], [0], [1], [0, 0, 1, 1], [], []>} : vector<8x32xbf16>, vector<32x64xbf16>, vector<8x64xf32> -> vector<8x64xf32>
    %234 = vector.broadcast %167 : vector<1x64xf32> to vector<8x64xf32>
    %235 = arith.addf %233, %234 : vector<8x64xf32>
    %cst_98 = arith.constant 5.000000e-01 : f32
    %236 = vector.broadcast %cst_98 : f32 to vector<8x64xf32>
    %237 = arith.mulf %236, %235 : vector<8x64xf32>
    %cst_99 = arith.constant 4.471500e-02 : f32
    %238 = vector.broadcast %cst_99 : f32 to vector<8x64xf32>
    %239 = arith.mulf %238, %235 : vector<8x64xf32>
    %240 = arith.mulf %239, %235 : vector<8x64xf32>
    %241 = arith.mulf %240, %235 : vector<8x64xf32>
    %242 = arith.addf %235, %241 : vector<8x64xf32>
    %cst_100 = arith.constant 0.797884583 : f32
    %243 = vector.broadcast %cst_100 : f32 to vector<8x64xf32>
    %244 = arith.mulf %243, %242 : vector<8x64xf32>
    %245 = math.tanh %244 : vector<8x64xf32>
    %cst_101 = arith.constant 1.000000e+00 : f32
    %246 = vector.broadcast %cst_101 : f32 to vector<8x64xf32>
    %247 = arith.addf %246, %245 : vector<8x64xf32>
    %248 = arith.mulf %237, %247 : vector<8x64xf32>
    %249 = arith.truncf %248 : vector<8x64xf32> to vector<8x64xbf16>
    %cst_102 = arith.constant dense<0.000000e+00> : vector<8x32xf32>
    %250 = tpu.matmul %249, %169, %cst_102 {dimension_numbers = #tpu.dot_dimension_numbers<[1], [0], [0], [1], [0, 0, 1, 1], [], []>} : vector<8x64xbf16>, vector<64x32xbf16>, vector<8x32xf32> -> vector<8x32xf32>
    %251 = vector.extract_strided_slice %163 {offsets = [3, 0], sizes = [1, 32], strides = [1, 1]} : vector<6x32xf32> to vector<1x32xf32>
    %252 = vector.broadcast %251 : vector<1x32xf32> to vector<8x32xf32>
    %253 = arith.addf %250, %252 : vector<8x32xf32>
    %254 = arith.addf %253, %231 : vector<8x32xf32>
    %255 = vector.extract_strided_slice %163 {offsets = [4, 0], sizes = [1, 32], strides = [1, 1]} : vector<6x32xf32> to vector<1x32xf32>
    %256 = vector.extract_strided_slice %163 {offsets = [5, 0], sizes = [1, 32], strides = [1, 1]} : vector<6x32xf32> to vector<1x32xf32>
    %cst_103 = arith.constant dense<0.000000e+00> : vector<8xf32>
    %257 = vector.multi_reduction <add>, %254, %cst_103 [1] : vector<8x32xf32> to vector<8xf32>
    %258 = vector.shape_cast %257 : vector<8xf32> to vector<8x1xf32>
    %cst_104 = arith.constant 3.200000e+01 : f32
    %259 = vector.broadcast %cst_104 : f32 to vector<8x1xf32>
    %260 = arith.divf %258, %259 : vector<8x1xf32>
    %261 = vector.broadcast %260 : vector<8x1xf32> to vector<8x32xf32>
    %262 = arith.subf %254, %261 : vector<8x32xf32>
    %263 = arith.mulf %262, %262 : vector<8x32xf32>
    %cst_105 = arith.constant dense<0.000000e+00> : vector<8xf32>
    %264 = vector.multi_reduction <add>, %263, %cst_105 [1] : vector<8x32xf32> to vector<8xf32>
    %265 = vector.shape_cast %264 : vector<8xf32> to vector<8x1xf32>
    %cst_106 = arith.constant 3.200000e+01 : f32
    %266 = vector.broadcast %cst_106 : f32 to vector<8x1xf32>
    %267 = arith.divf %265, %266 : vector<8x1xf32>
    %268 = vector.broadcast %260 : vector<8x1xf32> to vector<8x32xf32>
    %269 = arith.subf %254, %268 : vector<8x32xf32>
    %cst_107 = arith.constant 9.99999996E-13 : f32
    %270 = vector.broadcast %cst_107 : f32 to vector<8x1xf32>
    %271 = arith.addf %267, %270 : vector<8x1xf32>
    %272 = math.rsqrt %271 : vector<8x1xf32>
    %273 = vector.broadcast %272 : vector<8x1xf32> to vector<8x32xf32>
    %274 = arith.mulf %269, %273 : vector<8x32xf32>
    %275 = vector.broadcast %255 : vector<1x32xf32> to vector<8x32xf32>
    %276 = arith.mulf %274, %275 : vector<8x32xf32>
    %277 = vector.broadcast %256 : vector<1x32xf32> to vector<8x32xf32>
    %278 = arith.addf %276, %277 : vector<8x32xf32>
    %c0_108 = arith.constant 0 : index
    %c0_109 = arith.constant 0 : index
    %c0_110 = arith.constant 0 : index
    %279 = vector.load %arg11[%c0_108, %c0_109, %c0_110] : memref<1x8x32xf32, #tpu.memory_space<vmem>>, vector<1x8x32xf32>
    %280 = vector.shape_cast %279 : vector<1x8x32xf32> to vector<8x32xf32>
    %281 = vector.shape_cast %278 : vector<8x32xf32> to vector<1x8x32xf32>
    tpu.vector_store %arg11[%c0_108, %c0_109, %c0_110], %281 {strides = array<i32>} : memref<1x8x32xf32, #tpu.memory_space<vmem>>, vector<1x8x32xf32>,
    return
  }
  func.func @transform_0(%arg0: i32) -> (i32, i32, i32) {
    %c0_i32 = arith.constant 0 : i32
    %c0_i32_0 = arith.constant 0 : i32
    %c0_i32_1 = arith.constant 0 : i32
    return %arg0, %c0_i32, %c0_i32_0 : i32, i32, i32
  }
  func.func @transform_1(%arg0: i32) -> (i32, i32, i32) {
    %c0_i32 = arith.constant 0 : i32
    %c0_i32_0 = arith.constant 0 : i32
    %c0_i32_1 = arith.constant 0 : i32
    return %arg0, %c0_i32, %c0_i32_0 : i32, i32, i32
  }
  func.func @transform_2(%arg0: i32) -> (i32, i32) {
    %c0_i32 = arith.constant 0 : i32
    %c0_i32_0 = arith.constant 0 : i32
    %c0_i32_1 = arith.constant 0 : i32
    return %c0_i32, %c0_i32_0 : i32, i32
  }
  func.func @transform_3(%arg0: i32) -> (i32, i32, i32, i32) {
    %c0_i32 = arith.constant 0 : i32
    %c0_i32_0 = arith.constant 0 : i32
    %c0_i32_1 = arith.constant 0 : i32
    %c0_i32_2 = arith.constant 0 : i32
    %c0_i32_3 = arith.constant 0 : i32
    return %c0_i32, %c0_i32_0, %c0_i32_1, %c0_i32_2 : i32, i32, i32, i32
  }
  func.func @transform_4(%arg0: i32) -> (i32, i32, i32, i32) {
    %c0_i32 = arith.constant 0 : i32
    %c0_i32_0 = arith.constant 0 : i32
    %c0_i32_1 = arith.constant 0 : i32
    %c0_i32_2 = arith.constant 0 : i32
    %c0_i32_3 = arith.constant 0 : i32
    return %c0_i32, %c0_i32_0, %c0_i32_1, %c0_i32_2 : i32, i32, i32, i32
  }
  func.func @transform_5(%arg0: i32) -> (i32, i32, i32, i32) {
    %c0_i32 = arith.constant 0 : i32
    %c0_i32_0 = arith.constant 0 : i32
    %c0_i32_1 = arith.constant 0 : i32
    %c0_i32_2 = arith.constant 0 : i32
    %c0_i32_3 = arith.constant 0 : i32
    return %c0_i32, %c0_i32_0, %c0_i32_1, %c0_i32_2 : i32, i32, i32, i32
  }
  func.func @transform_6(%arg0: i32) -> (i32, i32, i32) {
    %c0_i32 = arith.constant 0 : i32
    %c0_i32_0 = arith.constant 0 : i32
    %c0_i32_1 = arith.constant 0 : i32
    %c0_i32_2 = arith.constant 0 : i32
    return %c0_i32, %c0_i32_0, %c0_i32_1 : i32, i32, i32
  }
  func.func @transform_7(%arg0: i32) -> (i32, i32, i32) {
    %c0_i32 = arith.constant 0 : i32
    %c0_i32_0 = arith.constant 0 : i32
    %c0_i32_1 = arith.constant 0 : i32
    %c0_i32_2 = arith.constant 0 : i32
    return %c0_i32, %c0_i32_0, %c0_i32_1 : i32, i32, i32
  }
  func.func @transform_8(%arg0: i32) -> (i32, i32, i32) {
    %c0_i32 = arith.constant 0 : i32
    %c0_i32_0 = arith.constant 0 : i32
    %c0_i32_1 = arith.constant 0 : i32
    %c0_i32_2 = arith.constant 0 : i32
    return %c0_i32, %c0_i32_0, %c0_i32_1 : i32, i32, i32
  }
  func.func @transform_9(%arg0: i32) -> (i32, i32, i32) {
    %c0_i32 = arith.constant 0 : i32
    %c0_i32_0 = arith.constant 0 : i32
    %c0_i32_1 = arith.constant 0 : i32
    %c0_i32_2 = arith.constant 0 : i32
    return %c0_i32, %c0_i32_0, %c0_i32_1 : i32, i32, i32
  }
  func.func @transform_10(%arg0: i32) -> (i32, i32, i32) {
    %c0_i32 = arith.constant 0 : i32
    %c0_i32_0 = arith.constant 0 : i32
    %c0_i32_1 = arith.constant 0 : i32
    return %arg0, %c0_i32, %c0_i32_0 : i32, i32, i32
  }
}

</mosaic_0001>

<llo_original>
// kernel: transformer_encoder_forward.1
$region0: #{transformer_encoder_forward.1}
  #allocation0 [shape = 'u32[]', space=smem, size = 0x4, offset = 0x4, fixed_abs, tag = 'smem constant byte address 0x4 - core index']
  #allocation1 [shape = 'u32[144,128]{1,0:T(1,128)}', space=vmem, size = 0x12000, scoped, tag = 'internal scratch']
  %s0 = inlined_call_operand.vmem [shape: f32[2,8,32], index: 0, kind: input, shape index: {}]
  %s1 = inlined_call_operand.vmem [shape: f32[2,1,8], index: 1, kind: input, shape index: {}]
  %s2 = inlined_call_operand.vmem [shape: f32[2,32], index: 2, kind: input, shape index: {}]
  %s3 = inlined_call_operand.vmem [shape: bf16[2,4,32,24], index: 3, kind: input, shape index: {}]
  %s4 = inlined_call_operand.vmem [shape: f32[2,4,1,24], index: 4, kind: input, shape index: {}]
  %s5 = inlined_call_operand.vmem [shape: bf16[2,4,8,32], index: 5, kind: input, shape index: {}]
  %s6 = inlined_call_operand.vmem [shape: f32[2,6,32], index: 6, kind: input, shape index: {}]
  %s7 = inlined_call_operand.vmem [shape: bf16[2,32,64], index: 7, kind: input, shape index: {}]
  %s8 = inlined_call_operand.vmem [shape: f32[2,1,64], index: 8, kind: input, shape index: {}]
  %s9 = inlined_call_operand.vmem [shape: bf16[2,64,32], index: 9, kind: input, shape index: {}]
  %s10 = inlined_call_operand.hbm [shape: f32[2,8,32], index: 10, kind: output, shape index: {}]
  %s11 = sld [smem:[#allocation0]]
  $region73: #{transformer_encoder_forward.1} parent=0
    _
  %s13 = ssub.s32 1, %s11
  %s14 = scalar_select 0, %s13, %s11
  $region1: #{transformer_encoder_forward.1} parent=0
    #allocation2 [shape = 'u8[8192]{0}', space=vmem, size = 0x2000, scoped, tag = 'output window, operand 0']
    #allocation3 [shape = 's32[2]{0}', space=sflag, size = 0x8, scoped, tag = 'scoped memory for transformer_encoder_forward.1']
    %15 = vsyncpa [#allocation3], 0
    %s16 = scalar_lea.sflag [#allocation3], 1
    %17 = vsyncpa %s16, 0
    loop: start=0, step=1, limit=4
    $region2: #{transformer_encoder_forward.1} parent=1 // loop_pre_header
      _
    $region3: #{transformer_encoder_forward.1} parent=1 // loop_header
      %s19 = sphi 0, %s23
      %p20 = scmp.ge.s32.totalorder %s19, 4
      %s29 = sphi 0, %s31
      %s32 = sphi 0, %s29
      %s33 = sphi 0, %s32
      %s49 = sphi 0, %s33
      %s55 = sphi 0, %s57
      %s58 = sphi 0, %s55
      %s59 = sphi 0, %s58
      %s75 = sphi 0, %s59
      %s79 = sphi 0, %s79
      %s81 = sphi 0, %s79
      %s82 = sphi 0, %s81
      %s96 = sphi 0, %s82
      %s100 = sphi 0, %s100
      %s102 = sphi 0, %s100
      %s103 = sphi 0, %s102
      %s117 = sphi 0, %s103
      %s121 = sphi 0, %s121
      %s123 = sphi 0, %s121
      %s124 = sphi 0, %s123
      %s138 = sphi 0, %s124
      %s142 = sphi 0, %s142
      %s144 = sphi 0, %s142
      %s145 = sphi 0, %s144
      %s159 = sphi 0, %s145
      %s163 = sphi 0, %s163
      %s165 = sphi 0, %s163
      %s166 = sphi 0, %s165
      %s180 = sphi 0, %s166
      %s184 = sphi 0, %s184
      %s186 = sphi 0, %s184
      %s187 = sphi 0, %s186
      %s201 = sphi 0, %s187
      %s205 = sphi 0, %s205
      %s207 = sphi 0, %s205
      %s208 = sphi 0, %s207
      %s222 = sphi 0, %s208
      %s226 = sphi 0, %s226
      %s228 = sphi 0, %s226
      %s229 = sphi 0, %s228
      %s243 = sphi 0, %s229
      %s249 = sphi 0, %s251
      %s252 = sphi 0, %s249
      %s253 = sphi 0, %s252
      %s269 = sphi 0, %s253
    $region4: #{transformer_encoder_forward.1} parent=1 // loop_header_branch
      %22 = sbr.rel (%p20) target = $region8
    $region5: #{transformer_encoder_forward.1} parent=1 // loop_body
      %s24 = ssub.s32 %s19, 1
      %s25 = ssub.s32 %s19, 2
      %s26 = sadd.s32 %s19, 1
      %s27 = ssub.s32 %s19, %s26
      %p28 = scmp.eq.s32.totalorder %s27, 0
      %s30 = sadd.s32 %s29, 1
      %s31 = scalar_select %p28, %s29, %s30
      %p34 = pneg %p28
      %p35 = scmp.eq.s32.totalorder %s19, 1
      %p36 = por %p34, %p35
      %p37 = scmp.ne.s32.totalorder %s29, %s32
      %p38 = scmp.eq.s32.totalorder %s19, 0
      %p39 = por %p37, %p38
      %p40 = scmp.ne.s32.totalorder %s29, %s32
      %p41 = scmp.eq.s32.totalorder %s24, 1
      %p42 = por %p40, %p41
      %p43 = scmp.ne.s32.totalorder %s32, %s33
      %p44 = scmp.eq.s32.totalorder %s24, 0
      %p45 = por %p43, %p44
      %p46 = scmp.ne.s32.totalorder %s32, %s33
      %p47 = scmp.eq.s32.totalorder %s25, 1
      %p48 = por %p46, %p47
      %p50 = scmp.ne.s32.totalorder %s33, %s49
      %p51 = scmp.eq.s32.totalorder %s25, 0
      %p52 = por %p50, %p51
      %s53 = ssub.s32 %s19, %s26
      %p54 = scmp.eq.s32.totalorder %s53, 0
      %s56 = sadd.s32 %s55, 1
      %s57 = scalar_select %p54, %s55, %s56
      %p60 = pneg %p54
      %p61 = scmp.eq.s32.totalorder %s19, 1
      %p62 = por %p60, %p61
      %p63 = scmp.ne.s32.totalorder %s55, %s58
      %p64 = scmp.eq.s32.totalorder %s19, 0
      %p65 = por %p63, %p64
      %p66 = scmp.ne.s32.totalorder %s55, %s58
      %p67 = scmp.eq.s32.totalorder %s24, 1
      %p68 = por %p66, %p67
      %p69 = scmp.ne.s32.totalorder %s58, %s59
      %p70 = scmp.eq.s32.totalorder %s24, 0
      %p71 = por %p69, %p70
      %p72 = scmp.ne.s32.totalorder %s58, %s59
      %p73 = scmp.eq.s32.totalorder %s25, 1
      %p74 = por %p72, %p73
      %p76 = scmp.ne.s32.totalorder %s59, %s75
      %p77 = scmp.eq.s32.totalorder %s25, 0
      %p78 = por %p76, %p77
      %s80 = sadd.s32 %s79, 1
      %p83 = scmp.eq.s32.totalorder %s19, 1
      %p84 = scmp.ne.s32.totalorder %s79, %s81
      %p85 = scmp.eq.s32.totalorder %s19, 0
      %p86 = por %p84, %p85
      %p87 = scmp.ne.s32.totalorder %s79, %s81
      %p88 = scmp.eq.s32.totalorder %s24, 1
      %p89 = por %p87, %p88
      %p90 = scmp.ne.s32.totalorder %s81, %s82
      %p91 = scmp.eq.s32.totalorder %s24, 0
      %p92 = por %p90, %p91
      %p93 = scmp.ne.s32.totalorder %s81, %s82
      %p94 = scmp.eq.s32.totalorder %s25, 1
      %p95 = por %p93, %p94
      %p97 = scmp.ne.s32.totalorder %s82, %s96
      %p98 = scmp.eq.s32.totalorder %s25, 0
      %p99 = por %p97, %p98
      %s101 = sadd.s32 %s100, 1
      %p104 = scmp.eq.s32.totalorder %s19, 1
      %p105 = scmp.ne.s32.totalorder %s100, %s102
      %p106 = scmp.eq.s32.totalorder %s19, 0
      %p107 = por %p105, %p106
      %p108 = scmp.ne.s32.totalorder %s100, %s102
      %p109 = scmp.eq.s32.totalorder %s24, 1
      %p110 = por %p108, %p109
      %p111 = scmp.ne.s32.totalorder %s102, %s103
      %p112 = scmp.eq.s32.totalorder %s24, 0
      %p113 = por %p111, %p112
      %p114 = scmp.ne.s32.totalorder %s102, %s103
      %p115 = scmp.eq.s32.totalorder %s25, 1
      %p116 = por %p114, %p115
      %p118 = scmp.ne.s32.totalorder %s103, %s117
      %p119 = scmp.eq.s32.totalorder %s25, 0
      %p120 = por %p118, %p119
      %s122 = sadd.s32 %s121, 1
      %p125 = scmp.eq.s32.totalorder %s19, 1
      %p126 = scmp.ne.s32.totalorder %s121, %s123
      %p127 = scmp.eq.s32.totalorder %s19, 0
      %p128 = por %p126, %p127
      %p129 = scmp.ne.s32.totalorder %s121, %s123
      %p130 = scmp.eq.s32.totalorder %s24, 1
      %p131 = por %p129, %p130
      %p132 = scmp.ne.s32.totalorder %s123, %s124
      %p133 = scmp.eq.s32.totalorder %s24, 0
      %p134 = por %p132, %p133
      %p135 = scmp.ne.s32.totalorder %s123, %s124
      %p136 = scmp.eq.s32.totalorder %s25, 1
      %p137 = por %p135, %p136
      %p139 = scmp.ne.s32.totalorder %s124, %s138
      %p140 = scmp.eq.s32.totalorder %s25, 0
      %p141 = por %p139, %p140
      %s143 = sadd.s32 %s142, 1
      %p146 = scmp.eq.s32.totalorder %s19, 1
      %p147 = scmp.ne.s32.totalorder %s142, %s144
      %p148 = scmp.eq.s32.totalorder %s19, 0
      %p149 = por %p147, %p148
      %p150 = scmp.ne.s32.totalorder %s142, %s144
      %p151 = scmp.eq.s32.totalorder %s24, 1
      %p152 = por %p150, %p151
      %p153 = scmp.ne.s32.totalorder %s144, %s145
      %p154 = scmp.eq.s32.totalorder %s24, 0
      %p155 = por %p153, %p154
      %p156 = scmp.ne.s32.totalorder %s144, %s145
      %p157 = scmp.eq.s32.totalorder %s25, 1
      %p158 = por %p156, %p157
      %p160 = scmp.ne.s32.totalorder %s145, %s159
      %p161 = scmp.eq.s32.totalorder %s25, 0
      %p162 = por %p160, %p161
      %s164 = sadd.s32 %s163, 1
      %p167 = scmp.eq.s32.totalorder %s19, 1
      %p168 = scmp.ne.s32.totalorder %s163, %s165
      %p169 = scmp.eq.s32.totalorder %s19, 0
      %p170 = por %p168, %p169
      %p171 = scmp.ne.s32.totalorder %s163, %s165
      %p172 = scmp.eq.s32.totalorder %s24, 1
      %p173 = por %p171, %p172
      %p174 = scmp.ne.s32.totalorder %s165, %s166
      %p175 = scmp.eq.s32.totalorder %s24, 0
      %p176 = por %p174, %p175
      %p177 = scmp.ne.s32.totalorder %s165, %s166
      %p178 = scmp.eq.s32.totalorder %s25, 1
      %p179 = por %p177, %p178
      %p181 = scmp.ne.s32.totalorder %s166, %s180
      %p182 = scmp.eq.s32.totalorder %s25, 0
      %p183 = por %p181, %p182
      %s185 = sadd.s32 %s184, 1
      %p188 = scmp.eq.s32.totalorder %s19, 1
      %p189 = scmp.ne.s32.totalorder %s184, %s186
      %p190 = scmp.eq.s32.totalorder %s19, 0
      %p191 = por %p189, %p190
      %p192 = scmp.ne.s32.totalorder %s184, %s186
      %p193 = scmp.eq.s32.totalorder %s24, 1
      %p194 = por %p192, %p193
      %p195 = scmp.ne.s32.totalorder %s186, %s187
      %p196 = scmp.eq.s32.totalorder %s24, 0
      %p197 = por %p195, %p196
      %p198 = scmp.ne.s32.totalorder %s186, %s187
      %p199 = scmp.eq.s32.totalorder %s25, 1
      %p200 = por %p198, %p199
      %p202 = scmp.ne.s32.totalorder %s187, %s201
      %p203 = scmp.eq.s32.totalorder %s25, 0
      %p204 = por %p202, %p203
      %s206 = sadd.s32 %s205, 1
      %p209 = scmp.eq.s32.totalorder %s19, 1
      %p210 = scmp.ne.s32.totalorder %s205, %s207
      %p211 = scmp.eq.s32.totalorder %s19, 0
      %p212 = por %p210, %p211
      %p213 = scmp.ne.s32.totalorder %s205, %s207
      %p214 = scmp.eq.s32.totalorder %s24, 1
      %p215 = por %p213, %p214
      %p216 = scmp.ne.s32.totalorder %s207, %s208
      %p217 = scmp.eq.s32.totalorder %s24, 0
      %p218 = por %p216, %p217
      %p219 = scmp.ne.s32.totalorder %s207, %s208
      %p220 = scmp.eq.s32.totalorder %s25, 1
      %p221 = por %p219, %p220
      %p223 = scmp.ne.s32.totalorder %s208, %s222
      %p224 = scmp.eq.s32.totalorder %s25, 0
      %p225 = por %p223, %p224
      %s227 = sadd.s32 %s226, 1
      %p230 = scmp.eq.s32.totalorder %s19, 1
      %p231 = scmp.ne.s32.totalorder %s226, %s228
      %p232 = scmp.eq.s32.totalorder %s19, 0
      %p233 = por %p231, %p232
      %p234 = scmp.ne.s32.totalorder %s226, %s228
      %p235 = scmp.eq.s32.totalorder %s24, 1
      %p236 = por %p234, %p235
      %p237 = scmp.ne.s32.totalorder %s228, %s229
      %p238 = scmp.eq.s32.totalorder %s24, 0
      %p239 = por %p237, %p238
      %p240 = scmp.ne.s32.totalorder %s228, %s229
      %p241 = scmp.eq.s32.totalorder %s25, 1
      %p242 = por %p240, %p241
      %p244 = scmp.ne.s32.totalorder %s229, %s243
      %p245 = scmp.eq.s32.totalorder %s25, 0
      %p246 = por %p244, %p245
      %s247 = ssub.s32 %s19, %s26
      %p248 = scmp.eq.s32.totalorder %s247, 0
      %s250 = sadd.s32 %s249, 1
      %s251 = scalar_select %p248, %s249, %s250
      %p254 = pneg %p248
      %p255 = scmp.eq.s32.totalorder %s19, 1
      %p256 = por %p254, %p255
      %p257 = scmp.ne.s32.totalorder %s249, %s252
      %p258 = scmp.eq.s32.totalorder %s19, 0
      %p259 = por %p257, %p258
      %p260 = scmp.ne.s32.totalorder %s249, %s252
      %p261 = scmp.eq.s32.totalorder %s24, 1
      %p262 = por %p260, %p261
      %p263 = scmp.ne.s32.totalorder %s252, %s253
      %p264 = scmp.eq.s32.totalorder %s24, 0
      %p265 = por %p263, %p264
      %p266 = scmp.ne.s32.totalorder %s252, %s253
      %p267 = scmp.eq.s32.totalorder %s25, 1
      %p268 = por %p266, %p267
      %p270 = scmp.ne.s32.totalorder %s253, %s269
      %p271 = scmp.eq.s32.totalorder %s25, 0
      %p272 = por %p270, %p271
      %p273 = scmp.le.s32.totalorder 1, %s19
      %p274 = scmp.lt.s32.totalorder %s19, 3
      %p275 = pnand %p273, %p274
      %p276 = pneg %p275
      // Predicated region
      $region9: #{transformer_encoder_forward.1} parent=5 // pred_check
        _
      $region10: #{transformer_encoder_forward.1} parent=5 // pred_check_branch
        %278 = sbr.rel (%p275) target = $region12
      $region11: #{transformer_encoder_forward.1} parent=5 // pred_region
        %s279 = ssub.s32 %s19, 1
        // Predicated region
        $region13: #{transformer_encoder_forward.1} parent=11 // pred_check
          %p280 = pneg %p92
        $region14: #{transformer_encoder_forward.1} parent=11 // pred_check_branch
          %282 = sbr.rel (%p280) target = $region16
        $region15: #{transformer_encoder_forward.1} parent=11 // pred_region
          _
        $region16: #{transformer_encoder_forward.1} parent=11 // pred_fallthru
          _
        // Predicated region
        $region17: #{transformer_encoder_forward.1} parent=11 // pred_check
          %p283 = pneg %p113
        $region18: #{transformer_encoder_forward.1} parent=11 // pred_check_branch
          %285 = sbr.rel (%p283) target = $region20
        $region19: #{transformer_encoder_forward.1} parent=11 // pred_region
          _
        $region20: #{transformer_encoder_forward.1} parent=11 // pred_fallthru
          _
        // Predicated region
        $region21: #{transformer_encoder_forward.1} parent=11 // pred_check
          %p286 = pneg %p134
        $region22: #{transformer_encoder_forward.1} parent=11 // pred_check_branch
          %288 = sbr.rel (%p286) target = $region24
        $region23: #{transformer_encoder_forward.1} parent=11 // pred_region
          _
        $region24: #{transformer_encoder_forward.1} parent=11 // pred_fallthru
          _
        // Predicated region
        $region25: #{transformer_encoder_forward.1} parent=11 // pred_check
          %p289 = pneg %p155
        $region26: #{transformer_encoder_forward.1} parent=11 // pred_check_branch
          %291 = sbr.rel (%p289) target = $region28
        $region27: #{transformer_encoder_forward.1} parent=11 // pred_region
          _
        $region28: #{transformer_encoder_forward.1} parent=11 // pred_fallthru
          _
        // Predicated region
        $region29: #{transformer_encoder_forward.1} parent=11 // pred_check
          %p292 = pneg %p176
        $region30: #{transformer_encoder_forward.1} parent=11 // pred_check_branch
          %294 = sbr.rel (%p292) target = $region32
        $region31: #{transformer_encoder_forward.1} parent=11 // pred_region
          _
        $region32: #{transformer_encoder_forward.1} parent=11 // pred_fallthru
          _
        // Predicated region
        $region33: #{transformer_encoder_forward.1} parent=11 // pred_check
          %p295 = pneg %p197
        $region34: #{transformer_encoder_forward.1} parent=11 // pred_check_branch
          %297 = sbr.rel (%p295) target = $region36
        $region35: #{transformer_encoder_forward.1} parent=11 // pred_region
          _
        $region36: #{transformer_encoder_forward.1} parent=11 // pred_fallthru
          _
        // Predicated region
        $region37: #{transformer_encoder_forward.1} parent=11 // pred_check
          %p298 = pneg %p218
        $region38: #{transformer_encoder_forward.1} parent=11 // pred_check_branch
          %300 = sbr.rel (%p298) target = $region40
        $region39: #{transformer_encoder_forward.1} parent=11 // pred_region
          _
        $region40: #{transformer_encoder_forward.1} parent=11 // pred_fallthru
          _
        // Predicated region
        $region41: #{transformer_encoder_forward.1} parent=11 // pred_check
          %p301 = pneg %p239
        $region42: #{transformer_encoder_forward.1} parent=11 // pred_check_branch
          %303 = sbr.rel (%p301) target = $region44
        $region43: #{transformer_encoder_forward.1} parent=11 // pred_region
          _
        $region44: #{transformer_encoder_forward.1} parent=11 // pred_fallthru
          _
      $region12: #{transformer_encoder_forward.1} parent=5 // pred_fallthru
        _
      %p304 = scmp.lt.s32.totalorder %s19, 2
      // Predicated region
      $region45: #{transformer_encoder_forward.1} parent=5 // pred_check
        %p305 = pneg %p304
      $region46: #{transformer_encoder_forward.1} parent=5 // pred_check_branch
        %307 = sbr.rel (%p305) target = $region48
      $region47: #{transformer_encoder_forward.1} parent=5 // pred_region
        // Predicated region
        $region49: #{transformer_encoder_forward.1} parent=47 // pred_check
          %p308 = pneg %p39
        $region50: #{transformer_encoder_forward.1} parent=47 // pred_check_branch
          %310 = sbr.rel (%p308) target = $region52
        $region51: #{transformer_encoder_forward.1} parent=47 // pred_region
          %p311 = scmp.lt.s32.totalorder %s19, 1
          %s312 = scalar_select %p311, %s19, 1
          %s313 = smul.addr %s312, 8
          %s314 = scalar_lea.vmem %s0, %s313
        $region52: #{transformer_encoder_forward.1} parent=47 // pred_fallthru
          _
        // Predicated region
        $region53: #{transformer_encoder_forward.1} parent=47 // pred_check
          %p315 = pneg %p65
        $region54: #{transformer_encoder_forward.1} parent=47 // pred_check_branch
          %317 = sbr.rel (%p315) target = $region56
        $region55: #{transformer_encoder_forward.1} parent=47 // pred_region
          %p318 = scmp.lt.s32.totalorder %s19, 1
          %s319 = scalar_select %p318, %s19, 1
          %s320 = scalar_lea.vmem %s1, %s319
        $region56: #{transformer_encoder_forward.1} parent=47 // pred_fallthru
          _
      $region48: #{transformer_encoder_forward.1} parent=5 // pred_fallthru
        _
      %p321 = scmp.le.s32.totalorder 1, %s19
      %p322 = scmp.lt.s32.totalorder %s19, 3
      %p323 = pnand %p321, %p322
      %p324 = pneg %p323
      // Predicated region
      $region57: #{transformer_encoder_forward.1} parent=5 // pred_check
        _
      $region58: #{transformer_encoder_forward.1} parent=5 // pred_check_branch
        %326 = sbr.rel (%p323) target = $region60
      $region59: #{transformer_encoder_forward.1} parent=5 // pred_region
        %s327 = ssub.s32 %s19, 1
        %p328 = scmp.lt.s32.totalorder %s24, 1
        %s329 = scalar_select %p328, %s24, 1
        %s330 = smul.addr %s329, 8
        %s331 = scalar_lea.vmem %s0, %s330
        %p332 = pneg %p45
        %p333 = pneg %p42
        %p334 = scmp.lt.s32.totalorder %s24, 1
        %s335 = scalar_select %p334, %s24, 1
        %s336 = scalar_lea.vmem %s1, %s335
        %p337 = pneg %p71
        %p338 = pneg %p68
        %p339 = pneg %p92
        %p340 = pneg %p89
        %p341 = pneg %p113
        %p342 = pneg %p110
        %p343 = pneg %p134
        %p344 = pneg %p131
        %p345 = pneg %p155
        %p346 = pneg %p152
        %p347 = pneg %p176
        %p348 = pneg %p173
        %p349 = pneg %p197
        %p350 = pneg %p194
        %p351 = pneg %p218
        %p352 = pneg %p215
        %p353 = pneg %p239
        %p354 = pneg %p236
        %p355 = pneg %p265
        %p356 = pneg %p262
        %s357 = sand.u32 %s252, 1
        %s358 = scalar_lea.sflag [#allocation3], %s357
        %s359 = sand.u32 %s252, 1
        %s360 = smul.addr %s359, 8
        %s361 = scalar_lea.vmem [#allocation2], %s360
        %p362 = scmp.lt.s32.totalorder %s24, 1
        %s363 = scalar_select %p362, %s24, 1
        %s364 = smul.addr %s363, 8
        %s365 = scalar_lea.vmem %s0, %s364
        %p366 = scmp.lt.s32.totalorder %s24, 1
        %s367 = scalar_select %p366, %s24, 1
        %s368 = scalar_lea.vmem %s1, %s367
        %v370 = vld [vmem:[%s368] sm:$0x1]
        %v371 = vsub.f32 %v370, 1.0
        %v372 = vmul.f32 %v371, 1e+09
        %v373 = vld [vmem:[%s2] sm:$0x3]
        %v374 = vld [vmem:[%s365] sm:$0xff]
        %vm375 = vcmask 261120
        %v376 = vsel %vm375, %v374, 0.0
        %377 = vadd.xlane.f32.xlu0 %v376
        %v378 = vpop.xlane.xlu0 %377
        %v379 = vrcp.pop 32.0
        %v380 = vmul.f32 %v378, %v379
        %v381 = vsub.f32 %v374, %v380
        %v382 = vmul.f32 %v381, %v381
        %v383 = vsel %vm375, %v382, 0.0
        %384 = vadd.xlane.f32.xlu0 %v383
        %v385 = vpop.xlane.xlu0 %384
        %v386 = vmul.f32 %v385, %v379
        %v387 = vadd.f32 %v386, 1e-12
        %v388 = vrsqrt.pop %v387
        %v389 = vmul.f32 %v381, %v388
        %v390 = vlaneseq
        %v391 = vshrl.u32 %v390, 7
        %v392 = vsub.s32 0, %v391
        %v393 = vrot.slane %v373, %v392
        %v394 = vmul.f32 %v389, %v393
        %v395 = vlaneseq
        %v396 = vshrl.u32 %v395, 7
        %v397 = vsub.s32 1, %v396
        %v398 = vrot.slane %v373, %v397
        %v399 = vadd.f32 %v394, %v398
        %v400 = vld [vmem:[%s3] sm:$0xf]
        %v401 = vld [vmem:[%s3 + $0x4] sm:$0xf]
        %v402 = vld [vmem:[%s3 + $0x8] sm:$0xf]
        %v403 = vld [vmem:[%s3 + $0xc] sm:$0xf]
        %v404 = vld [vmem:[%s3 + $0x10] sm:$0xf]
        %v405 = vld [vmem:[%s3 + $0x14] sm:$0xf]
        %v406 = vld [vmem:[%s3 + $0x18] sm:$0xf]
        %v407 = vld [vmem:[%s3 + $0x1c] sm:$0xf]
        %v408 = vld [vmem:[%s3 + $0x20] sm:$0xf]
        %v409 = vld [vmem:[%s3 + $0x24] sm:$0xf]
        %v410 = vld [vmem:[%s3 + $0x28] sm:$0xf]
        %v411 = vld [vmem:[%s3 + $0x2c] sm:$0xf]
        %v412 = vld [vmem:[%s3 + $0x30] sm:$0xf]
        %v413 = vld [vmem:[%s3 + $0x34] sm:$0xf]
        %v414 = vld [vmem:[%s3 + $0x38] sm:$0xf]
        %v415 = vld [vmem:[%s3 + $0x3c] sm:$0xf]
        %v416 = vld [vmem:[%s4] sm:$0x1]
        %v417 = vld [vmem:[%s4 + $0x1] sm:$0x1]
        %v418 = vld [vmem:[%s4 + $0x2] sm:$0x1]
        %v419 = vld [vmem:[%s4 + $0x3] sm:$0x1]
        %v420 = vld [vmem:[%s5] sm:$0xf]
        %v421 = vld [vmem:[%s5 + $0x4] sm:$0xf]
        %v422 = vld [vmem:[%s5 + $0x8] sm:$0xf]
        %v423 = vld [vmem:[%s5 + $0xc] sm:$0xf]
        %v424 = vld [vmem:[%s6] sm:$0x3f]
        %v425 = vld [vmem:[%s7] sm:$0xf]
        %v426 = vld [vmem:[%s7 + $0x4] sm:$0xf]
        %v427 = vld [vmem:[%s7 + $0x8] sm:$0xf]
        %v428 = vld [vmem:[%s7 + $0xc] sm:$0xf]
        %v429 = vld [vmem:[%s8] sm:$0x1]
        %v430 = vld [vmem:[%s9] sm:$0xf]
        %v431 = vld [vmem:[%s9 + $0x4] sm:$0xf]
        %v432 = vld [vmem:[%s9 + $0x8] sm:$0xf]
        %v433 = vld [vmem:[%s9 + $0xc] sm:$0xf]
        %v434 = vld [vmem:[%s9 + $0x10] sm:$0xf]
        %v435 = vld [vmem:[%s9 + $0x14] sm:$0xf]
        %v436 = vld [vmem:[%s9 + $0x18] sm:$0xf]
        %v437 = vld [vmem:[%s9 + $0x1c] sm:$0xf]
        %v438 = vpack.c.bf16 %v399, %v399
        %v443 = vlaneseq
        %v444 = vshrl.u32 %v443, 7
        %v445 = vsub.s32 0, %v444
        %v446 = vrot.slane %v416, %v445
        %v447 = vlaneseq
        %v448 = vshrl.u32 %v447, 7
        %v449 = vsub.s32 0, %v448
        %v450 = vrot.slane %v417, %v449
        %v451 = vlaneseq
        %v452 = vshrl.u32 %v451, 7
        %v453 = vsub.s32 0, %v452
        %v454 = vrot.slane %v418, %v453
        %v455 = vlaneseq
        %v456 = vshrl.u32 %v455, 7
        %v457 = vsub.s32 0, %v456
        %v458 = vrot.slane %v419, %v457
        %v467 = vunpack.c.l.b16 %v400
        %v468 = vunpack.c.l.b16 %v401
        %v469 = vunpack.c.l.b16 %v402
        %v470 = vunpack.c.l.b16 %v403
        %v471 = vpack.c.b16 %v468, %v467
        %v472 = vpack.c.b16 %v470, %v469
        %v476 = vsel %vm375, %v438, 0
        %478 = vmatprep.subr.bf16.mxu0 0
        %479 = vmatpush1.bf16.msra.mxu0 0
        %480 = vmatprep.subr.bf16.mxu0 0
        %481 = vmatpush1.bf16.msra.mxu0 0
        %482 = vmatprep.subr.bf16.mxu0 0
        %483 = vmatpush1.bf16.msra.mxu0 0
        %484 = vmatprep.subr.bf16.mxu0 0
        %485 = vmatpush1.bf16.msra.mxu0 0
        %486 = vmatprep.subr.bf16.mxu0 0
        %487 = vmatpush1.bf16.msra.mxu0 0
        %488 = vmatprep.subr.bf16.mxu0 0
        %489 = vmatpush1.bf16.msra.mxu0 0
        %490 = vmatprep.subr.bf16.mxu0 0
        %491 = vmatpush1.bf16.msra.mxu0 %v472
        %492 = vmatprep.subr.bf16.mxu0 0
        %493 = vmatpush1.bf16.msra.mxu0 %v471
        %494 = vmatprep.subr.bf16.mxu0 0
        %495 = vmatpush2.bf16.msra.mxu0 0
        %496 = vmatprep.subr.bf16.mxu0 0
        %497 = vmatpush2.bf16.msra.mxu0 0
        %498 = vmatprep.subr.bf16.mxu0 0
        %499 = vmatpush2.bf16.msra.mxu0 0
        %500 = vmatprep.subr.bf16.mxu0 0
        %501 = vmatpush2.bf16.msra.mxu0 0
        %502 = vmatprep.subr.bf16.mxu0 0
        %503 = vmatpush2.bf16.msra.mxu0 0
        %504 = vmatprep.subr.bf16.mxu0 0
        %505 = vmatpush2.bf16.msra.mxu0 0
        %506 = vmatprep.subr.bf16.mxu0 0
        %507 = vmatpush2.bf16.msra.mxu0 0
        %508 = vmatprep.subr.bf16.mxu0 0
        %509 = vmatpush2.bf16.msra.mxu0 0
        %510 = vmatprep.mubr.bf16.mxu0 0
        %511 = vmatmul.mubr.bf16.gmra.mxu0 %v476
        %v512 = vpop.f32.mrf.mxu0
        %v513 = vadd.f32 %v446, %v512
        %v514 = vpop.f32.mrf.mxu0
        %v515 = vpop.f32.mrf.mxu0
        %v516 = vpop.f32.mrf.mxu0
        %517 = vdwg.mxu0
        %v522 = vunpack.c.l.b16 %v404
        %v523 = vunpack.c.l.b16 %v405
        %v524 = vunpack.c.l.b16 %v406
        %v525 = vunpack.c.l.b16 %v407
        %v526 = vpack.c.b16 %v523, %v522
        %v527 = vpack.c.b16 %v525, %v524
        %530 = vmatprep.subr.bf16.mxu0 0
        %531 = vmatpush1.bf16.msra.mxu0 0
        %532 = vmatprep.subr.bf16.mxu0 0
        %533 = vmatpush1.bf16.msra.mxu0 0
        %534 = vmatprep.subr.bf16.mxu0 0
        %535 = vmatpush1.bf16.msra.mxu0 0
        %536 = vmatprep.subr.bf16.mxu0 0
        %537 = vmatpush1.bf16.msra.mxu0 0
        %538 = vmatprep.subr.bf16.mxu0 0
        %539 = vmatpush1.bf16.msra.mxu0 0
        %540 = vmatprep.subr.bf16.mxu0 0
        %541 = vmatpush1.bf16.msra.mxu0 0
        %542 = vmatprep.subr.bf16.mxu0 0
        %543 = vmatpush1.bf16.msra.mxu0 %v527
        %544 = vmatprep.subr.bf16.mxu0 0
        %545 = vmatpush1.bf16.msra.mxu0 %v526
        %546 = vmatprep.subr.bf16.mxu0 0
        %547 = vmatpush2.bf16.msra.mxu0 0
        %548 = vmatprep.subr.bf16.mxu0 0
        %549 = vmatpush2.bf16.msra.mxu0 0
        %550 = vmatprep.subr.bf16.mxu0 0
        %551 = vmatpush2.bf16.msra.mxu0 0
        %552 = vmatprep.subr.bf16.mxu0 0
        %553 = vmatpush2.bf16.msra.mxu0 0
        %554 = vmatprep.subr.bf16.mxu0 0
        %555 = vmatpush2.bf16.msra.mxu0 0
        %556 = vmatprep.subr.bf16.mxu0 0
        %557 = vmatpush2.bf16.msra.mxu0 0
        %558 = vmatprep.subr.bf16.mxu0 0
        %559 = vmatpush2.bf16.msra.mxu0 0
        %560 = vmatprep.subr.bf16.mxu0 0
        %561 = vmatpush2.bf16.msra.mxu0 0
        %562 = vmatprep.mubr.bf16.mxu0 0
        %563 = vmatmul.mubr.bf16.gmra.mxu0 %v476
        %v564 = vpop.f32.mrf.mxu0
        %v565 = vadd.f32 %v450, %v564
        %v566 = vpop.f32.mrf.mxu0
        %v567 = vpop.f32.mrf.mxu0
        %v568 = vpop.f32.mrf.mxu0
        %569 = vdwg.mxu0
        %v574 = vunpack.c.l.b16 %v408
        %v575 = vunpack.c.l.b16 %v409
        %v576 = vunpack.c.l.b16 %v410
        %v577 = vunpack.c.l.b16 %v411
        %v578 = vpack.c.b16 %v575, %v574
        %v579 = vpack.c.b16 %v577, %v576
        %582 = vmatprep.subr.bf16.mxu0 0
        %583 = vmatpush1.bf16.msra.mxu0 0
        %584 = vmatprep.subr.bf16.mxu0 0
        %585 = vmatpush1.bf16.msra.mxu0 0
        %586 = vmatprep.subr.bf16.mxu0 0
        %587 = vmatpush1.bf16.msra.mxu0 0
        %588 = vmatprep.subr.bf16.mxu0 0
        %589 = vmatpush1.bf16.msra.mxu0 0
        %590 = vmatprep.subr.bf16.mxu0 0
        %591 = vmatpush1.bf16.msra.mxu0 0
        %592 = vmatprep.subr.bf16.mxu0 0
        %593 = vmatpush1.bf16.msra.mxu0 0
        %594 = vmatprep.subr.bf16.mxu0 0
        %595 = vmatpush1.bf16.msra.mxu0 %v579
        %596 = vmatprep.subr.bf16.mxu0 0
        %597 = vmatpush1.bf16.msra.mxu0 %v578
        %598 = vmatprep.subr.bf16.mxu0 0
        %599 = vmatpush2.bf16.msra.mxu0 0
        %600 = vmatprep.subr.bf16.mxu0 0
        %601 = vmatpush2.bf16.msra.mxu0 0
        %602 = vmatprep.subr.bf16.mxu0 0
        %603 = vmatpush2.bf16.msra.mxu0 0
        %604 = vmatprep.subr.bf16.mxu0 0
        %605 = vmatpush2.bf16.msra.mxu0 0
        %606 = vmatprep.subr.bf16.mxu0 0
        %607 = vmatpush2.bf16.msra.mxu0 0
        %608 = vmatprep.subr.bf16.mxu0 0
        %609 = vmatpush2.bf16.msra.mxu0 0
        %610 = vmatprep.subr.bf16.mxu0 0
        %611 = vmatpush2.bf16.msra.mxu0 0
        %612 = vmatprep.subr.bf16.mxu0 0
        %613 = vmatpush2.bf16.msra.mxu0 0
        %614 = vmatprep.mubr.bf16.mxu0 0
        %615 = vmatmul.mubr.bf16.gmra.mxu0 %v476
        %v616 = vpop.f32.mrf.mxu0
        %v617 = vadd.f32 %v454, %v616
        %v618 = vpop.f32.mrf.mxu0
        %v619 = vpop.f32.mrf.mxu0
        %v620 = vpop.f32.mrf.mxu0
        %621 = vdwg.mxu0
        %v626 = vunpack.c.l.b16 %v412
        %v627 = vunpack.c.l.b16 %v413
        %v628 = vunpack.c.l.b16 %v414
        %v629 = vunpack.c.l.b16 %v415
        %v630 = vpack.c.b16 %v627, %v626
        %v631 = vpack.c.b16 %v629, %v628
        %634 = vmatprep.subr.bf16.mxu0 0
        %635 = vmatpush1.bf16.msra.mxu0 0
        %636 = vmatprep.subr.bf16.mxu0 0
        %637 = vmatpush1.bf16.msra.mxu0 0
        %638 = vmatprep.subr.bf16.mxu0 0
        %639 = vmatpush1.bf16.msra.mxu0 0
        %640 = vmatprep.subr.bf16.mxu0 0
        %641 = vmatpush1.bf16.msra.mxu0 0
        %642 = vmatprep.subr.bf16.mxu0 0
        %643 = vmatpush1.bf16.msra.mxu0 0
        %644 = vmatprep.subr.bf16.mxu0 0
        %645 = vmatpush1.bf16.msra.mxu0 0
        %646 = vmatprep.subr.bf16.mxu0 0
        %647 = vmatpush1.bf16.msra.mxu0 %v631
        %648 = vmatprep.subr.bf16.mxu0 0
        %649 = vmatpush1.bf16.msra.mxu0 %v630
        %650 = vmatprep.subr.bf16.mxu0 0
        %651 = vmatpush2.bf16.msra.mxu0 0
        %652 = vmatprep.subr.bf16.mxu0 0
        %653 = vmatpush2.bf16.msra.mxu0 0
        %654 = vmatprep.subr.bf16.mxu0 0
        %655 = vmatpush2.bf16.msra.mxu0 0
        %656 = vmatprep.subr.bf16.mxu0 0
        %657 = vmatpush2.bf16.msra.mxu0 0
        %658 = vmatprep.subr.bf16.mxu0 0
        %659 = vmatpush2.bf16.msra.mxu0 0
        %660 = vmatprep.subr.bf16.mxu0 0
        %661 = vmatpush2.bf16.msra.mxu0 0
        %662 = vmatprep.subr.bf16.mxu0 0
        %663 = vmatpush2.bf16.msra.mxu0 0
        %664 = vmatprep.subr.bf16.mxu0 0
        %665 = vmatpush2.bf16.msra.mxu0 0
        %666 = vmatprep.mubr.bf16.mxu0 0
        %667 = vmatmul.mubr.bf16.gmra.mxu0 %v476
        %v668 = vpop.f32.mrf.mxu0
        %v669 = vadd.f32 %v458, %v668
        %v670 = vpop.f32.mrf.mxu0
        %v671 = vpop.f32.mrf.mxu0
        %v672 = vpop.f32.mrf.mxu0
        %673 = vdwg.mxu0
        %v674 = vpack.c.bf16 %v513, %v513
        %v675 = vpack.c.bf16 %v565, %v565
        %v676 = vpack.c.bf16 %v617, %v617
        %v677 = vpack.c.bf16 %v669, %v669
        %679 = vrot.lane.b32.xlu0 %v674, 120
        %v680 = vpop.permute.xlu0 %679
        %vm681 = vcmask 64512
        %v683 = vsel %vm681, %v674, 0
        %v686 = vsel %vm681, %v680, 0
        %688 = vmatprep.subr.bf16.mxu0 0
        %689 = vmatpush1.bf16.xpose.msra.mxu0 0
        %690 = vmatprep.subr.bf16.mxu0 0
        %691 = vmatpush1.bf16.xpose.msra.mxu0 0
        %692 = vmatprep.subr.bf16.mxu0 0
        %693 = vmatpush1.bf16.xpose.msra.mxu0 0
        %694 = vmatprep.subr.bf16.mxu0 0
        %695 = vmatpush1.bf16.xpose.msra.mxu0 0
        %696 = vmatprep.subr.bf16.mxu0 0
        %697 = vmatpush1.bf16.xpose.msra.mxu0 0
        %698 = vmatprep.subr.bf16.mxu0 0
        %699 = vmatpush1.bf16.xpose.msra.mxu0 0
        %700 = vmatprep.subr.bf16.mxu0 0
        %701 = vmatpush1.bf16.xpose.msra.mxu0 0
        %702 = vmatprep.subr.bf16.mxu0 0
        %703 = vmatpush1.bf16.xpose.msra.mxu0 %v686
        %704 = vmatprep.subr.bf16.mxu0 0
        %705 = vmatpush2.bf16.xpose.msra.mxu0 0
        %706 = vmatprep.subr.bf16.mxu0 0
        %707 = vmatpush2.bf16.xpose.msra.mxu0 0
        %708 = vmatprep.subr.bf16.mxu0 0
        %709 = vmatpush2.bf16.xpose.msra.mxu0 0
        %710 = vmatprep.subr.bf16.mxu0 0
        %711 = vmatpush2.bf16.xpose.msra.mxu0 0
        %712 = vmatprep.subr.bf16.mxu0 0
        %713 = vmatpush2.bf16.xpose.msra.mxu0 0
        %714 = vmatprep.subr.bf16.mxu0 0
        %715 = vmatpush2.bf16.xpose.msra.mxu0 0
        %716 = vmatprep.subr.bf16.mxu0 0
        %717 = vmatpush2.bf16.xpose.msra.mxu0 0
        %718 = vmatprep.subr.bf16.mxu0 0
        %719 = vmatpush2.bf16.xpose.msra.mxu0 0
        %720 = vmatprep.mubr.bf16.mxu0 0
        %721 = vmatmul.mubr.bf16.gmra.mxu0 %v683
        %v722 = vpop.f32.mrf.mxu0
        %v723 = vadd.f32 0.0, %v722
        %v724 = vpop.f32.mrf.mxu0
        %v725 = vpop.f32.mrf.mxu0
        %v726 = vpop.f32.mrf.mxu0
        %727 = vdwg.mxu0
        %729 = vrot.lane.b32.xlu0 %v675, 120
        %v730 = vpop.permute.xlu0 %729
        %v732 = vsel %vm681, %v675, 0
        %v735 = vsel %vm681, %v730, 0
        %737 = vmatprep.subr.bf16.mxu0 0
        %738 = vmatpush1.bf16.xpose.msra.mxu0 0
        %739 = vmatprep.subr.bf16.mxu0 0
        %740 = vmatpush1.bf16.xpose.msra.mxu0 0
        %741 = vmatprep.subr.bf16.mxu0 0
        %742 = vmatpush1.bf16.xpose.msra.mxu0 0
        %743 = vmatprep.subr.bf16.mxu0 0
        %744 = vmatpush1.bf16.xpose.msra.mxu0 0
        %745 = vmatprep.subr.bf16.mxu0 0
        %746 = vmatpush1.bf16.xpose.msra.mxu0 0
        %747 = vmatprep.subr.bf16.mxu0 0
        %748 = vmatpush1.bf16.xpose.msra.mxu0 0
        %749 = vmatprep.subr.bf16.mxu0 0
        %750 = vmatpush1.bf16.xpose.msra.mxu0 0
        %751 = vmatprep.subr.bf16.mxu0 0
        %752 = vmatpush1.bf16.xpose.msra.mxu0 %v735
        %753 = vmatprep.subr.bf16.mxu0 0
        %754 = vmatpush2.bf16.xpose.msra.mxu0 0
        %755 = vmatprep.subr.bf16.mxu0 0
        %756 = vmatpush2.bf16.xpose.msra.mxu0 0
        %757 = vmatprep.subr.bf16.mxu0 0
        %758 = vmatpush2.bf16.xpose.msra.mxu0 0
        %759 = vmatprep.subr.bf16.mxu0 0
        %760 = vmatpush2.bf16.xpose.msra.mxu0 0
        %761 = vmatprep.subr.bf16.mxu0 0
        %762 = vmatpush2.bf16.xpose.msra.mxu0 0
        %763 = vmatprep.subr.bf16.mxu0 0
        %764 = vmatpush2.bf16.xpose.msra.mxu0 0
        %765 = vmatprep.subr.bf16.mxu0 0
        %766 = vmatpush2.bf16.xpose.msra.mxu0 0
        %767 = vmatprep.subr.bf16.mxu0 0
        %768 = vmatpush2.bf16.xpose.msra.mxu0 0
        %769 = vmatprep.mubr.bf16.mxu0 0
        %770 = vmatmul.mubr.bf16.gmra.mxu0 %v732
        %v771 = vpop.f32.mrf.mxu0
        %v772 = vadd.f32 0.0, %v771
        %v773 = vpop.f32.mrf.mxu0
        %v774 = vpop.f32.mrf.mxu0
        %v775 = vpop.f32.mrf.mxu0
        %776 = vdwg.mxu0
        %778 = vrot.lane.b32.xlu0 %v676, 120
        %v779 = vpop.permute.xlu0 %778
        %v781 = vsel %vm681, %v676, 0
        %v784 = vsel %vm681, %v779, 0
        %786 = vmatprep.subr.bf16.mxu0 0
        %787 = vmatpush1.bf16.xpose.msra.mxu0 0
        %788 = vmatprep.subr.bf16.mxu0 0
        %789 = vmatpush1.bf16.xpose.msra.mxu0 0
        %790 = vmatprep.subr.bf16.mxu0 0
        %791 = vmatpush1.bf16.xpose.msra.mxu0 0
        %792 = vmatprep.subr.bf16.mxu0 0
        %793 = vmatpush1.bf16.xpose.msra.mxu0 0
        %794 = vmatprep.subr.bf16.mxu0 0
        %795 = vmatpush1.bf16.xpose.msra.mxu0 0
        %796 = vmatprep.subr.bf16.mxu0 0
        %797 = vmatpush1.bf16.xpose.msra.mxu0 0
        %798 = vmatprep.subr.bf16.mxu0 0
        %799 = vmatpush1.bf16.xpose.msra.mxu0 0
        %800 = vmatprep.subr.bf16.mxu0 0
        %801 = vmatpush1.bf16.xpose.msra.mxu0 %v784
        %802 = vmatprep.subr.bf16.mxu0 0
        %803 = vmatpush2.bf16.xpose.msra.mxu0 0
        %804 = vmatprep.subr.bf16.mxu0 0
        %805 = vmatpush2.bf16.xpose.msra.mxu0 0
        %806 = vmatprep.subr.bf16.mxu0 0
        %807 = vmatpush2.bf16.xpose.msra.mxu0 0
        %808 = vmatprep.subr.bf16.mxu0 0
        %809 = vmatpush2.bf16.xpose.msra.mxu0 0
        %810 = vmatprep.subr.bf16.mxu0 0
        %811 = vmatpush2.bf16.xpose.msra.mxu0 0
        %812 = vmatprep.subr.bf16.mxu0 0
        %813 = vmatpush2.bf16.xpose.msra.mxu0 0
        %814 = vmatprep.subr.bf16.mxu0 0
        %815 = vmatpush2.bf16.xpose.msra.mxu0 0
        %816 = vmatprep.subr.bf16.mxu0 0
        %817 = vmatpush2.bf16.xpose.msra.mxu0 0
        %818 = vmatprep.mubr.bf16.mxu0 0
        %819 = vmatmul.mubr.bf16.gmra.mxu0 %v781
        %v820 = vpop.f32.mrf.mxu0
        %v821 = vadd.f32 0.0, %v820
        %v822 = vpop.f32.mrf.mxu0
        %v823 = vpop.f32.mrf.mxu0
        %v824 = vpop.f32.mrf.mxu0
        %825 = vdwg.mxu0
        %827 = vrot.lane.b32.xlu0 %v677, 120
        %v828 = vpop.permute.xlu0 %827
        %v830 = vsel %vm681, %v677, 0
        %v833 = vsel %vm681, %v828, 0
        %835 = vmatprep.subr.bf16.mxu0 0
        %836 = vmatpush1.bf16.xpose.msra.mxu0 0
        %837 = vmatprep.subr.bf16.mxu0 0
        %838 = vmatpush1.bf16.xpose.msra.mxu0 0
        %839 = vmatprep.subr.bf16.mxu0 0
        %840 = vmatpush1.bf16.xpose.msra.mxu0 0
        %841 = vmatprep.subr.bf16.mxu0 0
        %842 = vmatpush1.bf16.xpose.msra.mxu0 0
        %843 = vmatprep.subr.bf16.mxu0 0
        %844 = vmatpush1.bf16.xpose.msra.mxu0 0
        %845 = vmatprep.subr.bf16.mxu0 0
        %846 = vmatpush1.bf16.xpose.msra.mxu0 0
        %847 = vmatprep.subr.bf16.mxu0 0
        %848 = vmatpush1.bf16.xpose.msra.mxu0 0
        %849 = vmatprep.subr.bf16.mxu0 0
        %850 = vmatpush1.bf16.xpose.msra.mxu0 %v833
        %851 = vmatprep.subr.bf16.mxu0 0
        %852 = vmatpush2.bf16.xpose.msra.mxu0 0
        %853 = vmatprep.subr.bf16.mxu0 0
        %854 = vmatpush2.bf16.xpose.msra.mxu0 0
        %855 = vmatprep.subr.bf16.mxu0 0
        %856 = vmatpush2.bf16.xpose.msra.mxu0 0
        %857 = vmatprep.subr.bf16.mxu0 0
        %858 = vmatpush2.bf16.xpose.msra.mxu0 0
        %859 = vmatprep.subr.bf16.mxu0 0
        %860 = vmatpush2.bf16.xpose.msra.mxu0 0
        %861 = vmatprep.subr.bf16.mxu0 0
        %862 = vmatpush2.bf16.xpose.msra.mxu0 0
        %863 = vmatprep.subr.bf16.mxu0 0
        %864 = vmatpush2.bf16.xpose.msra.mxu0 0
        %865 = vmatprep.subr.bf16.mxu0 0
        %866 = vmatpush2.bf16.xpose.msra.mxu0 0
        %867 = vmatprep.mubr.bf16.mxu0 0
        %868 = vmatmul.mubr.bf16.gmra.mxu0 %v830
        %v869 = vpop.f32.mrf.mxu0
        %v870 = vadd.f32 0.0, %v869
        %v871 = vpop.f32.mrf.mxu0
        %v872 = vpop.f32.mrf.mxu0
        %v873 = vpop.f32.mrf.mxu0
        %874 = vdwg.mxu0
        %v875 = vmul.f32 %v723, 0.35355338
        %v876 = vmul.f32 %v772, 0.35355338
        %v877 = vmul.f32 %v821, 0.35355338
        %v878 = vmul.f32 %v870, 0.35355338
        %v880 = vlaneseq
        %v881 = vshrl.u32 %v880, 7
        %v882 = vsub.s32 0, %v881
        %v883 = vrot.slane %v372, %v882
        %v885 = vadd.f32 %v875, %v883
        %v886 = vadd.f32 %v876, %v883
        %v887 = vadd.f32 %v877, %v883
        %v888 = vadd.f32 %v878, %v883
        %v889 = vsel %vm681, %v885, -inf
        %890 = vmax.xlane.f32.xlu0 %v889
        %v891 = vpop.xlane.xlu0 %890
        %v892 = vsel %vm681, %v886, -inf
        %893 = vmax.xlane.f32.xlu0 %v892
        %v894 = vpop.xlane.xlu0 %893
        %v895 = vsel %vm681, %v887, -inf
        %896 = vmax.xlane.f32.xlu0 %v895
        %v897 = vpop.xlane.xlu0 %896
        %v898 = vsel %vm681, %v888, -inf
        %899 = vmax.xlane.f32.xlu0 %v898
        %v900 = vpop.xlane.xlu0 %899
        %v901 = vsub.f32 %v885, %v891
        %v902 = vsub.f32 %v886, %v894
        %v903 = vsub.f32 %v887, %v897
        %v904 = vsub.f32 %v888, %v900
        %v905 = vmul.f32 %v901, 1.442695
        %v906 = vpow.pop %v905
        %v907 = vmul.f32 %v902, 1.442695
        %v908 = vpow.pop %v907
        %v909 = vmul.f32 %v903, 1.442695
        %v910 = vpow.pop %v909
        %v911 = vmul.f32 %v904, 1.442695
        %v912 = vpow.pop %v911
        %v913 = vsel %vm681, %v906, 0.0
        %914 = vadd.xlane.f32.xlu0 %v913
        %v915 = vpop.xlane.xlu0 %914
        %v916 = vsel %vm681, %v908, 0.0
        %917 = vadd.xlane.f32.xlu0 %v916
        %v918 = vpop.xlane.xlu0 %917
        %v919 = vsel %vm681, %v910, 0.0
        %920 = vadd.xlane.f32.xlu0 %v919
        %v921 = vpop.xlane.xlu0 %920
        %v922 = vsel %vm681, %v912, 0.0
        %923 = vadd.xlane.f32.xlu0 %v922
        %v924 = vpop.xlane.xlu0 %923
        %v925 = vrcp.pop %v915
        %v926 = vrcp.pop %v918
        %v927 = vrcp.pop %v921
        %v928 = vrcp.pop %v924
        %v929 = vmul.f32 %v906, %v925
        %v930 = vmul.f32 %v908, %v926
        %v931 = vmul.f32 %v910, %v927
        %v932 = vmul.f32 %v912, %v928
        %v933 = vpack.c.bf16 %v929, %v929
        %v934 = vpack.c.bf16 %v930, %v930
        %v935 = vpack.c.bf16 %v931, %v931
        %v936 = vpack.c.bf16 %v932, %v932
        %937 = vrot.lane.b32.xlu0 %v674, 112
        %v938 = vpop.permute.xlu0 %937
        %v940 = vsel %vm681, %v933, 0
        %vm942 = vcmask 1043456
        %v944 = vsel %vm942, %v938, 0
        %946 = vmatprep.subr.bf16.mxu0 0
        %947 = vmatpush1.bf16.msra.mxu0 0
        %948 = vmatprep.subr.bf16.mxu0 0
        %949 = vmatpush1.bf16.msra.mxu0 0
        %950 = vmatprep.subr.bf16.mxu0 0
        %951 = vmatpush1.bf16.msra.mxu0 0
        %952 = vmatprep.subr.bf16.mxu0 0
        %953 = vmatpush1.bf16.msra.mxu0 0
        %954 = vmatprep.subr.bf16.mxu0 0
        %955 = vmatpush1.bf16.msra.mxu0 0
        %956 = vmatprep.subr.bf16.mxu0 0
        %957 = vmatpush1.bf16.msra.mxu0 0
        %958 = vmatprep.subr.bf16.mxu0 0
        %959 = vmatpush1.bf16.msra.mxu0 0
        %960 = vmatprep.subr.bf16.mxu0 0
        %961 = vmatpush1.bf16.msra.mxu0 %v944
        %962 = vmatprep.subr.bf16.mxu0 0
        %963 = vmatpush2.bf16.msra.mxu0 0
        %964 = vmatprep.subr.bf16.mxu0 0
        %965 = vmatpush2.bf16.msra.mxu0 0
        %966 = vmatprep.subr.bf16.mxu0 0
        %967 = vmatpush2.bf16.msra.mxu0 0
        %968 = vmatprep.subr.bf16.mxu0 0
        %969 = vmatpush2.bf16.msra.mxu0 0
        %970 = vmatprep.subr.bf16.mxu0 0
        %971 = vmatpush2.bf16.msra.mxu0 0
        %972 = vmatprep.subr.bf16.mxu0 0
        %973 = vmatpush2.bf16.msra.mxu0 0
        %974 = vmatprep.subr.bf16.mxu0 0
        %975 = vmatpush2.bf16.msra.mxu0 0
        %976 = vmatprep.subr.bf16.mxu0 0
        %977 = vmatpush2.bf16.msra.mxu0 0
        %978 = vmatprep.mubr.bf16.mxu0 0
        %979 = vmatmul.mubr.bf16.gmra.mxu0 %v940
        %v980 = vpop.f32.mrf.mxu0
        %v981 = vadd.f32 0.0, %v980
        %v982 = vpop.f32.mrf.mxu0
        %v983 = vpop.f32.mrf.mxu0
        %v984 = vpop.f32.mrf.mxu0
        %985 = vdwg.mxu0
        %986 = vrot.lane.b32.xlu0 %v675, 112
        %v987 = vpop.permute.xlu0 %986
        %v989 = vsel %vm681, %v934, 0
        %v992 = vsel %vm942, %v987, 0
        %994 = vmatprep.subr.bf16.mxu0 0
        %995 = vmatpush1.bf16.msra.mxu0 0
        %996 = vmatprep.subr.bf16.mxu0 0
        %997 = vmatpush1.bf16.msra.mxu0 0
        %998 = vmatprep.subr.bf16.mxu0 0
        %999 = vmatpush1.bf16.msra.mxu0 0
        %1000 = vmatprep.subr.bf16.mxu0 0
        %1001 = vmatpush1.bf16.msra.mxu0 0
        %1002 = vmatprep.subr.bf16.mxu0 0
        %1003 = vmatpush1.bf16.msra.mxu0 0
        %1004 = vmatprep.subr.bf16.mxu0 0
        %1005 = vmatpush1.bf16.msra.mxu0 0
        %1006 = vmatprep.subr.bf16.mxu0 0
        %1007 = vmatpush1.bf16.msra.mxu0 0
        %1008 = vmatprep.subr.bf16.mxu0 0
        %1009 = vmatpush1.bf16.msra.mxu0 %v992
        %1010 = vmatprep.subr.bf16.mxu0 0
        %1011 = vmatpush2.bf16.msra.mxu0 0
        %1012 = vmatprep.subr.bf16.mxu0 0
        %1013 = vmatpush2.bf16.msra.mxu0 0
        %1014 = vmatprep.subr.bf16.mxu0 0
        %1015 = vmatpush2.bf16.msra.mxu0 0
        %1016 = vmatprep.subr.bf16.mxu0 0
        %1017 = vmatpush2.bf16.msra.mxu0 0
        %1018 = vmatprep.subr.bf16.mxu0 0
        %1019 = vmatpush2.bf16.msra.mxu0 0
        %1020 = vmatprep.subr.bf16.mxu0 0
        %1021 = vmatpush2.bf16.msra.mxu0 0
        %1022 = vmatprep.subr.bf16.mxu0 0
        %1023 = vmatpush2.bf16.msra.mxu0 0
        %1024 = vmatprep.subr.bf16.mxu0 0
        %1025 = vmatpush2.bf16.msra.mxu0 0
        %1026 = vmatprep.mubr.bf16.mxu0 0
        %1027 = vmatmul.mubr.bf16.gmra.mxu0 %v989
        %v1028 = vpop.f32.mrf.mxu0
        %v1029 = vadd.f32 0.0, %v1028
        %v1030 = vpop.f32.mrf.mxu0
        %v1031 = vpop.f32.mrf.mxu0
        %v1032 = vpop.f32.mrf.mxu0
        %1033 = vdwg.mxu0
        %1034 = vrot.lane.b32.xlu0 %v676, 112
        %v1035 = vpop.permute.xlu0 %1034
        %v1037 = vsel %vm681, %v935, 0
        %v1040 = vsel %vm942, %v1035, 0
        %1042 = vmatprep.subr.bf16.mxu0 0
        %1043 = vmatpush1.bf16.msra.mxu0 0
        %1044 = vmatprep.subr.bf16.mxu0 0
        %1045 = vmatpush1.bf16.msra.mxu0 0
        %1046 = vmatprep.subr.bf16.mxu0 0
        %1047 = vmatpush1.bf16.msra.mxu0 0
        %1048 = vmatprep.subr.bf16.mxu0 0
        %1049 = vmatpush1.bf16.msra.mxu0 0
        %1050 = vmatprep.subr.bf16.mxu0 0
        %1051 = vmatpush1.bf16.msra.mxu0 0
        %1052 = vmatprep.subr.bf16.mxu0 0
        %1053 = vmatpush1.bf16.msra.mxu0 0
        %1054 = vmatprep.subr.bf16.mxu0 0
        %1055 = vmatpush1.bf16.msra.mxu0 0
        %1056 = vmatprep.subr.bf16.mxu0 0
        %1057 = vmatpush1.bf16.msra.mxu0 %v1040
        %1058 = vmatprep.subr.bf16.mxu0 0
        %1059 = vmatpush2.bf16.msra.mxu0 0
        %1060 = vmatprep.subr.bf16.mxu0 0
        %1061 = vmatpush2.bf16.msra.mxu0 0
        %1062 = vmatprep.subr.bf16.mxu0 0
        %1063 = vmatpush2.bf16.msra.mxu0 0
        %1064 = vmatprep.subr.bf16.mxu0 0
        %1065 = vmatpush2.bf16.msra.mxu0 0
        %1066 = vmatprep.subr.bf16.mxu0 0
        %1067 = vmatpush2.bf16.msra.mxu0 0
        %1068 = vmatprep.subr.bf16.mxu0 0
        %1069 = vmatpush2.bf16.msra.mxu0 0
        %1070 = vmatprep.subr.bf16.mxu0 0
        %1071 = vmatpush2.bf16.msra.mxu0 0
        %1072 = vmatprep.subr.bf16.mxu0 0
        %1073 = vmatpush2.bf16.msra.mxu0 0
        %1074 = vmatprep.mubr.bf16.mxu0 0
        %1075 = vmatmul.mubr.bf16.gmra.mxu0 %v1037
        %v1076 = vpop.f32.mrf.mxu0
        %v1077 = vadd.f32 0.0, %v1076
        %v1078 = vpop.f32.mrf.mxu0
        %v1079 = vpop.f32.mrf.mxu0
        %v1080 = vpop.f32.mrf.mxu0
        %1081 = vdwg.mxu0
        %1082 = vrot.lane.b32.xlu0 %v677, 112
        %v1083 = vpop.permute.xlu0 %1082
        %v1085 = vsel %vm681, %v936, 0
        %v1088 = vsel %vm942, %v1083, 0
        %1090 = vmatprep.subr.bf16.mxu0 0
        %1091 = vmatpush1.bf16.msra.mxu0 0
        %1092 = vmatprep.subr.bf16.mxu0 0
        %1093 = vmatpush1.bf16.msra.mxu0 0
        %1094 = vmatprep.subr.bf16.mxu0 0
        %1095 = vmatpush1.bf16.msra.mxu0 0
        %1096 = vmatprep.subr.bf16.mxu0 0
        %1097 = vmatpush1.bf16.msra.mxu0 0
        %1098 = vmatprep.subr.bf16.mxu0 0
        %1099 = vmatpush1.bf16.msra.mxu0 0
        %1100 = vmatprep.subr.bf16.mxu0 0
        %1101 = vmatpush1.bf16.msra.mxu0 0
        %1102 = vmatprep.subr.bf16.mxu0 0
        %1103 = vmatpush1.bf16.msra.mxu0 0
        %1104 = vmatprep.subr.bf16.mxu0 0
        %1105 = vmatpush1.bf16.msra.mxu0 %v1088
        %1106 = vmatprep.subr.bf16.mxu0 0
        %1107 = vmatpush2.bf16.msra.mxu0 0
        %1108 = vmatprep.subr.bf16.mxu0 0
        %1109 = vmatpush2.bf16.msra.mxu0 0
        %1110 = vmatprep.subr.bf16.mxu0 0
        %1111 = vmatpush2.bf16.msra.mxu0 0
        %1112 = vmatprep.subr.bf16.mxu0 0
        %1113 = vmatpush2.bf16.msra.mxu0 0
        %1114 = vmatprep.subr.bf16.mxu0 0
        %1115 = vmatpush2.bf16.msra.mxu0 0
        %1116 = vmatprep.subr.bf16.mxu0 0
        %1117 = vmatpush2.bf16.msra.mxu0 0
        %1118 = vmatprep.subr.bf16.mxu0 0
        %1119 = vmatpush2.bf16.msra.mxu0 0
        %1120 = vmatprep.subr.bf16.mxu0 0
        %1121 = vmatpush2.bf16.msra.mxu0 0
        %1122 = vmatprep.mubr.bf16.mxu0 0
        %1123 = vmatmul.mubr.bf16.gmra.mxu0 %v1085
        %v1124 = vpop.f32.mrf.mxu0
        %v1125 = vadd.f32 0.0, %v1124
        %v1126 = vpop.f32.mrf.mxu0
        %v1127 = vpop.f32.mrf.mxu0
        %v1128 = vpop.f32.mrf.mxu0
        %1129 = vdwg.mxu0
        %v1130 = vpack.c.bf16 %v981, %v981
        %v1131 = vpack.c.bf16 %v1029, %v1029
        %v1132 = vpack.c.bf16 %v1077, %v1077
        %v1133 = vpack.c.bf16 %v1125, %v1125
        %v1135 = vsel %vm681, %v1130, 0
        %v1138 = vsel %vm942, %v420, 0
        %1140 = vmatprep.subr.bf16.mxu0 0
        %1141 = vmatpush1.bf16.msra.mxu0 0
        %1142 = vmatprep.subr.bf16.mxu0 0
        %1143 = vmatpush1.bf16.msra.mxu0 0
        %1144 = vmatprep.subr.bf16.mxu0 0
        %1145 = vmatpush1.bf16.msra.mxu0 0
        %1146 = vmatprep.subr.bf16.mxu0 0
        %1147 = vmatpush1.bf16.msra.mxu0 0
        %1148 = vmatprep.subr.bf16.mxu0 0
        %1149 = vmatpush1.bf16.msra.mxu0 0
        %1150 = vmatprep.subr.bf16.mxu0 0
        %1151 = vmatpush1.bf16.msra.mxu0 0
        %1152 = vmatprep.subr.bf16.mxu0 0
        %1153 = vmatpush1.bf16.msra.mxu0 0
        %1154 = vmatprep.subr.bf16.mxu0 0
        %1155 = vmatpush1.bf16.msra.mxu0 %v1138
        %1156 = vmatprep.subr.bf16.mxu0 0
        %1157 = vmatpush2.bf16.msra.mxu0 0
        %1158 = vmatprep.subr.bf16.mxu0 0
        %1159 = vmatpush2.bf16.msra.mxu0 0
        %1160 = vmatprep.subr.bf16.mxu0 0
        %1161 = vmatpush2.bf16.msra.mxu0 0
        %1162 = vmatprep.subr.bf16.mxu0 0
        %1163 = vmatpush2.bf16.msra.mxu0 0
        %1164 = vmatprep.subr.bf16.mxu0 0
        %1165 = vmatpush2.bf16.msra.mxu0 0
        %1166 = vmatprep.subr.bf16.mxu0 0
        %1167 = vmatpush2.bf16.msra.mxu0 0
        %1168 = vmatprep.subr.bf16.mxu0 0
        %1169 = vmatpush2.bf16.msra.mxu0 0
        %1170 = vmatprep.subr.bf16.mxu0 0
        %1171 = vmatpush2.bf16.msra.mxu0 0
        %1172 = vmatprep.mubr.bf16.mxu0 0
        %1173 = vmatmul.mubr.bf16.gmra.mxu0 %v1135
        %v1174 = vpop.f32.mrf.mxu0
        %v1175 = vadd.f32 0.0, %v1174
        %v1176 = vpop.f32.mrf.mxu0
        %v1177 = vpop.f32.mrf.mxu0
        %v1178 = vpop.f32.mrf.mxu0
        %1179 = vdwg.mxu0
        %v1181 = vsel %vm681, %v1131, 0
        %v1184 = vsel %vm942, %v421, 0
        %1186 = vmatprep.subr.bf16.mxu0 0
        %1187 = vmatpush1.bf16.msra.mxu0 0
        %1188 = vmatprep.subr.bf16.mxu0 0
        %1189 = vmatpush1.bf16.msra.mxu0 0
        %1190 = vmatprep.subr.bf16.mxu0 0
        %1191 = vmatpush1.bf16.msra.mxu0 0
        %1192 = vmatprep.subr.bf16.mxu0 0
        %1193 = vmatpush1.bf16.msra.mxu0 0
        %1194 = vmatprep.subr.bf16.mxu0 0
        %1195 = vmatpush1.bf16.msra.mxu0 0
        %1196 = vmatprep.subr.bf16.mxu0 0
        %1197 = vmatpush1.bf16.msra.mxu0 0
        %1198 = vmatprep.subr.bf16.mxu0 0
        %1199 = vmatpush1.bf16.msra.mxu0 0
        %1200 = vmatprep.subr.bf16.mxu0 0
        %1201 = vmatpush1.bf16.msra.mxu0 %v1184
        %1202 = vmatprep.subr.bf16.mxu0 0
        %1203 = vmatpush2.bf16.msra.mxu0 0
        %1204 = vmatprep.subr.bf16.mxu0 0
        %1205 = vmatpush2.bf16.msra.mxu0 0
        %1206 = vmatprep.subr.bf16.mxu0 0
        %1207 = vmatpush2.bf16.msra.mxu0 0
        %1208 = vmatprep.subr.bf16.mxu0 0
        %1209 = vmatpush2.bf16.msra.mxu0 0
        %1210 = vmatprep.subr.bf16.mxu0 0
        %1211 = vmatpush2.bf16.msra.mxu0 0
        %1212 = vmatprep.subr.bf16.mxu0 0
        %1213 = vmatpush2.bf16.msra.mxu0 0
        %1214 = vmatprep.subr.bf16.mxu0 0
        %1215 = vmatpush2.bf16.msra.mxu0 0
        %1216 = vmatprep.subr.bf16.mxu0 0
        %1217 = vmatpush2.bf16.msra.mxu0 0
        %1218 = vmatprep.mubr.bf16.mxu0 0
        %1219 = vmatmul.mubr.bf16.gmra.mxu0 %v1181
        %v1220 = vpop.f32.mrf.mxu0
        %v1221 = vadd.f32 0.0, %v1220
        %v1222 = vpop.f32.mrf.mxu0
        %v1223 = vpop.f32.mrf.mxu0
        %v1224 = vpop.f32.mrf.mxu0
        %1225 = vdwg.mxu0
        %v1227 = vsel %vm681, %v1132, 0
        %v1230 = vsel %vm942, %v422, 0
        %1232 = vmatprep.subr.bf16.mxu0 0
        %1233 = vmatpush1.bf16.msra.mxu0 0
        %1234 = vmatprep.subr.bf16.mxu0 0
        %1235 = vmatpush1.bf16.msra.mxu0 0
        %1236 = vmatprep.subr.bf16.mxu0 0
        %1237 = vmatpush1.bf16.msra.mxu0 0
        %1238 = vmatprep.subr.bf16.mxu0 0
        %1239 = vmatpush1.bf16.msra.mxu0 0
        %1240 = vmatprep.subr.bf16.mxu0 0
        %1241 = vmatpush1.bf16.msra.mxu0 0
        %1242 = vmatprep.subr.bf16.mxu0 0
        %1243 = vmatpush1.bf16.msra.mxu0 0
        %1244 = vmatprep.subr.bf16.mxu0 0
        %1245 = vmatpush1.bf16.msra.mxu0 0
        %1246 = vmatprep.subr.bf16.mxu0 0
        %1247 = vmatpush1.bf16.msra.mxu0 %v1230
        %1248 = vmatprep.subr.bf16.mxu0 0
        %1249 = vmatpush2.bf16.msra.mxu0 0
        %1250 = vmatprep.subr.bf16.mxu0 0
        %1251 = vmatpush2.bf16.msra.mxu0 0
        %1252 = vmatprep.subr.bf16.mxu0 0
        %1253 = vmatpush2.bf16.msra.mxu0 0
        %1254 = vmatprep.subr.bf16.mxu0 0
        %1255 = vmatpush2.bf16.msra.mxu0 0
        %1256 = vmatprep.subr.bf16.mxu0 0
        %1257 = vmatpush2.bf16.msra.mxu0 0
        %1258 = vmatprep.subr.bf16.mxu0 0
        %1259 = vmatpush2.bf16.msra.mxu0 0
        %1260 = vmatprep.subr.bf16.mxu0 0
        %1261 = vmatpush2.bf16.msra.mxu0 0
        %1262 = vmatprep.subr.bf16.mxu0 0
        %1263 = vmatpush2.bf16.msra.mxu0 0
        %1264 = vmatprep.mubr.bf16.mxu0 0
        %1265 = vmatmul.mubr.bf16.gmra.mxu0 %v1227
        %v1266 = vpop.f32.mrf.mxu0
        %v1267 = vadd.f32 0.0, %v1266
        %v1268 = vpop.f32.mrf.mxu0
        %v1269 = vpop.f32.mrf.mxu0
        %v1270 = vpop.f32.mrf.mxu0
        %1271 = vdwg.mxu0
        %v1273 = vsel %vm681, %v1133, 0
        %v1276 = vsel %vm942, %v423, 0
        %1278 = vmatprep.subr.bf16.mxu0 0
        %1279 = vmatpush1.bf16.msra.mxu0 0
        %1280 = vmatprep.subr.bf16.mxu0 0
        %1281 = vmatpush1.bf16.msra.mxu0 0
        %1282 = vmatprep.subr.bf16.mxu0 0
        %1283 = vmatpush1.bf16.msra.mxu0 0
        %1284 = vmatprep.subr.bf16.mxu0 0
        %1285 = vmatpush1.bf16.msra.mxu0 0
        %1286 = vmatprep.subr.bf16.mxu0 0
        %1287 = vmatpush1.bf16.msra.mxu0 0
        %1288 = vmatprep.subr.bf16.mxu0 0
        %1289 = vmatpush1.bf16.msra.mxu0 0
        %1290 = vmatprep.subr.bf16.mxu0 0
        %1291 = vmatpush1.bf16.msra.mxu0 0
        %1292 = vmatprep.subr.bf16.mxu0 0
        %1293 = vmatpush1.bf16.msra.mxu0 %v1276
        %1294 = vmatprep.subr.bf16.mxu0 0
        %1295 = vmatpush2.bf16.msra.mxu0 0
        %1296 = vmatprep.subr.bf16.mxu0 0
        %1297 = vmatpush2.bf16.msra.mxu0 0
        %1298 = vmatprep.subr.bf16.mxu0 0
        %1299 = vmatpush2.bf16.msra.mxu0 0
        %1300 = vmatprep.subr.bf16.mxu0 0
        %1301 = vmatpush2.bf16.msra.mxu0 0
        %1302 = vmatprep.subr.bf16.mxu0 0
        %1303 = vmatpush2.bf16.msra.mxu0 0
        %1304 = vmatprep.subr.bf16.mxu0 0
        %1305 = vmatpush2.bf16.msra.mxu0 0
        %1306 = vmatprep.subr.bf16.mxu0 0
        %1307 = vmatpush2.bf16.msra.mxu0 0
        %1308 = vmatprep.subr.bf16.mxu0 0
        %1309 = vmatpush2.bf16.msra.mxu0 0
        %1310 = vmatprep.mubr.bf16.mxu0 0
        %1311 = vmatmul.mubr.bf16.gmra.mxu0 %v1273
        %v1312 = vpop.f32.mrf.mxu0
        %v1313 = vadd.f32 0.0, %v1312
        %v1314 = vpop.f32.mrf.mxu0
        %v1315 = vpop.f32.mrf.mxu0
        %v1316 = vpop.f32.mrf.mxu0
        %1317 = vdwg.mxu0
        %v1318 = vsel %vm375, %v1175, 0.0
        %v1319 = vsel %vm375, %v1221, 0.0
        %v1320 = vadd.f32 %v1318, %v1319
        %v1321 = vsel %vm375, %v1267, 0.0
        %v1322 = vadd.f32 %v1320, %v1321
        %v1323 = vsel %vm375, %v1313, 0.0
        %v1324 = vadd.f32 %v1322, %v1323
        %v1325 = vlaneseq
        %v1326 = vshrl.u32 %v1325, 7
        %v1327 = vsub.s32 0, %v1326
        %v1328 = vrot.slane %v424, %v1327
        %v1329 = vadd.f32 %v1324, %v1328
        %v1330 = vadd.f32 %v1329, %v399
        %v1331 = vsel %vm375, %v1330, 0.0
        %1332 = vadd.xlane.f32.xlu0 %v1331
        %v1333 = vpop.xlane.xlu0 %1332
        %v1334 = vmul.f32 %v1333, %v379
        %v1335 = vsub.f32 %v1330, %v1334
        %v1336 = vmul.f32 %v1335, %v1335
        %v1337 = vsel %vm375, %v1336, 0.0
        %1338 = vadd.xlane.f32.xlu0 %v1337
        %v1339 = vpop.xlane.xlu0 %1338
        %v1340 = vmul.f32 %v1339, %v379
        %v1341 = vadd.f32 %v1340, 1e-12
        %v1342 = vrsqrt.pop %v1341
        %v1343 = vmul.f32 %v1335, %v1342
        %v1344 = vlaneseq
        %v1345 = vshrl.u32 %v1344, 7
        %v1346 = vsub.s32 1, %v1345
        %v1347 = vrot.slane %v424, %v1346
        %v1348 = vmul.f32 %v1343, %v1347
        %v1349 = vlaneseq
        %v1350 = vshrl.u32 %v1349, 7
        %v1351 = vsub.s32 2, %v1350
        %v1352 = vrot.slane %v424, %v1351
        %v1353 = vadd.f32 %v1348, %v1352
        %v1354 = vpack.c.bf16 %v1353, %v1353
        %v1356 = vlaneseq
        %v1357 = vshrl.u32 %v1356, 7
        %v1358 = vsub.s32 0, %v1357
        %v1359 = vrot.slane %v429, %v1358
        %v1365 = vunpack.c.l.b16 %v425
        %v1366 = vunpack.c.l.b16 %v426
        %v1367 = vunpack.c.l.b16 %v427
        %v1368 = vunpack.c.l.b16 %v428
        %v1369 = vpack.c.b16 %v1366, %v1365
        %v1370 = vpack.c.b16 %v1368, %v1367
        %v1374 = vsel %vm375, %v1354, 0
        %1376 = vmatprep.subr.bf16.mxu0 0
        %1377 = vmatpush1.bf16.msra.mxu0 0
        %1378 = vmatprep.subr.bf16.mxu0 0
        %1379 = vmatpush1.bf16.msra.mxu0 0
        %1380 = vmatprep.subr.bf16.mxu0 0
        %1381 = vmatpush1.bf16.msra.mxu0 0
        %1382 = vmatprep.subr.bf16.mxu0 0
        %1383 = vmatpush1.bf16.msra.mxu0 0
        %1384 = vmatprep.subr.bf16.mxu0 0
        %1385 = vmatpush1.bf16.msra.mxu0 0
        %1386 = vmatprep.subr.bf16.mxu0 0
        %1387 = vmatpush1.bf16.msra.mxu0 0
        %1388 = vmatprep.subr.bf16.mxu0 0
        %1389 = vmatpush1.bf16.msra.mxu0 %v1370
        %1390 = vmatprep.subr.bf16.mxu0 0
        %1391 = vmatpush1.bf16.msra.mxu0 %v1369
        %1392 = vmatprep.subr.bf16.mxu0 0
        %1393 = vmatpush2.bf16.msra.mxu0 0
        %1394 = vmatprep.subr.bf16.mxu0 0
        %1395 = vmatpush2.bf16.msra.mxu0 0
        %1396 = vmatprep.subr.bf16.mxu0 0
        %1397 = vmatpush2.bf16.msra.mxu0 0
        %1398 = vmatprep.subr.bf16.mxu0 0
        %1399 = vmatpush2.bf16.msra.mxu0 0
        %1400 = vmatprep.subr.bf16.mxu0 0
        %1401 = vmatpush2.bf16.msra.mxu0 0
        %1402 = vmatprep.subr.bf16.mxu0 0
        %1403 = vmatpush2.bf16.msra.mxu0 0
        %1404 = vmatprep.subr.bf16.mxu0 0
        %1405 = vmatpush2.bf16.msra.mxu0 0
        %1406 = vmatprep.subr.bf16.mxu0 0
        %1407 = vmatpush2.bf16.msra.mxu0 0
        %1408 = vmatprep.mubr.bf16.mxu0 0
        %1409 = vmatmul.mubr.bf16.gmra.mxu0 %v1374
        %v1410 = vpop.f32.mrf.mxu0
        %v1411 = vadd.f32 %v1359, %v1410
        %v1412 = vpop.f32.mrf.mxu0
        %v1413 = vpop.f32.mrf.mxu0
        %v1414 = vpop.f32.mrf.mxu0
        %1415 = vdwg.mxu0
        %v1416 = vmul.f32 %v1411, 0.5
        %v1417 = vmul.f32 %v1411, 0.044715
        %v1418 = vmul.f32 %v1417, %v1411
        %v1419 = vmul.f32 %v1418, %v1411
        %v1420 = vadd.f32 %v1411, %v1419
        %v1421 = vmul.f32 %v1420, 0.7978846
        %v1422 = vtanh.pop %v1421
        %v1423 = vadd.f32 %v1422, 1.0
        %v1424 = vmul.f32 %v1416, %v1423
        %v1425 = vpack.c.bf16 %v1424, %v1424
        %v1426 = vlaneseq
        %v1427 = vshrl.u32 %v1426, 7
        %v1428 = vsub.s32 3, %v1427
        %v1429 = vrot.slane %v424, %v1428
        %v1438 = vunpack.c.l.b16 %v430
        %v1439 = vunpack.c.l.b16 %v431
        %v1440 = vunpack.c.l.b16 %v432
        %v1441 = vunpack.c.l.b16 %v433
        %v1442 = vunpack.c.l.b16 %v434
        %v1443 = vunpack.c.l.b16 %v435
        %v1444 = vunpack.c.l.b16 %v436
        %v1445 = vunpack.c.l.b16 %v437
        %v1446 = vpack.c.b16 %v1439, %v1438
        %v1447 = vpack.c.b16 %v1441, %v1440
        %v1448 = vpack.c.b16 %v1443, %v1442
        %v1449 = vpack.c.b16 %v1445, %v1444
        %vm1454 = vcmask 523264
        %v1456 = vsel %vm1454, %v1425, 0
        %1458 = vmatprep.subr.bf16.mxu0 0
        %1459 = vmatpush1.bf16.msra.mxu0 0
        %1460 = vmatprep.subr.bf16.mxu0 0
        %1461 = vmatpush1.bf16.msra.mxu0 0
        %1462 = vmatprep.subr.bf16.mxu0 0
        %1463 = vmatpush1.bf16.msra.mxu0 0
        %1464 = vmatprep.subr.bf16.mxu0 0
        %1465 = vmatpush1.bf16.msra.mxu0 0
        %1466 = vmatprep.subr.bf16.mxu0 0
        %1467 = vmatpush1.bf16.msra.mxu0 %v1449
        %1468 = vmatprep.subr.bf16.mxu0 0
        %1469 = vmatpush1.bf16.msra.mxu0 %v1448
        %1470 = vmatprep.subr.bf16.mxu0 0
        %1471 = vmatpush1.bf16.msra.mxu0 %v1447
        %1472 = vmatprep.subr.bf16.mxu0 0
        %1473 = vmatpush1.bf16.msra.mxu0 %v1446
        %1474 = vmatprep.subr.bf16.mxu0 0
        %1475 = vmatpush2.bf16.msra.mxu0 0
        %1476 = vmatprep.subr.bf16.mxu0 0
        %1477 = vmatpush2.bf16.msra.mxu0 0
        %1478 = vmatprep.subr.bf16.mxu0 0
        %1479 = vmatpush2.bf16.msra.mxu0 0
        %1480 = vmatprep.subr.bf16.mxu0 0
        %1481 = vmatpush2.bf16.msra.mxu0 0
        %1482 = vmatprep.subr.bf16.mxu0 0
        %1483 = vmatpush2.bf16.msra.mxu0 0
        %1484 = vmatprep.subr.bf16.mxu0 0
        %1485 = vmatpush2.bf16.msra.mxu0 0
        %1486 = vmatprep.subr.bf16.mxu0 0
        %1487 = vmatpush2.bf16.msra.mxu0 0
        %1488 = vmatprep.subr.bf16.mxu0 0
        %1489 = vmatpush2.bf16.msra.mxu0 0
        %1490 = vmatprep.mubr.bf16.mxu0 0
        %1491 = vmatmul.mubr.bf16.gmra.mxu0 %v1456
        %v1492 = vpop.f32.mrf.mxu0
        %v1493 = vadd.f32 %v1429, %v1492
        %v1494 = vpop.f32.mrf.mxu0
        %v1495 = vpop.f32.mrf.mxu0
        %v1496 = vpop.f32.mrf.mxu0
        %1497 = vdwg.mxu0
        %v1498 = vadd.f32 %v1493, %v1353
        %v1499 = vsel %vm375, %v1498, 0.0
        %1500 = vadd.xlane.f32.xlu0 %v1499
        %v1501 = vpop.xlane.xlu0 %1500
        %v1502 = vmul.f32 %v1501, %v379
        %v1503 = vsub.f32 %v1498, %v1502
        %v1504 = vmul.f32 %v1503, %v1503
        %v1505 = vsel %vm375, %v1504, 0.0
        %1506 = vadd.xlane.f32.xlu0 %v1505
        %v1507 = vpop.xlane.xlu0 %1506
        %v1508 = vmul.f32 %v1507, %v379
        %v1509 = vadd.f32 %v1508, 1e-12
        %v1510 = vrsqrt.pop %v1509
        %v1511 = vmul.f32 %v1503, %v1510
        %v1512 = vlaneseq
        %v1513 = vshrl.u32 %v1512, 7
        %v1514 = vsub.s32 4, %v1513
        %v1515 = vrot.slane %v424, %v1514
        %v1516 = vmul.f32 %v1511, %v1515
        %v1517 = vlaneseq
        %v1518 = vshrl.u32 %v1517, 7
        %v1519 = vsub.s32 5, %v1518
        %v1520 = vrot.slane %v424, %v1519
        %v1521 = vadd.f32 %v1516, %v1520
        %s1522 = scalar_lea.vmem %s3, 64
        %v1523 = vld [vmem:[%s1522] sm:$0xf]
        %v1524 = vld [vmem:[%s1522 + $0x4] sm:$0xf]
        %v1525 = vld [vmem:[%s1522 + $0x8] sm:$0xf]
        %v1526 = vld [vmem:[%s1522 + $0xc] sm:$0xf]
        %v1527 = vld [vmem:[%s1522 + $0x10] sm:$0xf]
        %v1528 = vld [vmem:[%s1522 + $0x14] sm:$0xf]
        %v1529 = vld [vmem:[%s1522 + $0x18] sm:$0xf]
        %v1530 = vld [vmem:[%s1522 + $0x1c] sm:$0xf]
        %v1531 = vld [vmem:[%s1522 + $0x20] sm:$0xf]
        %v1532 = vld [vmem:[%s1522 + $0x24] sm:$0xf]
        %v1533 = vld [vmem:[%s1522 + $0x28] sm:$0xf]
        %v1534 = vld [vmem:[%s1522 + $0x2c] sm:$0xf]
        %v1535 = vld [vmem:[%s1522 + $0x30] sm:$0xf]
        %v1536 = vld [vmem:[%s1522 + $0x34] sm:$0xf]
        %v1537 = vld [vmem:[%s1522 + $0x38] sm:$0xf]
        %v1538 = vld [vmem:[%s1522 + $0x3c] sm:$0xf]
        %s1539 = scalar_lea.vmem %s4, 4
        %v1540 = vld [vmem:[%s1539] sm:$0x1]
        %v1541 = vld [vmem:[%s1539 + $0x1] sm:$0x1]
        %v1542 = vld [vmem:[%s1539 + $0x2] sm:$0x1]
        %v1543 = vld [vmem:[%s1539 + $0x3] sm:$0x1]
        %s1544 = scalar_lea.vmem %s5, 16
        %v1545 = vld [vmem:[%s1544] sm:$0xf]
        %v1546 = vld [vmem:[%s1544 + $0x4] sm:$0xf]
        %v1547 = vld [vmem:[%s1544 + $0x8] sm:$0xf]
        %v1548 = vld [vmem:[%s1544 + $0xc] sm:$0xf]
        %s1549 = scalar_lea.vmem %s6, 8
        %v1550 = vld [vmem:[%s1549] sm:$0x3f]
        %s1551 = scalar_lea.vmem %s7, 16
        %v1552 = vld [vmem:[%s1551] sm:$0xf]
        %v1553 = vld [vmem:[%s1551 + $0x4] sm:$0xf]
        %v1554 = vld [vmem:[%s1551 + $0x8] sm:$0xf]
        %v1555 = vld [vmem:[%s1551 + $0xc] sm:$0xf]
        %s1556 = scalar_lea.vmem %s8, 1
        %v1557 = vld [vmem:[%s1556] sm:$0x1]
        %s1558 = scalar_lea.vmem %s9, 32
        %v1559 = vld [vmem:[%s1558] sm:$0xf]
        %v1560 = vld [vmem:[%s1558 + $0x4] sm:$0xf]
        %v1561 = vld [vmem:[%s1558 + $0x8] sm:$0xf]
        %v1562 = vld [vmem:[%s1558 + $0xc] sm:$0xf]
        %v1563 = vld [vmem:[%s1558 + $0x10] sm:$0xf]
        %v1564 = vld [vmem:[%s1558 + $0x14] sm:$0xf]
        %v1565 = vld [vmem:[%s1558 + $0x18] sm:$0xf]
        %v1566 = vld [vmem:[%s1558 + $0x1c] sm:$0xf]
        %v1567 = vpack.c.bf16 %v1521, %v1521
        %v1572 = vlaneseq
        %v1573 = vshrl.u32 %v1572, 7
        %v1574 = vsub.s32 0, %v1573
        %v1575 = vrot.slane %v1540, %v1574
        %v1576 = vlaneseq
        %v1577 = vshrl.u32 %v1576, 7
        %v1578 = vsub.s32 0, %v1577
        %v1579 = vrot.slane %v1541, %v1578
        %v1580 = vlaneseq
        %v1581 = vshrl.u32 %v1580, 7
        %v1582 = vsub.s32 0, %v1581
        %v1583 = vrot.slane %v1542, %v1582
        %v1584 = vlaneseq
        %v1585 = vshrl.u32 %v1584, 7
        %v1586 = vsub.s32 0, %v1585
        %v1587 = vrot.slane %v1543, %v1586
        %v1596 = vunpack.c.l.b16 %v1523
        %v1597 = vunpack.c.l.b16 %v1524
        %v1598 = vunpack.c.l.b16 %v1525
        %v1599 = vunpack.c.l.b16 %v1526
        %v1600 = vpack.c.b16 %v1597, %v1596
        %v1601 = vpack.c.b16 %v1599, %v1598
        %v1605 = vsel %vm375, %v1567, 0
        %1607 = vmatprep.subr.bf16.mxu0 0
        %1608 = vmatpush1.bf16.msra.mxu0 0
        %1609 = vmatprep.subr.bf16.mxu0 0
        %1610 = vmatpush1.bf16.msra.mxu0 0
        %1611 = vmatprep.subr.bf16.mxu0 0
        %1612 = vmatpush1.bf16.msra.mxu0 0
        %1613 = vmatprep.subr.bf16.mxu0 0
        %1614 = vmatpush1.bf16.msra.mxu0 0
        %1615 = vmatprep.subr.bf16.mxu0 0
        %1616 = vmatpush1.bf16.msra.mxu0 0
        %1617 = vmatprep.subr.bf16.mxu0 0
        %1618 = vmatpush1.bf16.msra.mxu0 0
        %1619 = vmatprep.subr.bf16.mxu0 0
        %1620 = vmatpush1.bf16.msra.mxu0 %v1601
        %1621 = vmatprep.subr.bf16.mxu0 0
        %1622 = vmatpush1.bf16.msra.mxu0 %v1600
        %1623 = vmatprep.subr.bf16.mxu0 0
        %1624 = vmatpush2.bf16.msra.mxu0 0
        %1625 = vmatprep.subr.bf16.mxu0 0
        %1626 = vmatpush2.bf16.msra.mxu0 0
        %1627 = vmatprep.subr.bf16.mxu0 0
        %1628 = vmatpush2.bf16.msra.mxu0 0
        %1629 = vmatprep.subr.bf16.mxu0 0
        %1630 = vmatpush2.bf16.msra.mxu0 0
        %1631 = vmatprep.subr.bf16.mxu0 0
        %1632 = vmatpush2.bf16.msra.mxu0 0
        %1633 = vmatprep.subr.bf16.mxu0 0
        %1634 = vmatpush2.bf16.msra.mxu0 0
        %1635 = vmatprep.subr.bf16.mxu0 0
        %1636 = vmatpush2.bf16.msra.mxu0 0
        %1637 = vmatprep.subr.bf16.mxu0 0
        %1638 = vmatpush2.bf16.msra.mxu0 0
        %1639 = vmatprep.mubr.bf16.mxu0 0
        %1640 = vmatmul.mubr.bf16.gmra.mxu0 %v1605
        %v1641 = vpop.f32.mrf.mxu0
        %v1642 = vadd.f32 %v1575, %v1641
        %v1643 = vpop.f32.mrf.mxu0
        %v1644 = vpop.f32.mrf.mxu0
        %v1645 = vpop.f32.mrf.mxu0
        %1646 = vdwg.mxu0
        %v1651 = vunpack.c.l.b16 %v1527
        %v1652 = vunpack.c.l.b16 %v1528
        %v1653 = vunpack.c.l.b16 %v1529
        %v1654 = vunpack.c.l.b16 %v1530
        %v1655 = vpack.c.b16 %v1652, %v1651
        %v1656 = vpack.c.b16 %v1654, %v1653
        %1659 = vmatprep.subr.bf16.mxu0 0
        %1660 = vmatpush1.bf16.msra.mxu0 0
        %1661 = vmatprep.subr.bf16.mxu0 0
        %1662 = vmatpush1.bf16.msra.mxu0 0
        %1663 = vmatprep.subr.bf16.mxu0 0
        %1664 = vmatpush1.bf16.msra.mxu0 0
        %1665 = vmatprep.subr.bf16.mxu0 0
        %1666 = vmatpush1.bf16.msra.mxu0 0
        %1667 = vmatprep.subr.bf16.mxu0 0
        %1668 = vmatpush1.bf16.msra.mxu0 0
        %1669 = vmatprep.subr.bf16.mxu0 0
        %1670 = vmatpush1.bf16.msra.mxu0 0
        %1671 = vmatprep.subr.bf16.mxu0 0
        %1672 = vmatpush1.bf16.msra.mxu0 %v1656
        %1673 = vmatprep.subr.bf16.mxu0 0
        %1674 = vmatpush1.bf16.msra.mxu0 %v1655
        %1675 = vmatprep.subr.bf16.mxu0 0
        %1676 = vmatpush2.bf16.msra.mxu0 0
        %1677 = vmatprep.subr.bf16.mxu0 0
        %1678 = vmatpush2.bf16.msra.mxu0 0
        %1679 = vmatprep.subr.bf16.mxu0 0
        %1680 = vmatpush2.bf16.msra.mxu0 0
        %1681 = vmatprep.subr.bf16.mxu0 0
        %1682 = vmatpush2.bf16.msra.mxu0 0
        %1683 = vmatprep.subr.bf16.mxu0 0
        %1684 = vmatpush2.bf16.msra.mxu0 0
        %1685 = vmatprep.subr.bf16.mxu0 0
        %1686 = vmatpush2.bf16.msra.mxu0 0
        %1687 = vmatprep.subr.bf16.mxu0 0
        %1688 = vmatpush2.bf16.msra.mxu0 0
        %1689 = vmatprep.subr.bf16.mxu0 0
        %1690 = vmatpush2.bf16.msra.mxu0 0
        %1691 = vmatprep.mubr.bf16.mxu0 0
        %1692 = vmatmul.mubr.bf16.gmra.mxu0 %v1605
        %v1693 = vpop.f32.mrf.mxu0
        %v1694 = vadd.f32 %v1579, %v1693
        %v1695 = vpop.f32.mrf.mxu0
        %v1696 = vpop.f32.mrf.mxu0
        %v1697 = vpop.f32.mrf.mxu0
        %1698 = vdwg.mxu0
        %v1703 = vunpack.c.l.b16 %v1531
        %v1704 = vunpack.c.l.b16 %v1532
        %v1705 = vunpack.c.l.b16 %v1533
        %v1706 = vunpack.c.l.b16 %v1534
        %v1707 = vpack.c.b16 %v1704, %v1703
        %v1708 = vpack.c.b16 %v1706, %v1705
        %1711 = vmatprep.subr.bf16.mxu0 0
        %1712 = vmatpush1.bf16.msra.mxu0 0
        %1713 = vmatprep.subr.bf16.mxu0 0
        %1714 = vmatpush1.bf16.msra.mxu0 0
        %1715 = vmatprep.subr.bf16.mxu0 0
        %1716 = vmatpush1.bf16.msra.mxu0 0
        %1717 = vmatprep.subr.bf16.mxu0 0
        %1718 = vmatpush1.bf16.msra.mxu0 0
        %1719 = vmatprep.subr.bf16.mxu0 0
        %1720 = vmatpush1.bf16.msra.mxu0 0
        %1721 = vmatprep.subr.bf16.mxu0 0
        %1722 = vmatpush1.bf16.msra.mxu0 0
        %1723 = vmatprep.subr.bf16.mxu0 0
        %1724 = vmatpush1.bf16.msra.mxu0 %v1708
        %1725 = vmatprep.subr.bf16.mxu0 0
        %1726 = vmatpush1.bf16.msra.mxu0 %v1707
        %1727 = vmatprep.subr.bf16.mxu0 0
        %1728 = vmatpush2.bf16.msra.mxu0 0
        %1729 = vmatprep.subr.bf16.mxu0 0
        %1730 = vmatpush2.bf16.msra.mxu0 0
        %1731 = vmatprep.subr.bf16.mxu0 0
        %1732 = vmatpush2.bf16.msra.mxu0 0
        %1733 = vmatprep.subr.bf16.mxu0 0
        %1734 = vmatpush2.bf16.msra.mxu0 0
        %1735 = vmatprep.subr.bf16.mxu0 0
        %1736 = vmatpush2.bf16.msra.mxu0 0
        %1737 = vmatprep.subr.bf16.mxu0 0
        %1738 = vmatpush2.bf16.msra.mxu0 0
        %1739 = vmatprep.subr.bf16.mxu0 0
        %1740 = vmatpush2.bf16.msra.mxu0 0
        %1741 = vmatprep.subr.bf16.mxu0 0
        %1742 = vmatpush2.bf16.msra.mxu0 0
        %1743 = vmatprep.mubr.bf16.mxu0 0
        %1744 = vmatmul.mubr.bf16.gmra.mxu0 %v1605
        %v1745 = vpop.f32.mrf.mxu0
        %v1746 = vadd.f32 %v1583, %v1745
        %v1747 = vpop.f32.mrf.mxu0
        %v1748 = vpop.f32.mrf.mxu0
        %v1749 = vpop.f32.mrf.mxu0
        %1750 = vdwg.mxu0
        %v1755 = vunpack.c.l.b16 %v1535
        %v1756 = vunpack.c.l.b16 %v1536
        %v1757 = vunpack.c.l.b16 %v1537
        %v1758 = vunpack.c.l.b16 %v1538
        %v1759 = vpack.c.b16 %v1756, %v1755
        %v1760 = vpack.c.b16 %v1758, %v1757
        %1763 = vmatprep.subr.bf16.mxu0 0
        %1764 = vmatpush1.bf16.msra.mxu0 0
        %1765 = vmatprep.subr.bf16.mxu0 0
        %1766 = vmatpush1.bf16.msra.mxu0 0
        %1767 = vmatprep.subr.bf16.mxu0 0
        %1768 = vmatpush1.bf16.msra.mxu0 0
        %1769 = vmatprep.subr.bf16.mxu0 0
        %1770 = vmatpush1.bf16.msra.mxu0 0
        %1771 = vmatprep.subr.bf16.mxu0 0
        %1772 = vmatpush1.bf16.msra.mxu0 0
        %1773 = vmatprep.subr.bf16.mxu0 0
        %1774 = vmatpush1.bf16.msra.mxu0 0
        %1775 = vmatprep.subr.bf16.mxu0 0
        %1776 = vmatpush1.bf16.msra.mxu0 %v1760
        %1777 = vmatprep.subr.bf16.mxu0 0
        %1778 = vmatpush1.bf16.msra.mxu0 %v1759
        %1779 = vmatprep.subr.bf16.mxu0 0
        %1780 = vmatpush2.bf16.msra.mxu0 0
        %1781 = vmatprep.subr.bf16.mxu0 0
        %1782 = vmatpush2.bf16.msra.mxu0 0
        %1783 = vmatprep.subr.bf16.mxu0 0
        %1784 = vmatpush2.bf16.msra.mxu0 0
        %1785 = vmatprep.subr.bf16.mxu0 0
        %1786 = vmatpush2.bf16.msra.mxu0 0
        %1787 = vmatprep.subr.bf16.mxu0 0
        %1788 = vmatpush2.bf16.msra.mxu0 0
        %1789 = vmatprep.subr.bf16.mxu0 0
        %1790 = vmatpush2.bf16.msra.mxu0 0
        %1791 = vmatprep.subr.bf16.mxu0 0
        %1792 = vmatpush2.bf16.msra.mxu0 0
        %1793 = vmatprep.subr.bf16.mxu0 0
        %1794 = vmatpush2.bf16.msra.mxu0 0
        %1795 = vmatprep.mubr.bf16.mxu0 0
        %1796 = vmatmul.mubr.bf16.gmra.mxu0 %v1605
        %v1797 = vpop.f32.mrf.mxu0
        %v1798 = vadd.f32 %v1587, %v1797
        %v1799 = vpop.f32.mrf.mxu0
        %v1800 = vpop.f32.mrf.mxu0
        %v1801 = vpop.f32.mrf.mxu0
        %1802 = vdwg.mxu0
        %v1803 = vpack.c.bf16 %v1642, %v1642
        %v1804 = vpack.c.bf16 %v1694, %v1694
        %v1805 = vpack.c.bf16 %v1746, %v1746
        %v1806 = vpack.c.bf16 %v1798, %v1798
        %1808 = vrot.lane.b32.xlu0 %v1803, 120
        %v1809 = vpop.permute.xlu0 %1808
        %v1811 = vsel %vm681, %v1803, 0
        %v1814 = vsel %vm681, %v1809, 0
        %1816 = vmatprep.subr.bf16.mxu0 0
        %1817 = vmatpush1.bf16.xpose.msra.mxu0 0
        %1818 = vmatprep.subr.bf16.mxu0 0
        %1819 = vmatpush1.bf16.xpose.msra.mxu0 0
        %1820 = vmatprep.subr.bf16.mxu0 0
        %1821 = vmatpush1.bf16.xpose.msra.mxu0 0
        %1822 = vmatprep.subr.bf16.mxu0 0
        %1823 = vmatpush1.bf16.xpose.msra.mxu0 0
        %1824 = vmatprep.subr.bf16.mxu0 0
        %1825 = vmatpush1.bf16.xpose.msra.mxu0 0
        %1826 = vmatprep.subr.bf16.mxu0 0
        %1827 = vmatpush1.bf16.xpose.msra.mxu0 0
        %1828 = vmatprep.subr.bf16.mxu0 0
        %1829 = vmatpush1.bf16.xpose.msra.mxu0 0
        %1830 = vmatprep.subr.bf16.mxu0 0
        %1831 = vmatpush1.bf16.xpose.msra.mxu0 %v1814
        %1832 = vmatprep.subr.bf16.mxu0 0
        %1833 = vmatpush2.bf16.xpose.msra.mxu0 0
        %1834 = vmatprep.subr.bf16.mxu0 0
        %1835 = vmatpush2.bf16.xpose.msra.mxu0 0
        %1836 = vmatprep.subr.bf16.mxu0 0
        %1837 = vmatpush2.bf16.xpose.msra.mxu0 0
        %1838 = vmatprep.subr.bf16.mxu0 0
        %1839 = vmatpush2.bf16.xpose.msra.mxu0 0
        %1840 = vmatprep.subr.bf16.mxu0 0
        %1841 = vmatpush2.bf16.xpose.msra.mxu0 0
        %1842 = vmatprep.subr.bf16.mxu0 0
        %1843 = vmatpush2.bf16.xpose.msra.mxu0 0
        %1844 = vmatprep.subr.bf16.mxu0 0
        %1845 = vmatpush2.bf16.xpose.msra.mxu0 0
        %1846 = vmatprep.subr.bf16.mxu0 0
        %1847 = vmatpush2.bf16.xpose.msra.mxu0 0
        %1848 = vmatprep.mubr.bf16.mxu0 0
        %1849 = vmatmul.mubr.bf16.gmra.mxu0 %v1811
        %v1850 = vpop.f32.mrf.mxu0
        %v1851 = vadd.f32 0.0, %v1850
        %v1852 = vpop.f32.mrf.mxu0
        %v1853 = vpop.f32.mrf.mxu0
        %v1854 = vpop.f32.mrf.mxu0
        %1855 = vdwg.mxu0
        %1857 = vrot.lane.b32.xlu0 %v1804, 120
        %v1858 = vpop.permute.xlu0 %1857
        %v1860 = vsel %vm681, %v1804, 0
        %v1863 = vsel %vm681, %v1858, 0
        %1865 = vmatprep.subr.bf16.mxu0 0
        %1866 = vmatpush1.bf16.xpose.msra.mxu0 0
        %1867 = vmatprep.subr.bf16.mxu0 0
        %1868 = vmatpush1.bf16.xpose.msra.mxu0 0
        %1869 = vmatprep.subr.bf16.mxu0 0
        %1870 = vmatpush1.bf16.xpose.msra.mxu0 0
        %1871 = vmatprep.subr.bf16.mxu0 0
        %1872 = vmatpush1.bf16.xpose.msra.mxu0 0
        %1873 = vmatprep.subr.bf16.mxu0 0
        %1874 = vmatpush1.bf16.xpose.msra.mxu0 0
        %1875 = vmatprep.subr.bf16.mxu0 0
        %1876 = vmatpush1.bf16.xpose.msra.mxu0 0
        %1877 = vmatprep.subr.bf16.mxu0 0
        %1878 = vmatpush1.bf16.xpose.msra.mxu0 0
        %1879 = vmatprep.subr.bf16.mxu0 0
        %1880 = vmatpush1.bf16.xpose.msra.mxu0 %v1863
        %1881 = vmatprep.subr.bf16.mxu0 0
        %1882 = vmatpush2.bf16.xpose.msra.mxu0 0
        %1883 = vmatprep.subr.bf16.mxu0 0
        %1884 = vmatpush2.bf16.xpose.msra.mxu0 0
        %1885 = vmatprep.subr.bf16.mxu0 0
        %1886 = vmatpush2.bf16.xpose.msra.mxu0 0
        %1887 = vmatprep.subr.bf16.mxu0 0
        %1888 = vmatpush2.bf16.xpose.msra.mxu0 0
        %1889 = vmatprep.subr.bf16.mxu0 0
        %1890 = vmatpush2.bf16.xpose.msra.mxu0 0
        %1891 = vmatprep.subr.bf16.mxu0 0
        %1892 = vmatpush2.bf16.xpose.msra.mxu0 0
        %1893 = vmatprep.subr.bf16.mxu0 0
        %1894 = vmatpush2.bf16.xpose.msra.mxu0 0
        %1895 = vmatprep.subr.bf16.mxu0 0
        %1896 = vmatpush2.bf16.xpose.msra.mxu0 0
        %1897 = vmatprep.mubr.bf16.mxu0 0
        %1898 = vmatmul.mubr.bf16.gmra.mxu0 %v1860
        %v1899 = vpop.f32.mrf.mxu0
        %v1900 = vadd.f32 0.0, %v1899
        %v1901 = vpop.f32.mrf.mxu0
        %v1902 = vpop.f32.mrf.mxu0
        %v1903 = vpop.f32.mrf.mxu0
        %1904 = vdwg.mxu0
        %1906 = vrot.lane.b32.xlu0 %v1805, 120
        %v1907 = vpop.permute.xlu0 %1906
        %v1909 = vsel %vm681, %v1805, 0
        %v1912 = vsel %vm681, %v1907, 0
        %1914 = vmatprep.subr.bf16.mxu0 0
        %1915 = vmatpush1.bf16.xpose.msra.mxu0 0
        %1916 = vmatprep.subr.bf16.mxu0 0
        %1917 = vmatpush1.bf16.xpose.msra.mxu0 0
        %1918 = vmatprep.subr.bf16.mxu0 0
        %1919 = vmatpush1.bf16.xpose.msra.mxu0 0
        %1920 = vmatprep.subr.bf16.mxu0 0
        %1921 = vmatpush1.bf16.xpose.msra.mxu0 0
        %1922 = vmatprep.subr.bf16.mxu0 0
        %1923 = vmatpush1.bf16.xpose.msra.mxu0 0
        %1924 = vmatprep.subr.bf16.mxu0 0
        %1925 = vmatpush1.bf16.xpose.msra.mxu0 0
        %1926 = vmatprep.subr.bf16.mxu0 0
        %1927 = vmatpush1.bf16.xpose.msra.mxu0 0
        %1928 = vmatprep.subr.bf16.mxu0 0
        %1929 = vmatpush1.bf16.xpose.msra.mxu0 %v1912
        %1930 = vmatprep.subr.bf16.mxu0 0
        %1931 = vmatpush2.bf16.xpose.msra.mxu0 0
        %1932 = vmatprep.subr.bf16.mxu0 0
        %1933 = vmatpush2.bf16.xpose.msra.mxu0 0
        %1934 = vmatprep.subr.bf16.mxu0 0
        %1935 = vmatpush2.bf16.xpose.msra.mxu0 0
        %1936 = vmatprep.subr.bf16.mxu0 0
        %1937 = vmatpush2.bf16.xpose.msra.mxu0 0
        %1938 = vmatprep.subr.bf16.mxu0 0
        %1939 = vmatpush2.bf16.xpose.msra.mxu0 0
        %1940 = vmatprep.subr.bf16.mxu0 0
        %1941 = vmatpush2.bf16.xpose.msra.mxu0 0
        %1942 = vmatprep.subr.bf16.mxu0 0
        %1943 = vmatpush2.bf16.xpose.msra.mxu0 0
        %1944 = vmatprep.subr.bf16.mxu0 0
        %1945 = vmatpush2.bf16.xpose.msra.mxu0 0
        %1946 = vmatprep.mubr.bf16.mxu0 0
        %1947 = vmatmul.mubr.bf16.gmra.mxu0 %v1909
        %v1948 = vpop.f32.mrf.mxu0
        %v1949 = vadd.f32 0.0, %v1948
        %v1950 = vpop.f32.mrf.mxu0
        %v1951 = vpop.f32.mrf.mxu0
        %v1952 = vpop.f32.mrf.mxu0
        %1953 = vdwg.mxu0
        %1955 = vrot.lane.b32.xlu0 %v1806, 120
        %v1956 = vpop.permute.xlu0 %1955
        %v1958 = vsel %vm681, %v1806, 0
        %v1961 = vsel %vm681, %v1956, 0
        %1963 = vmatprep.subr.bf16.mxu0 0
        %1964 = vmatpush1.bf16.xpose.msra.mxu0 0
        %1965 = vmatprep.subr.bf16.mxu0 0
        %1966 = vmatpush1.bf16.xpose.msra.mxu0 0
        %1967 = vmatprep.subr.bf16.mxu0 0
        %1968 = vmatpush1.bf16.xpose.msra.mxu0 0
        %1969 = vmatprep.subr.bf16.mxu0 0
        %1970 = vmatpush1.bf16.xpose.msra.mxu0 0
        %1971 = vmatprep.subr.bf16.mxu0 0
        %1972 = vmatpush1.bf16.xpose.msra.mxu0 0
        %1973 = vmatprep.subr.bf16.mxu0 0
        %1974 = vmatpush1.bf16.xpose.msra.mxu0 0
        %1975 = vmatprep.subr.bf16.mxu0 0
        %1976 = vmatpush1.bf16.xpose.msra.mxu0 0
        %1977 = vmatprep.subr.bf16.mxu0 0
        %1978 = vmatpush1.bf16.xpose.msra.mxu0 %v1961
        %1979 = vmatprep.subr.bf16.mxu0 0
        %1980 = vmatpush2.bf16.xpose.msra.mxu0 0
        %1981 = vmatprep.subr.bf16.mxu0 0
        %1982 = vmatpush2.bf16.xpose.msra.mxu0 0
        %1983 = vmatprep.subr.bf16.mxu0 0
        %1984 = vmatpush2.bf16.xpose.msra.mxu0 0
        %1985 = vmatprep.subr.bf16.mxu0 0
        %1986 = vmatpush2.bf16.xpose.msra.mxu0 0
        %1987 = vmatprep.subr.bf16.mxu0 0
        %1988 = vmatpush2.bf16.xpose.msra.mxu0 0
        %1989 = vmatprep.subr.bf16.mxu0 0
        %1990 = vmatpush2.bf16.xpose.msra.mxu0 0
        %1991 = vmatprep.subr.bf16.mxu0 0
        %1992 = vmatpush2.bf16.xpose.msra.mxu0 0
        %1993 = vmatprep.subr.bf16.mxu0 0
        %1994 = vmatpush2.bf16.xpose.msra.mxu0 0
        %1995 = vmatprep.mubr.bf16.mxu0 0
        %1996 = vmatmul.mubr.bf16.gmra.mxu0 %v1958
        %v1997 = vpop.f32.mrf.mxu0
        %v1998 = vadd.f32 0.0, %v1997
        %v1999 = vpop.f32.mrf.mxu0
        %v2000 = vpop.f32.mrf.mxu0
        %v2001 = vpop.f32.mrf.mxu0
        %2002 = vdwg.mxu0
        %v2003 = vmul.f32 %v1851, 0.35355338
        %v2004 = vmul.f32 %v1900, 0.35355338
        %v2005 = vmul.f32 %v1949, 0.35355338
        %v2006 = vmul.f32 %v1998, 0.35355338
        %v2007 = vadd.f32 %v2003, %v883
        %v2008 = vadd.f32 %v2004, %v883
        %v2009 = vadd.f32 %v2005, %v883
        %v2010 = vadd.f32 %v2006, %v883
        %v2011 = vsel %vm681, %v2007, -inf
        %2012 = vmax.xlane.f32.xlu0 %v2011
        %v2013 = vpop.xlane.xlu0 %2012
        %v2014 = vsel %vm681, %v2008, -inf
        %2015 = vmax.xlane.f32.xlu0 %v2014
        %v2016 = vpop.xlane.xlu0 %2015
        %v2017 = vsel %vm681, %v2009, -inf
        %2018 = vmax.xlane.f32.xlu0 %v2017
        %v2019 = vpop.xlane.xlu0 %2018
        %v2020 = vsel %vm681, %v2010, -inf
        %2021 = vmax.xlane.f32.xlu0 %v2020
        %v2022 = vpop.xlane.xlu0 %2021
        %v2023 = vsub.f32 %v2007, %v2013
        %v2024 = vsub.f32 %v2008, %v2016
        %v2025 = vsub.f32 %v2009, %v2019
        %v2026 = vsub.f32 %v2010, %v2022
        %v2027 = vmul.f32 %v2023, 1.442695
        %v2028 = vpow.pop %v2027
        %v2029 = vmul.f32 %v2024, 1.442695
        %v2030 = vpow.pop %v2029
        %v2031 = vmul.f32 %v2025, 1.442695
        %v2032 = vpow.pop %v2031
        %v2033 = vmul.f32 %v2026, 1.442695
        %v2034 = vpow.pop %v2033
        %v2035 = vsel %vm681, %v2028, 0.0
        %2036 = vadd.xlane.f32.xlu0 %v2035
        %v2037 = vpop.xlane.xlu0 %2036
        %v2038 = vsel %vm681, %v2030, 0.0
        %2039 = vadd.xlane.f32.xlu0 %v2038
        %v2040 = vpop.xlane.xlu0 %2039
        %v2041 = vsel %vm681, %v2032, 0.0
        %2042 = vadd.xlane.f32.xlu0 %v2041
        %v2043 = vpop.xlane.xlu0 %2042
        %v2044 = vsel %vm681, %v2034, 0.0
        %2045 = vadd.xlane.f32.xlu0 %v2044
        %v2046 = vpop.xlane.xlu0 %2045
        %v2047 = vrcp.pop %v2037
        %v2048 = vrcp.pop %v2040
        %v2049 = vrcp.pop %v2043
        %v2050 = vrcp.pop %v2046
        %v2051 = vmul.f32 %v2028, %v2047
        %v2052 = vmul.f32 %v2030, %v2048
        %v2053 = vmul.f32 %v2032, %v2049
        %v2054 = vmul.f32 %v2034, %v2050
        %v2055 = vpack.c.bf16 %v2051, %v2051
        %v2056 = vpack.c.bf16 %v2052, %v2052
        %v2057 = vpack.c.bf16 %v2053, %v2053
        %v2058 = vpack.c.bf16 %v2054, %v2054
        %2059 = vrot.lane.b32.xlu0 %v1803, 112
        %v2060 = vpop.permute.xlu0 %2059
        %v2062 = vsel %vm681, %v2055, 0
        %v2065 = vsel %vm942, %v2060, 0
        %2067 = vmatprep.subr.bf16.mxu0 0
        %2068 = vmatpush1.bf16.msra.mxu0 0
        %2069 = vmatprep.subr.bf16.mxu0 0
        %2070 = vmatpush1.bf16.msra.mxu0 0
        %2071 = vmatprep.subr.bf16.mxu0 0
        %2072 = vmatpush1.bf16.msra.mxu0 0
        %2073 = vmatprep.subr.bf16.mxu0 0
        %2074 = vmatpush1.bf16.msra.mxu0 0
        %2075 = vmatprep.subr.bf16.mxu0 0
        %2076 = vmatpush1.bf16.msra.mxu0 0
        %2077 = vmatprep.subr.bf16.mxu0 0
        %2078 = vmatpush1.bf16.msra.mxu0 0
        %2079 = vmatprep.subr.bf16.mxu0 0
        %2080 = vmatpush1.bf16.msra.mxu0 0
        %2081 = vmatprep.subr.bf16.mxu0 0
        %2082 = vmatpush1.bf16.msra.mxu0 %v2065
        %2083 = vmatprep.subr.bf16.mxu0 0
        %2084 = vmatpush2.bf16.msra.mxu0 0
        %2085 = vmatprep.subr.bf16.mxu0 0
        %2086 = vmatpush2.bf16.msra.mxu0 0
        %2087 = vmatprep.subr.bf16.mxu0 0
        %2088 = vmatpush2.bf16.msra.mxu0 0
        %2089 = vmatprep.subr.bf16.mxu0 0
        %2090 = vmatpush2.bf16.msra.mxu0 0
        %2091 = vmatprep.subr.bf16.mxu0 0
        %2092 = vmatpush2.bf16.msra.mxu0 0
        %2093 = vmatprep.subr.bf16.mxu0 0
        %2094 = vmatpush2.bf16.msra.mxu0 0
        %2095 = vmatprep.subr.bf16.mxu0 0
        %2096 = vmatpush2.bf16.msra.mxu0 0
        %2097 = vmatprep.subr.bf16.mxu0 0
        %2098 = vmatpush2.bf16.msra.mxu0 0
        %2099 = vmatprep.mubr.bf16.mxu0 0
        %2100 = vmatmul.mubr.bf16.gmra.mxu0 %v2062
        %v2101 = vpop.f32.mrf.mxu0
        %v2102 = vadd.f32 0.0, %v2101
        %v2103 = vpop.f32.mrf.mxu0
        %v2104 = vpop.f32.mrf.mxu0
        %v2105 = vpop.f32.mrf.mxu0
        %2106 = vdwg.mxu0
        %2107 = vrot.lane.b32.xlu0 %v1804, 112
        %v2108 = vpop.permute.xlu0 %2107
        %v2110 = vsel %vm681, %v2056, 0
        %v2113 = vsel %vm942, %v2108, 0
        %2115 = vmatprep.subr.bf16.mxu0 0
        %2116 = vmatpush1.bf16.msra.mxu0 0
        %2117 = vmatprep.subr.bf16.mxu0 0
        %2118 = vmatpush1.bf16.msra.mxu0 0
        %2119 = vmatprep.subr.bf16.mxu0 0
        %2120 = vmatpush1.bf16.msra.mxu0 0
        %2121 = vmatprep.subr.bf16.mxu0 0
        %2122 = vmatpush1.bf16.msra.mxu0 0
        %2123 = vmatprep.subr.bf16.mxu0 0
        %2124 = vmatpush1.bf16.msra.mxu0 0
        %2125 = vmatprep.subr.bf16.mxu0 0
        %2126 = vmatpush1.bf16.msra.mxu0 0
        %2127 = vmatprep.subr.bf16.mxu0 0
        %2128 = vmatpush1.bf16.msra.mxu0 0
        %2129 = vmatprep.subr.bf16.mxu0 0
        %2130 = vmatpush1.bf16.msra.mxu0 %v2113
        %2131 = vmatprep.subr.bf16.mxu0 0
        %2132 = vmatpush2.bf16.msra.mxu0 0
        %2133 = vmatprep.subr.bf16.mxu0 0
        %2134 = vmatpush2.bf16.msra.mxu0 0
        %2135 = vmatprep.subr.bf16.mxu0 0
        %2136 = vmatpush2.bf16.msra.mxu0 0
        %2137 = vmatprep.subr.bf16.mxu0 0
        %2138 = vmatpush2.bf16.msra.mxu0 0
        %2139 = vmatprep.subr.bf16.mxu0 0
        %2140 = vmatpush2.bf16.msra.mxu0 0
        %2141 = vmatprep.subr.bf16.mxu0 0
        %2142 = vmatpush2.bf16.msra.mxu0 0
        %2143 = vmatprep.subr.bf16.mxu0 0
        %2144 = vmatpush2.bf16.msra.mxu0 0
        %2145 = vmatprep.subr.bf16.mxu0 0
        %2146 = vmatpush2.bf16.msra.mxu0 0
        %2147 = vmatprep.mubr.bf16.mxu0 0
        %2148 = vmatmul.mubr.bf16.gmra.mxu0 %v2110
        %v2149 = vpop.f32.mrf.mxu0
        %v2150 = vadd.f32 0.0, %v2149
        %v2151 = vpop.f32.mrf.mxu0
        %v2152 = vpop.f32.mrf.mxu0
        %v2153 = vpop.f32.mrf.mxu0
        %2154 = vdwg.mxu0
        %2155 = vrot.lane.b32.xlu0 %v1805, 112
        %v2156 = vpop.permute.xlu0 %2155
        %v2158 = vsel %vm681, %v2057, 0
        %v2161 = vsel %vm942, %v2156, 0
        %2163 = vmatprep.subr.bf16.mxu0 0
        %2164 = vmatpush1.bf16.msra.mxu0 0
        %2165 = vmatprep.subr.bf16.mxu0 0
        %2166 = vmatpush1.bf16.msra.mxu0 0
        %2167 = vmatprep.subr.bf16.mxu0 0
        %2168 = vmatpush1.bf16.msra.mxu0 0
        %2169 = vmatprep.subr.bf16.mxu0 0
        %2170 = vmatpush1.bf16.msra.mxu0 0
        %2171 = vmatprep.subr.bf16.mxu0 0
        %2172 = vmatpush1.bf16.msra.mxu0 0
        %2173 = vmatprep.subr.bf16.mxu0 0
        %2174 = vmatpush1.bf16.msra.mxu0 0
        %2175 = vmatprep.subr.bf16.mxu0 0
        %2176 = vmatpush1.bf16.msra.mxu0 0
        %2177 = vmatprep.subr.bf16.mxu0 0
        %2178 = vmatpush1.bf16.msra.mxu0 %v2161
        %2179 = vmatprep.subr.bf16.mxu0 0
        %2180 = vmatpush2.bf16.msra.mxu0 0
        %2181 = vmatprep.subr.bf16.mxu0 0
        %2182 = vmatpush2.bf16.msra.mxu0 0
        %2183 = vmatprep.subr.bf16.mxu0 0
        %2184 = vmatpush2.bf16.msra.mxu0 0
        %2185 = vmatprep.subr.bf16.mxu0 0
        %2186 = vmatpush2.bf16.msra.mxu0 0
        %2187 = vmatprep.subr.bf16.mxu0 0
        %2188 = vmatpush2.bf16.msra.mxu0 0
        %2189 = vmatprep.subr.bf16.mxu0 0
        %2190 = vmatpush2.bf16.msra.mxu0 0
        %2191 = vmatprep.subr.bf16.mxu0 0
        %2192 = vmatpush2.bf16.msra.mxu0 0
        %2193 = vmatprep.subr.bf16.mxu0 0
        %2194 = vmatpush2.bf16.msra.mxu0 0
        %2195 = vmatprep.mubr.bf16.mxu0 0
        %2196 = vmatmul.mubr.bf16.gmra.mxu0 %v2158
        %v2197 = vpop.f32.mrf.mxu0
        %v2198 = vadd.f32 0.0, %v2197
        %v2199 = vpop.f32.mrf.mxu0
        %v2200 = vpop.f32.mrf.mxu0
        %v2201 = vpop.f32.mrf.mxu0
        %2202 = vdwg.mxu0
        %2203 = vrot.lane.b32.xlu0 %v1806, 112
        %v2204 = vpop.permute.xlu0 %2203
        %v2206 = vsel %vm681, %v2058, 0
        %v2209 = vsel %vm942, %v2204, 0
        %2211 = vmatprep.subr.bf16.mxu0 0
        %2212 = vmatpush1.bf16.msra.mxu0 0
        %2213 = vmatprep.subr.bf16.mxu0 0
        %2214 = vmatpush1.bf16.msra.mxu0 0
        %2215 = vmatprep.subr.bf16.mxu0 0
        %2216 = vmatpush1.bf16.msra.mxu0 0
        %2217 = vmatprep.subr.bf16.mxu0 0
        %2218 = vmatpush1.bf16.msra.mxu0 0
        %2219 = vmatprep.subr.bf16.mxu0 0
        %2220 = vmatpush1.bf16.msra.mxu0 0
        %2221 = vmatprep.subr.bf16.mxu0 0
        %2222 = vmatpush1.bf16.msra.mxu0 0
        %2223 = vmatprep.subr.bf16.mxu0 0
        %2224 = vmatpush1.bf16.msra.mxu0 0
        %2225 = vmatprep.subr.bf16.mxu0 0
        %2226 = vmatpush1.bf16.msra.mxu0 %v2209
        %2227 = vmatprep.subr.bf16.mxu0 0
        %2228 = vmatpush2.bf16.msra.mxu0 0
        %2229 = vmatprep.subr.bf16.mxu0 0
        %2230 = vmatpush2.bf16.msra.mxu0 0
        %2231 = vmatprep.subr.bf16.mxu0 0
        %2232 = vmatpush2.bf16.msra.mxu0 0
        %2233 = vmatprep.subr.bf16.mxu0 0
        %2234 = vmatpush2.bf16.msra.mxu0 0
        %2235 = vmatprep.subr.bf16.mxu0 0
        %2236 = vmatpush2.bf16.msra.mxu0 0
        %2237 = vmatprep.subr.bf16.mxu0 0
        %2238 = vmatpush2.bf16.msra.mxu0 0
        %2239 = vmatprep.subr.bf16.mxu0 0
        %2240 = vmatpush2.bf16.msra.mxu0 0
        %2241 = vmatprep.subr.bf16.mxu0 0
        %2242 = vmatpush2.bf16.msra.mxu0 0
        %2243 = vmatprep.mubr.bf16.mxu0 0
        %2244 = vmatmul.mubr.bf16.gmra.mxu0 %v2206
        %v2245 = vpop.f32.mrf.mxu0
        %v2246 = vadd.f32 0.0, %v2245
        %v2247 = vpop.f32.mrf.mxu0
        %v2248 = vpop.f32.mrf.mxu0
        %v2249 = vpop.f32.mrf.mxu0
        %2250 = vdwg.mxu0
        %v2251 = vpack.c.bf16 %v2102, %v2102
        %v2252 = vpack.c.bf16 %v2150, %v2150
        %v2253 = vpack.c.bf16 %v2198, %v2198
        %v2254 = vpack.c.bf16 %v2246, %v2246
        %v2256 = vsel %vm681, %v2251, 0
        %v2259 = vsel %vm942, %v1545, 0
        %2261 = vmatprep.subr.bf16.mxu0 0
        %2262 = vmatpush1.bf16.msra.mxu0 0
        %2263 = vmatprep.subr.bf16.mxu0 0
        %2264 = vmatpush1.bf16.msra.mxu0 0
        %2265 = vmatprep.subr.bf16.mxu0 0
        %2266 = vmatpush1.bf16.msra.mxu0 0
        %2267 = vmatprep.subr.bf16.mxu0 0
        %2268 = vmatpush1.bf16.msra.mxu0 0
        %2269 = vmatprep.subr.bf16.mxu0 0
        %2270 = vmatpush1.bf16.msra.mxu0 0
        %2271 = vmatprep.subr.bf16.mxu0 0
        %2272 = vmatpush1.bf16.msra.mxu0 0
        %2273 = vmatprep.subr.bf16.mxu0 0
        %2274 = vmatpush1.bf16.msra.mxu0 0
        %2275 = vmatprep.subr.bf16.mxu0 0
        %2276 = vmatpush1.bf16.msra.mxu0 %v2259
        %2277 = vmatprep.subr.bf16.mxu0 0
        %2278 = vmatpush2.bf16.msra.mxu0 0
        %2279 = vmatprep.subr.bf16.mxu0 0
        %2280 = vmatpush2.bf16.msra.mxu0 0
        %2281 = vmatprep.subr.bf16.mxu0 0
        %2282 = vmatpush2.bf16.msra.mxu0 0
        %2283 = vmatprep.subr.bf16.mxu0 0
        %2284 = vmatpush2.bf16.msra.mxu0 0
        %2285 = vmatprep.subr.bf16.mxu0 0
        %2286 = vmatpush2.bf16.msra.mxu0 0
        %2287 = vmatprep.subr.bf16.mxu0 0
        %2288 = vmatpush2.bf16.msra.mxu0 0
        %2289 = vmatprep.subr.bf16.mxu0 0
        %2290 = vmatpush2.bf16.msra.mxu0 0
        %2291 = vmatprep.subr.bf16.mxu0 0
        %2292 = vmatpush2.bf16.msra.mxu0 0
        %2293 = vmatprep.mubr.bf16.mxu0 0
        %2294 = vmatmul.mubr.bf16.gmra.mxu0 %v2256
        %v2295 = vpop.f32.mrf.mxu0
        %v2296 = vadd.f32 0.0, %v2295
        %v2297 = vpop.f32.mrf.mxu0
        %v2298 = vpop.f32.mrf.mxu0
        %v2299 = vpop.f32.mrf.mxu0
        %2300 = vdwg.mxu0
        %v2302 = vsel %vm681, %v2252, 0
        %v2305 = vsel %vm942, %v1546, 0
        %2307 = vmatprep.subr.bf16.mxu0 0
        %2308 = vmatpush1.bf16.msra.mxu0 0
        %2309 = vmatprep.subr.bf16.mxu0 0
        %2310 = vmatpush1.bf16.msra.mxu0 0
        %2311 = vmatprep.subr.bf16.mxu0 0
        %2312 = vmatpush1.bf16.msra.mxu0 0
        %2313 = vmatprep.subr.bf16.mxu0 0
        %2314 = vmatpush1.bf16.msra.mxu0 0
        %2315 = vmatprep.subr.bf16.mxu0 0
        %2316 = vmatpush1.bf16.msra.mxu0 0
        %2317 = vmatprep.subr.bf16.mxu0 0
        %2318 = vmatpush1.bf16.msra.mxu0 0
        %2319 = vmatprep.subr.bf16.mxu0 0
        %2320 = vmatpush1.bf16.msra.mxu0 0
        %2321 = vmatprep.subr.bf16.mxu0 0
        %2322 = vmatpush1.bf16.msra.mxu0 %v2305
        %2323 = vmatprep.subr.bf16.mxu0 0
        %2324 = vmatpush2.bf16.msra.mxu0 0
        %2325 = vmatprep.subr.bf16.mxu0 0
        %2326 = vmatpush2.bf16.msra.mxu0 0
        %2327 = vmatprep.subr.bf16.mxu0 0
        %2328 = vmatpush2.bf16.msra.mxu0 0
        %2329 = vmatprep.subr.bf16.mxu0 0
        %2330 = vmatpush2.bf16.msra.mxu0 0
        %2331 = vmatprep.subr.bf16.mxu0 0
        %2332 = vmatpush2.bf16.msra.mxu0 0
        %2333 = vmatprep.subr.bf16.mxu0 0
        %2334 = vmatpush2.bf16.msra.mxu0 0
        %2335 = vmatprep.subr.bf16.mxu0 0
        %2336 = vmatpush2.bf16.msra.mxu0 0
        %2337 = vmatprep.subr.bf16.mxu0 0
        %2338 = vmatpush2.bf16.msra.mxu0 0
        %2339 = vmatprep.mubr.bf16.mxu0 0
        %2340 = vmatmul.mubr.bf16.gmra.mxu0 %v2302
        %v2341 = vpop.f32.mrf.mxu0
        %v2342 = vadd.f32 0.0, %v2341
        %v2343 = vpop.f32.mrf.mxu0
        %v2344 = vpop.f32.mrf.mxu0
        %v2345 = vpop.f32.mrf.mxu0
        %2346 = vdwg.mxu0
        %v2348 = vsel %vm681, %v2253, 0
        %v2351 = vsel %vm942, %v1547, 0
        %2353 = vmatprep.subr.bf16.mxu0 0
        %2354 = vmatpush1.bf16.msra.mxu0 0
        %2355 = vmatprep.subr.bf16.mxu0 0
        %2356 = vmatpush1.bf16.msra.mxu0 0
        %2357 = vmatprep.subr.bf16.mxu0 0
        %2358 = vmatpush1.bf16.msra.mxu0 0
        %2359 = vmatprep.subr.bf16.mxu0 0
        %2360 = vmatpush1.bf16.msra.mxu0 0
        %2361 = vmatprep.subr.bf16.mxu0 0
        %2362 = vmatpush1.bf16.msra.mxu0 0
        %2363 = vmatprep.subr.bf16.mxu0 0
        %2364 = vmatpush1.bf16.msra.mxu0 0
        %2365 = vmatprep.subr.bf16.mxu0 0
        %2366 = vmatpush1.bf16.msra.mxu0 0
        %2367 = vmatprep.subr.bf16.mxu0 0
        %2368 = vmatpush1.bf16.msra.mxu0 %v2351
        %2369 = vmatprep.subr.bf16.mxu0 0
        %2370 = vmatpush2.bf16.msra.mxu0 0
        %2371 = vmatprep.subr.bf16.mxu0 0
        %2372 = vmatpush2.bf16.msra.mxu0 0
        %2373 = vmatprep.subr.bf16.mxu0 0
        %2374 = vmatpush2.bf16.msra.mxu0 0
        %2375 = vmatprep.subr.bf16.mxu0 0
        %2376 = vmatpush2.bf16.msra.mxu0 0
        %2377 = vmatprep.subr.bf16.mxu0 0
        %2378 = vmatpush2.bf16.msra.mxu0 0
        %2379 = vmatprep.subr.bf16.mxu0 0
        %2380 = vmatpush2.bf16.msra.mxu0 0
        %2381 = vmatprep.subr.bf16.mxu0 0
        %2382 = vmatpush2.bf16.msra.mxu0 0
        %2383 = vmatprep.subr.bf16.mxu0 0
        %2384 = vmatpush2.bf16.msra.mxu0 0
        %2385 = vmatprep.mubr.bf16.mxu0 0
        %2386 = vmatmul.mubr.bf16.gmra.mxu0 %v2348
        %v2387 = vpop.f32.mrf.mxu0
        %v2388 = vadd.f32 0.0, %v2387
        %v2389 = vpop.f32.mrf.mxu0
        %v2390 = vpop.f32.mrf.mxu0
        %v2391 = vpop.f32.mrf.mxu0
        %2392 = vdwg.mxu0
        %v2394 = vsel %vm681, %v2254, 0
        %v2397 = vsel %vm942, %v1548, 0
        %2399 = vmatprep.subr.bf16.mxu0 0
        %2400 = vmatpush1.bf16.msra.mxu0 0
        %2401 = vmatprep.subr.bf16.mxu0 0
        %2402 = vmatpush1.bf16.msra.mxu0 0
        %2403 = vmatprep.subr.bf16.mxu0 0
        %2404 = vmatpush1.bf16.msra.mxu0 0
        %2405 = vmatprep.subr.bf16.mxu0 0
        %2406 = vmatpush1.bf16.msra.mxu0 0
        %2407 = vmatprep.subr.bf16.mxu0 0
        %2408 = vmatpush1.bf16.msra.mxu0 0
        %2409 = vmatprep.subr.bf16.mxu0 0
        %2410 = vmatpush1.bf16.msra.mxu0 0
        %2411 = vmatprep.subr.bf16.mxu0 0
        %2412 = vmatpush1.bf16.msra.mxu0 0
        %2413 = vmatprep.subr.bf16.mxu0 0
        %2414 = vmatpush1.bf16.msra.mxu0 %v2397
        %2415 = vmatprep.subr.bf16.mxu0 0
        %2416 = vmatpush2.bf16.msra.mxu0 0
        %2417 = vmatprep.subr.bf16.mxu0 0
        %2418 = vmatpush2.bf16.msra.mxu0 0
        %2419 = vmatprep.subr.bf16.mxu0 0
        %2420 = vmatpush2.bf16.msra.mxu0 0
        %2421 = vmatprep.subr.bf16.mxu0 0
        %2422 = vmatpush2.bf16.msra.mxu0 0
        %2423 = vmatprep.subr.bf16.mxu0 0
        %2424 = vmatpush2.bf16.msra.mxu0 0
        %2425 = vmatprep.subr.bf16.mxu0 0
        %2426 = vmatpush2.bf16.msra.mxu0 0
        %2427 = vmatprep.subr.bf16.mxu0 0
        %2428 = vmatpush2.bf16.msra.mxu0 0
        %2429 = vmatprep.subr.bf16.mxu0 0
        %2430 = vmatpush2.bf16.msra.mxu0 0
        %2431 = vmatprep.mubr.bf16.mxu0 0
        %2432 = vmatmul.mubr.bf16.gmra.mxu0 %v2394
        %v2433 = vpop.f32.mrf.mxu0
        %v2434 = vadd.f32 0.0, %v2433
        %v2435 = vpop.f32.mrf.mxu0
        %v2436 = vpop.f32.mrf.mxu0
        %v2437 = vpop.f32.mrf.mxu0
        %2438 = vdwg.mxu0
        %v2439 = vsel %vm375, %v2296, 0.0
        %v2440 = vsel %vm375, %v2342, 0.0
        %v2441 = vadd.f32 %v2439, %v2440
        %v2442 = vsel %vm375, %v2388, 0.0
        %v2443 = vadd.f32 %v2441, %v2442
        %v2444 = vsel %vm375, %v2434, 0.0
        %v2445 = vadd.f32 %v2443, %v2444
        %v2446 = vlaneseq
        %v2447 = vshrl.u32 %v2446, 7
        %v2448 = vsub.s32 0, %v2447
        %v2449 = vrot.slane %v1550, %v2448
        %v2450 = vadd.f32 %v2445, %v2449
        %v2451 = vadd.f32 %v2450, %v1521
        %v2452 = vsel %vm375, %v2451, 0.0
        %2453 = vadd.xlane.f32.xlu0 %v2452
        %v2454 = vpop.xlane.xlu0 %2453
        %v2455 = vmul.f32 %v2454, %v379
        %v2456 = vsub.f32 %v2451, %v2455
        %v2457 = vmul.f32 %v2456, %v2456
        %v2458 = vsel %vm375, %v2457, 0.0
        %2459 = vadd.xlane.f32.xlu0 %v2458
        %v2460 = vpop.xlane.xlu0 %2459
        %v2461 = vmul.f32 %v2460, %v379
        %v2462 = vadd.f32 %v2461, 1e-12
        %v2463 = vrsqrt.pop %v2462
        %v2464 = vmul.f32 %v2456, %v2463
        %v2465 = vlaneseq
        %v2466 = vshrl.u32 %v2465, 7
        %v2467 = vsub.s32 1, %v2466
        %v2468 = vrot.slane %v1550, %v2467
        %v2469 = vmul.f32 %v2464, %v2468
        %v2470 = vlaneseq
        %v2471 = vshrl.u32 %v2470, 7
        %v2472 = vsub.s32 2, %v2471
        %v2473 = vrot.slane %v1550, %v2472
        %v2474 = vadd.f32 %v2469, %v2473
        %v2475 = vpack.c.bf16 %v2474, %v2474
        %v2477 = vlaneseq
        %v2478 = vshrl.u32 %v2477, 7
        %v2479 = vsub.s32 0, %v2478
        %v2480 = vrot.slane %v1557, %v2479
        %v2486 = vunpack.c.l.b16 %v1552
        %v2487 = vunpack.c.l.b16 %v1553
        %v2488 = vunpack.c.l.b16 %v1554
        %v2489 = vunpack.c.l.b16 %v1555
        %v2490 = vpack.c.b16 %v2487, %v2486
        %v2491 = vpack.c.b16 %v2489, %v2488
        %v2495 = vsel %vm375, %v2475, 0
        %2497 = vmatprep.subr.bf16.mxu0 0
        %2498 = vmatpush1.bf16.msra.mxu0 0
        %2499 = vmatprep.subr.bf16.mxu0 0
        %2500 = vmatpush1.bf16.msra.mxu0 0
        %2501 = vmatprep.subr.bf16.mxu0 0
        %2502 = vmatpush1.bf16.msra.mxu0 0
        %2503 = vmatprep.subr.bf16.mxu0 0
        %2504 = vmatpush1.bf16.msra.mxu0 0
        %2505 = vmatprep.subr.bf16.mxu0 0
        %2506 = vmatpush1.bf16.msra.mxu0 0
        %2507 = vmatprep.subr.bf16.mxu0 0
        %2508 = vmatpush1.bf16.msra.mxu0 0
        %2509 = vmatprep.subr.bf16.mxu0 0
        %2510 = vmatpush1.bf16.msra.mxu0 %v2491
        %2511 = vmatprep.subr.bf16.mxu0 0
        %2512 = vmatpush1.bf16.msra.mxu0 %v2490
        %2513 = vmatprep.subr.bf16.mxu0 0
        %2514 = vmatpush2.bf16.msra.mxu0 0
        %2515 = vmatprep.subr.bf16.mxu0 0
        %2516 = vmatpush2.bf16.msra.mxu0 0
        %2517 = vmatprep.subr.bf16.mxu0 0
        %2518 = vmatpush2.bf16.msra.mxu0 0
        %2519 = vmatprep.subr.bf16.mxu0 0
        %2520 = vmatpush2.bf16.msra.mxu0 0
        %2521 = vmatprep.subr.bf16.mxu0 0
        %2522 = vmatpush2.bf16.msra.mxu0 0
        %2523 = vmatprep.subr.bf16.mxu0 0
        %2524 = vmatpush2.bf16.msra.mxu0 0
        %2525 = vmatprep.subr.bf16.mxu0 0
        %2526 = vmatpush2.bf16.msra.mxu0 0
        %2527 = vmatprep.subr.bf16.mxu0 0
        %2528 = vmatpush2.bf16.msra.mxu0 0
        %2529 = vmatprep.mubr.bf16.mxu0 0
        %2530 = vmatmul.mubr.bf16.gmra.mxu0 %v2495
        %v2531 = vpop.f32.mrf.mxu0
        %v2532 = vadd.f32 %v2480, %v2531
        %v2533 = vpop.f32.mrf.mxu0
        %v2534 = vpop.f32.mrf.mxu0
        %v2535 = vpop.f32.mrf.mxu0
        %2536 = vdwg.mxu0
        %v2537 = vmul.f32 %v2532, 0.5
        %v2538 = vmul.f32 %v2532, 0.044715
        %v2539 = vmul.f32 %v2538, %v2532
        %v2540 = vmul.f32 %v2539, %v2532
        %v2541 = vadd.f32 %v2532, %v2540
        %v2542 = vmul.f32 %v2541, 0.7978846
        %v2543 = vtanh.pop %v2542
        %v2544 = vadd.f32 %v2543, 1.0
        %v2545 = vmul.f32 %v2537, %v2544
        %v2546 = vpack.c.bf16 %v2545, %v2545
        %v2547 = vlaneseq
        %v2548 = vshrl.u32 %v2547, 7
        %v2549 = vsub.s32 3, %v2548
        %v2550 = vrot.slane %v1550, %v2549
        %v2559 = vunpack.c.l.b16 %v1559
        %v2560 = vunpack.c.l.b16 %v1560
        %v2561 = vunpack.c.l.b16 %v1561
        %v2562 = vunpack.c.l.b16 %v1562
        %v2563 = vunpack.c.l.b16 %v1563
        %v2564 = vunpack.c.l.b16 %v1564
        %v2565 = vunpack.c.l.b16 %v1565
        %v2566 = vunpack.c.l.b16 %v1566
        %v2567 = vpack.c.b16 %v2560, %v2559
        %v2568 = vpack.c.b16 %v2562, %v2561
        %v2569 = vpack.c.b16 %v2564, %v2563
        %v2570 = vpack.c.b16 %v2566, %v2565
        %v2576 = vsel %vm1454, %v2546, 0
        %2578 = vmatprep.subr.bf16.mxu0 0
        %2579 = vmatpush1.bf16.msra.mxu0 0
        %2580 = vmatprep.subr.bf16.mxu0 0
        %2581 = vmatpush1.bf16.msra.mxu0 0
        %2582 = vmatprep.subr.bf16.mxu0 0
        %2583 = vmatpush1.bf16.msra.mxu0 0
        %2584 = vmatprep.subr.bf16.mxu0 0
        %2585 = vmatpush1.bf16.msra.mxu0 0
        %2586 = vmatprep.subr.bf16.mxu0 0
        %2587 = vmatpush1.bf16.msra.mxu0 %v2570
        %2588 = vmatprep.subr.bf16.mxu0 0
        %2589 = vmatpush1.bf16.msra.mxu0 %v2569
        %2590 = vmatprep.subr.bf16.mxu0 0
        %2591 = vmatpush1.bf16.msra.mxu0 %v2568
        %2592 = vmatprep.subr.bf16.mxu0 0
        %2593 = vmatpush1.bf16.msra.mxu0 %v2567
        %2594 = vmatprep.subr.bf16.mxu0 0
        %2595 = vmatpush2.bf16.msra.mxu0 0
        %2596 = vmatprep.subr.bf16.mxu0 0
        %2597 = vmatpush2.bf16.msra.mxu0 0
        %2598 = vmatprep.subr.bf16.mxu0 0
        %2599 = vmatpush2.bf16.msra.mxu0 0
        %2600 = vmatprep.subr.bf16.mxu0 0
        %2601 = vmatpush2.bf16.msra.mxu0 0
        %2602 = vmatprep.subr.bf16.mxu0 0
        %2603 = vmatpush2.bf16.msra.mxu0 0
        %2604 = vmatprep.subr.bf16.mxu0 0
        %2605 = vmatpush2.bf16.msra.mxu0 0
        %2606 = vmatprep.subr.bf16.mxu0 0
        %2607 = vmatpush2.bf16.msra.mxu0 0
        %2608 = vmatprep.subr.bf16.mxu0 0
        %2609 = vmatpush2.bf16.msra.mxu0 0
        %2610 = vmatprep.mubr.bf16.mxu0 0
        %2611 = vmatmul.mubr.bf16.gmra.mxu0 %v2576
        %v2612 = vpop.f32.mrf.mxu0
        %v2613 = vadd.f32 %v2550, %v2612
        %v2614 = vpop.f32.mrf.mxu0
        %v2615 = vpop.f32.mrf.mxu0
        %v2616 = vpop.f32.mrf.mxu0
        %2617 = vdwg.mxu0
        %v2618 = vadd.f32 %v2613, %v2474
        %v2619 = vsel %vm375, %v2618, 0.0
        %2620 = vadd.xlane.f32.xlu0 %v2619
        %v2621 = vpop.xlane.xlu0 %2620
        %v2622 = vmul.f32 %v2621, %v379
        %v2623 = vsub.f32 %v2618, %v2622
        %v2624 = vmul.f32 %v2623, %v2623
        %v2625 = vsel %vm375, %v2624, 0.0
        %2626 = vadd.xlane.f32.xlu0 %v2625
        %v2627 = vpop.xlane.xlu0 %2626
        %v2628 = vmul.f32 %v2627, %v379
        %v2629 = vadd.f32 %v2628, 1e-12
        %v2630 = vrsqrt.pop %v2629
        %v2631 = vmul.f32 %v2623, %v2630
        %v2632 = vlaneseq
        %v2633 = vshrl.u32 %v2632, 7
        %v2634 = vsub.s32 4, %v2633
        %v2635 = vrot.slane %v1550, %v2634
        %v2636 = vmul.f32 %v2631, %v2635
        %v2637 = vlaneseq
        %v2638 = vshrl.u32 %v2637, 7
        %v2639 = vsub.s32 5, %v2638
        %v2640 = vrot.slane %v1550, %v2639
        %v2641 = vadd.f32 %v2636, %v2640
        %2642 = vst.msk [vmem:[%s361] sm:$0xff] %vm375, %v2641
        %s2643 = sand.u32 %s252, 1
        %s2644 = scalar_lea.sflag [#allocation3], %s2643
        %s2645 = sand.u32 %s252, 1
        %s2646 = smul.addr %s2645, 8
        %s2647 = scalar_lea.vmem [#allocation2], %s2646
        // Predicated region
        $region61: #{transformer_encoder_forward.1} parent=59 // pred_check
          %p2648 = pneg %p262
        $region62: #{transformer_encoder_forward.1} parent=59 // pred_check_branch
          %2650 = sbr.rel (%p2648) target = $region64
        $region63: #{transformer_encoder_forward.1} parent=59 // pred_region
          %s2652 = ssub.s32 128, 128
          %2653 = vsyncadd %s2644, %s2652
          %s2654 = smul.addr %s24, 128
          %s2655 = scalar_lea.hbm %s10, %s2654
          %s2657 = sshll.u32 %s2647, 4
          %s2658 = int_to_ptr.vmem [resolvable:$true] %s2657
          %2660 = dma.vmem_to_hbm [thread:$0]  %s2658, 128, %s2655, %s2644
        $region64: #{transformer_encoder_forward.1} parent=59 // pred_fallthru
          _
      $region60: #{transformer_encoder_forward.1} parent=5 // pred_fallthru
        _
      %p2661 = scmp.le.s32.totalorder 2, %s19
      // Predicated region
      $region65: #{transformer_encoder_forward.1} parent=5 // pred_check
        %p2662 = pneg %p2661
      $region66: #{transformer_encoder_forward.1} parent=5 // pred_check_branch
        %2664 = sbr.rel (%p2662) target = $region68
      $region67: #{transformer_encoder_forward.1} parent=5 // pred_region
        %s2665 = ssub.s32 %s19, 2
        // Predicated region
        $region69: #{transformer_encoder_forward.1} parent=67 // pred_check
          %p2666 = pneg %p268
        $region70: #{transformer_encoder_forward.1} parent=67 // pred_check_branch
          %2668 = sbr.rel (%p2666) target = $region72
        $region71: #{transformer_encoder_forward.1} parent=67 // pred_region
          %s2669 = sand.u32 %s253, 1
          %s2670 = scalar_lea.sflag [#allocation3], %s2669
          %s2671 = sand.u32 %s253, 1
          %s2672 = smul.addr %s2671, 8
          %s2673 = scalar_lea.vmem [#allocation2], %s2672
          %2674 = dma.done %s2670, 128
        $region72: #{transformer_encoder_forward.1} parent=67 // pred_fallthru
          _
      $region68: #{transformer_encoder_forward.1} parent=5 // pred_fallthru
        _
    $region6: #{transformer_encoder_forward.1} parent=1 // loop_footer
      %s23 = sadd.s32 1, %s19
    $region7: #{transformer_encoder_forward.1} parent=1 // loop_footer_branch
      %18 = sbr.rel target = $region3
    $region8: #{transformer_encoder_forward.1} parent=1 // loop_exit
      _
    %2675 = vsyncpa [#allocation3], 1
    %s2676 = scalar_lea.sflag [#allocation3], 1
    %2677 = vsyncpa %s2676, 1

</llo_original>
